<compile_context>
chip_gen: v6e
topology: v6e:2x2x1
jax: 0.10.0
libtpu: 0.0.40
codegen_flags: <defaults>
</compile_context>

<pallas_src>
import functools
import math

import numpy as np
import jax
import jax.numpy as jnp
from jax.experimental import pallas as pl
from jax.experimental.pallas import tpu as pltpu

KERNEL_SIZE = 4  # kernel_size=4, stride=2, padding=1 -> each layer doubles L


def _shift_r(a):
    """out[:, i] = a[:, i-1]; out[:, 0] = 0 (zero-padded left neighbour)."""
    return jnp.concatenate([jnp.zeros_like(a[:, :1]), a[:, :-1]], axis=1)


def _shift_l(a):
    """out[:, i] = a[:, i+1]; out[:, -1] = 0 (zero-padded right neighbour)."""
    return jnp.concatenate([a[:, 1:], jnp.zeros_like(a[:, :1])], axis=1)


def _fused_decoder_kernel(c_ref, s_ref, w1c_ref, w1s_ref, b1_ref,
                          w2_ref, b2_ref, w3_ref, b3_ref, v_ref, o_ref,
                          *, c1, c2):
    """Whole decoder for one batch element, channels-first polyphase.

    c_ref : [1, Cc, L]      content channels (NCL slice)
    s_ref : [1, Cs, L]      style channels
    w1c   : [4*c1, Cc]      layer-1 taps stacked: rows [k*c1:(k+1)*c1] = W1[:,:,k]^T (content cols)
    w1s   : [4*c1, Cs]      same, style columns
    b1    : [c1, 1]
    w2    : [4*c2, c1]      layer-2 taps stacked
    b2    : [c2, 1]
    w3    : [c2, 4]         layer-3 taps (Cout == 1)
    b3    : [1, 1]
    v     : [8, L]          static lerp weights: out[j] = sum_r v[r,j]*dec[8j+r]
    o_ref : [1, 1, L]
    """
    c = c_ref[0]                      # [Cc, L]
    s = s_ref[0]                      # [Cs, L]
    b1 = b1_ref[...]                  # [c1, 1]
    b2 = b2_ref[...]                  # [c2, 1]
    b3 = b3_ref[...]                  # [1, 1]

    # ---- layer 1: ConvT(256->128,k4,s2,p1) + ReLU, 2 polyphase streams ----
    # ConvT taps: y[2i] = W1^T x[i] + W3^T x[i-1];  y[2i+1] = W0^T x[i+1] + W2^T x[i]
    t1 = (jnp.dot(w1c_ref[...], c, preferred_element_type=jnp.float32) +
          jnp.dot(w1s_ref[...], s, preferred_element_type=jnp.float32))   # [4*c1, L]
    t1k = [t1[k * c1:(k + 1) * c1, :] for k in range(4)]
    y1 = [
        jnp.maximum(t1k[1] + _shift_r(t1k[3]) + b1, 0.0),   # even outputs y[2i]
        jnp.maximum(_shift_l(t1k[0]) + t1k[2] + b1, 0.0),   # odd  outputs y[2i+1]
    ]

    # ---- layer 2: ConvT(128->64) + ReLU, 4 polyphase streams ----
    w2 = w2_ref[...]
    t2 = [jnp.dot(w2, y, preferred_element_type=jnp.float32) for y in y1]  # [4*c2, L] x2
    tp = [[t[k * c2:(k + 1) * c2, :] for k in range(4)] for t in t2]
    y2 = [
        jnp.maximum(tp[0][1] + _shift_r(tp[1][3]) + b2, 0.0),   # y2[4i+0]
        jnp.maximum(tp[1][0] + tp[0][2] + b2, 0.0),             # y2[4i+1]
        jnp.maximum(tp[1][1] + tp[0][3] + b2, 0.0),             # y2[4i+2]
        jnp.maximum(_shift_l(tp[0][0]) + tp[1][2] + b2, 0.0),   # y2[4i+3]
    ]

    # ---- layer 3: ConvT(64->1) + Sigmoid, on the VPU (N=1 would waste the MXU)
    w3 = w3_ref[...]                  # [c2, 4]
    # p[q][k] = tap-k weights dotted with stream q -> [1, L]
    p = [[jnp.sum(y2[q] * w3[:, k:k + 1], axis=0, keepdims=True)
          for k in range(4)] for q in range(4)]
    # dec[8j + r] = d[r][j]   (8 scalar polyphase streams of length L)
    d = [
        jax.nn.sigmoid(p[0][1] + _shift_r(p[3][3]) + b3),   # r = 0
        jax.nn.sigmoid(p[1][0] + p[0][2] + b3),             # r = 1
        jax.nn.sigmoid(p[1][1] + p[0][3] + b3),             # r = 2
        jax.nn.sigmoid(p[2][0] + p[1][2] + b3),             # r = 3
        jax.nn.sigmoid(p[2][1] + p[1][3] + b3),             # r = 4
        jax.nn.sigmoid(p[3][0] + p[2][2] + b3),             # r = 5
        jax.nn.sigmoid(p[3][1] + p[2][3] + b3),             # r = 6
        jax.nn.sigmoid(_shift_l(p[0][0]) + p[3][2] + b3),   # r = 7
    ]

    # ---- linear interpolation (align_corners=True), fused as an 8-tap lerp ----
    v = v_ref[...]                    # [8, L]
    out = d[0] * v[0:1, :]
    for r in range(1, 8):
        out = out + d[r] * v[r:r + 1, :]
    o_ref[0, :, :] = out.astype(o_ref.dtype)


def _interp_lerp_weights(l_out, ratio=8, dtype=jnp.float32):
    """Static lerp table V [ratio, l_out]: out[j] = sum_r V[r,j] * dec[ratio*j + r].

    Equivalent to F.interpolate(size=l_out, mode='linear', align_corners=True)
    applied to a length ratio*l_out signal.  O(L) memory instead of the O(L^2)
    dense matrix.
    """
    l_in = ratio * l_out
    j = np.arange(l_out)
    if l_out == 1:
        src = np.zeros((1,), np.float64)
    else:
        src = j * ((l_in - 1) / (l_out - 1))
    i0 = np.clip(np.floor(src).astype(np.int64), 0, max(l_in - 2, 0))
    frac = src - i0
    v = np.zeros((ratio + 1, l_out), np.float64)
    v[i0 - ratio * j, j] += 1.0 - frac
    v[i0 + 1 - ratio * j, j] += frac
    # With align_corners=True and i0 clipped to l_in-2 the overflow row is never hit.
    assert np.all(v[ratio] == 0.0)
    return jnp.asarray(v[:ratio], dtype)


def decoder_forward(content_quantized, style_encoded, params):
    """Matches Decoder.forward. Inputs NCL: content [B,Cc,L], style [B,Cs,L] (Cc+Cs=256)."""
    B, cc, L = content_quantized.shape
    cs = style_encoded.shape[1]
    (w1, b1), (w2, b2), (w3, b3) = params
    assert w1.shape[2] == KERNEL_SIZE and cc + cs == w1.shape[0]
    c1 = w1.shape[1]          # 128
    c2 = w2.shape[1]          # 64

    # Stack the 4 ConvTranspose taps into one [4*Cout, Cin] matrix per layer
    # (done once on tiny weight tensors; activations never leave the kernel).
    w1_t = jnp.concatenate([w1[:, :, k].T for k in range(KERNEL_SIZE)], axis=0)  # [4*c1, 256]
    w1c = w1_t[:, :cc]
    w1s = w1_t[:, cc:]
    w2_t = jnp.concatenate([w2[:, :, k].T for k in range(KERNEL_SIZE)], axis=0)  # [4*c2, c1]
    w3_m = w3[:, 0, :]                                                           # [c2, 4]
    b1c = b1.reshape(c1, 1)
    b2c = b2.reshape(c2, 1)
    b3c = b3.reshape(1, 1)
    v = _interp_lerp_weights(L, ratio=8, dtype=content_quantized.dtype)

    kernel = functools.partial(_fused_decoder_kernel, c1=c1, c2=c2)
    # TODO(synk): for very long L add an inner L-tile loop (1-lane halo) and an
    # explicit vmem_limit_bytes so the fused activations fit v7x's 64 MiB VMEM;
    # if B == 1, split the parallel grid over L-tiles to use both v7x TCs.
    out = pl.pallas_call(
        kernel,
        out_shape=jax.ShapeDtypeStruct((B, 1, L), content_quantized.dtype),
        grid=(B,),
        in_specs=[
            pl.BlockSpec((1, cc, L), lambda b: (b, 0, 0)),
            pl.BlockSpec((1, cs, L), lambda b: (b, 0, 0)),
            pl.BlockSpec((4 * c1, cc), lambda b: (0, 0)),
            pl.BlockSpec((4 * c1, cs), lambda b: (0, 0)),
            pl.BlockSpec((c1, 1), lambda b: (0, 0)),
            pl.BlockSpec((4 * c2, c1), lambda b: (0, 0)),
            pl.BlockSpec((c2, 1), lambda b: (0, 0)),
            pl.BlockSpec((c2, KERNEL_SIZE), lambda b: (0, 0)),
            pl.BlockSpec((1, 1), lambda b: (0, 0)),
            pl.BlockSpec((8, L), lambda b: (0, 0)),
        ],
        out_specs=pl.BlockSpec((1, 1, L), lambda b: (b, 0, 0)),
        compiler_params=pltpu.CompilerParams(
            dimension_semantics=("parallel",)),
    )(content_quantized, style_encoded, w1c, w1s, b1c,
      w2_t, b2c, w3_m, b3c, v)
    return out  # NCL: [B, 1, L]


def init_decoder_params(key):
    """Deterministic ConvTranspose1d params: weight [Cin, Cout, K], bias [Cout]."""
    layer_dims = [(256, 128), (128, 64), (64, 1)]
    params = []
    for cin, cout in layer_dims:
        key, kw, kb = jax.random.split(key, 3)
        bound = 1.0 / math.sqrt(cin * KERNEL_SIZE)
        w = jax.random.uniform(kw, (cin, cout, KERNEL_SIZE), jnp.float32,
                               -bound, bound)
        b = jax.random.uniform(kb, (cout,), jnp.float32, -bound, bound)
        params.append((w, b))
    return params


# ----------------------- pure-JAX reference (for checking) ------------------
def _conv_transpose1d_ref(x, w, b, stride=2, pad=1):
    B, Cin, L = x.shape
    _, Cout, K = w.shape
    Lout = (L - 1) * stride - 2 * pad + K
    y = jnp.zeros((B, Cout, Lout), x.dtype)
    for i in range(L):
        for k in range(K):
            t = i * stride - pad + k
            if 0 <= t < Lout:
                y = y.at[:, :, t].add(x[:, :, i] @ w[:, :, k])
    return y + b[None, :, None]


def _linear_interp_matrix_ref(l_in, l_out, dtype=jnp.float32):
    j = jnp.arange(l_out)
    if l_out == 1:
        src = jnp.zeros((1,), jnp.float32)
    else:
        src = j.astype(jnp.float32) * ((l_in - 1) / (l_out - 1))
    i0 = jnp.clip(jnp.floor(src).astype(jnp.int32), 0, max(l_in - 2, 0))
    frac = src - i0.astype(jnp.float32)
    a = jnp.zeros((l_in, l_out), dtype)
    a = a.at[i0, j].add((1.0 - frac).astype(dtype))
    a = a.at[jnp.minimum(i0 + 1, l_in - 1), j].add(frac.astype(dtype))
    return a


def decoder_forward_ref(content_quantized, style_encoded, params):
    x = jnp.concatenate([content_quantized, style_encoded], axis=1)
    n_layers = len(params)
    for idx, (w, b) in enumerate(params):
        x = _conv_transpose1d_ref(x, w, b)
        x = jax.nn.sigmoid(x) if idx == n_layers - 1 else jax.nn.relu(x)
    a = _linear_interp_matrix_ref(x.shape[2], content_quantized.shape[2], x.dtype)
    return jnp.einsum("bcl,lt->bct", x, a)


if __name__ == "__main__":
    key = jax.random.PRNGKey(0)
    kc, ks, kp = jax.random.split(key, 3)
    B, L = 2, 8
    # combined channels must be 256 (ConvTranspose1d(256, ...)): 128 + 128
    content = jax.random.normal(kc, (B, 128, L), jnp.float32)
    style = jax.random.normal(ks, (B, 128, L), jnp.float32)
    params = init_decoder_params(kp)

    out = decoder_forward(content, style, params)
    out = jax.block_until_ready(out)
    assert out.shape == (B, 1, L), out.shape

    ref = decoder_forward_ref(content, style, params)
    if not bool(jnp.allclose(out, ref, atol=1e-4, rtol=1e-4)):
        raise AssertionError("Pallas decoder output mismatch vs JAX reference")
    print("KERNEL_OK")
</pallas_src>

<mosaic_0001>
module attributes {stable_mosaic.version = 11 : i64} {
  func.func @_fused_decoder_kernel(%arg0: i32, %arg1: memref<1x128x8xf32, #tpu.memory_space<vmem>>, %arg2: memref<1x128x8xf32, #tpu.memory_space<vmem>>, %arg3: memref<512x128xf32, #tpu.memory_space<vmem>>, %arg4: memref<512x128xf32, #tpu.memory_space<vmem>>, %arg5: memref<128x1xf32, #tpu.memory_space<vmem>>, %arg6: memref<256x128xf32, #tpu.memory_space<vmem>>, %arg7: memref<64x1xf32, #tpu.memory_space<vmem>>, %arg8: memref<64x4xf32, #tpu.memory_space<vmem>>, %arg9: memref<1x1xf32, #tpu.memory_space<vmem>>, %arg10: memref<8x8xf32, #tpu.memory_space<vmem>>, %arg11: memref<1x1x8xf32, #tpu.memory_space<vmem>>) attributes {dimension_semantics = [#tpu.dimension_semantics<parallel>], iteration_bounds = array<i64: 2>, scalar_prefetch = 0 : i64, scratch_operands = 0 : i64, tpu.core_type = #tpu.core_type<tc>, window_params = [{transform_indices = @transform_0, window_bounds = array<i64: 1, 128, 8>}, {transform_indices = @transform_1, window_bounds = array<i64: 1, 128, 8>}, {pipeline_mode = #tpu.pipeline_mode<synchronous>, transform_indices = @transform_2, window_bounds = array<i64: 512, 128>}, {pipeline_mode = #tpu.pipeline_mode<synchronous>, transform_indices = @transform_3, window_bounds = array<i64: 512, 128>}, {pipeline_mode = #tpu.pipeline_mode<synchronous>, transform_indices = @transform_4, window_bounds = array<i64: 128, 1>}, {pipeline_mode = #tpu.pipeline_mode<synchronous>, transform_indices = @transform_5, window_bounds = array<i64: 256, 128>}, {pipeline_mode = #tpu.pipeline_mode<synchronous>, transform_indices = @transform_6, window_bounds = array<i64: 64, 1>}, {pipeline_mode = #tpu.pipeline_mode<synchronous>, transform_indices = @transform_7, window_bounds = array<i64: 64, 4>}, {pipeline_mode = #tpu.pipeline_mode<synchronous>, transform_indices = @transform_8, window_bounds = array<i64: 1, 1>}, {pipeline_mode = #tpu.pipeline_mode<synchronous>, transform_indices = @transform_9, window_bounds = array<i64: 8, 8>}, {transform_indices = @transform_10, window_bounds = array<i64: 1, 1, 8>}]} {
    %c0 = arith.constant 0 : index
    %c0_0 = arith.constant 0 : index
    %c0_1 = arith.constant 0 : index
    %0 = vector.load %arg1[%c0, %c0_0, %c0_1] : memref<1x128x8xf32, #tpu.memory_space<vmem>>, vector<1x128x8xf32>
    %1 = vector.shape_cast %0 : vector<1x128x8xf32> to vector<128x8xf32>
    %c0_2 = arith.constant 0 : index
    %c0_3 = arith.constant 0 : index
    %c0_4 = arith.constant 0 : index
    %2 = vector.load %arg2[%c0_2, %c0_3, %c0_4] : memref<1x128x8xf32, #tpu.memory_space<vmem>>, vector<1x128x8xf32>
    %3 = vector.shape_cast %2 : vector<1x128x8xf32> to vector<128x8xf32>
    %c0_5 = arith.constant 0 : index
    %c0_6 = arith.constant 0 : index
    %4 = vector.load %arg5[%c0_5, %c0_6] : memref<128x1xf32, #tpu.memory_space<vmem>>, vector<128x1xf32>
    %c0_7 = arith.constant 0 : index
    %c0_8 = arith.constant 0 : index
    %5 = vector.load %arg7[%c0_7, %c0_8] : memref<64x1xf32, #tpu.memory_space<vmem>>, vector<64x1xf32>
    %c0_9 = arith.constant 0 : index
    %c0_10 = arith.constant 0 : index
    %6 = vector.load %arg9[%c0_9, %c0_10] : memref<1x1xf32, #tpu.memory_space<vmem>>, vector<1x1xf32>
    %c0_11 = arith.constant 0 : index
    %c0_12 = arith.constant 0 : index
    %7 = vector.load %arg3[%c0_11, %c0_12] : memref<512x128xf32, #tpu.memory_space<vmem>>, vector<512x128xf32>
    %cst = arith.constant dense<0.000000e+00> : vector<512x8xf32>
    %8 = tpu.matmul %7, %1, %cst {dimension_numbers = #tpu.dot_dimension_numbers<[1], [0], [0], [1], [0, 0, 1, 1], [], []>} : vector<512x128xf32>, vector<128x8xf32>, vector<512x8xf32> -> vector<512x8xf32>
    %c0_13 = arith.constant 0 : index
    %c0_14 = arith.constant 0 : index
    %9 = vector.load %arg4[%c0_13, %c0_14] : memref<512x128xf32, #tpu.memory_space<vmem>>, vector<512x128xf32>
    %cst_15 = arith.constant dense<0.000000e+00> : vector<512x8xf32>
    %10 = tpu.matmul %9, %3, %cst_15 {dimension_numbers = #tpu.dot_dimension_numbers<[1], [0], [0], [1], [0, 0, 1, 1], [], []>} : vector<512x128xf32>, vector<128x8xf32>, vector<512x8xf32> -> vector<512x8xf32>
    %11 = arith.addf %8, %10 : vector<512x8xf32>
    %12 = vector.extract_strided_slice %11 {offsets = [0, 0], sizes = [128, 8], strides = [1, 1]} : vector<512x8xf32> to vector<128x8xf32>
    %13 = vector.extract_strided_slice %11 {offsets = [128, 0], sizes = [128, 8], strides = [1, 1]} : vector<512x8xf32> to vector<128x8xf32>
    %14 = vector.extract_strided_slice %11 {offsets = [256, 0], sizes = [128, 8], strides = [1, 1]} : vector<512x8xf32> to vector<128x8xf32>
    %15 = vector.extract_strided_slice %11 {offsets = [384, 0], sizes = [128, 8], strides = [1, 1]} : vector<512x8xf32> to vector<128x8xf32>
    %cst_16 = arith.constant 0.000000e+00 : f32
    %16 = vector.broadcast %cst_16 : f32 to vector<128x1xf32>
    %17 = vector.extract_strided_slice %15 {offsets = [0, 0], sizes = [128, 7], strides = [1, 1]} : vector<128x8xf32> to vector<128x7xf32>
    %18 = tpu.concatenate %16, %17 in 1 : vector<128x1xf32>, vector<128x7xf32> -> vector<128x8xf32>
    %19 = arith.addf %13, %18 : vector<128x8xf32>
    %20 = vector.broadcast %4 : vector<128x1xf32> to vector<128x8xf32>
    %21 = arith.addf %19, %20 : vector<128x8xf32>
    %cst_17 = arith.constant 0.000000e+00 : f32
    %22 = vector.broadcast %cst_17 : f32 to vector<128x8xf32>
    %23 = arith.maximumf %21, %22 : vector<128x8xf32>
    %24 = vector.extract_strided_slice %12 {offsets = [0, 1], sizes = [128, 7], strides = [1, 1]} : vector<128x8xf32> to vector<128x7xf32>
    %cst_18 = arith.constant 0.000000e+00 : f32
    %25 = vector.broadcast %cst_18 : f32 to vector<128x1xf32>
    %26 = tpu.concatenate %24, %25 in 1 : vector<128x7xf32>, vector<128x1xf32> -> vector<128x8xf32>
    %27 = arith.addf %26, %14 : vector<128x8xf32>
    %28 = vector.broadcast %4 : vector<128x1xf32> to vector<128x8xf32>
    %29 = arith.addf %27, %28 : vector<128x8xf32>
    %cst_19 = arith.constant 0.000000e+00 : f32
    %30 = vector.broadcast %cst_19 : f32 to vector<128x8xf32>
    %31 = arith.maximumf %29, %30 : vector<128x8xf32>
    %c0_20 = arith.constant 0 : index
    %c0_21 = arith.constant 0 : index
    %32 = vector.load %arg6[%c0_20, %c0_21] : memref<256x128xf32, #tpu.memory_space<vmem>>, vector<256x128xf32>
    %cst_22 = arith.constant dense<0.000000e+00> : vector<256x8xf32>
    %33 = tpu.matmul %32, %23, %cst_22 {dimension_numbers = #tpu.dot_dimension_numbers<[1], [0], [0], [1], [0, 0, 1, 1], [], []>} : vector<256x128xf32>, vector<128x8xf32>, vector<256x8xf32> -> vector<256x8xf32>
    %cst_23 = arith.constant dense<0.000000e+00> : vector<256x8xf32>
    %34 = tpu.matmul %32, %31, %cst_23 {dimension_numbers = #tpu.dot_dimension_numbers<[1], [0], [0], [1], [0, 0, 1, 1], [], []>} : vector<256x128xf32>, vector<128x8xf32>, vector<256x8xf32> -> vector<256x8xf32>
    %35 = vector.extract_strided_slice %33 {offsets = [0, 0], sizes = [64, 8], strides = [1, 1]} : vector<256x8xf32> to vector<64x8xf32>
    %36 = vector.extract_strided_slice %33 {offsets = [64, 0], sizes = [64, 8], strides = [1, 1]} : vector<256x8xf32> to vector<64x8xf32>
    %37 = vector.extract_strided_slice %33 {offsets = [128, 0], sizes = [64, 8], strides = [1, 1]} : vector<256x8xf32> to vector<64x8xf32>
    %38 = vector.extract_strided_slice %33 {offsets = [192, 0], sizes = [64, 8], strides = [1, 1]} : vector<256x8xf32> to vector<64x8xf32>
    %39 = vector.extract_strided_slice %34 {offsets = [0, 0], sizes = [64, 8], strides = [1, 1]} : vector<256x8xf32> to vector<64x8xf32>
    %40 = vector.extract_strided_slice %34 {offsets = [64, 0], sizes = [64, 8], strides = [1, 1]} : vector<256x8xf32> to vector<64x8xf32>
    %41 = vector.extract_strided_slice %34 {offsets = [128, 0], sizes = [64, 8], strides = [1, 1]} : vector<256x8xf32> to vector<64x8xf32>
    %42 = vector.extract_strided_slice %34 {offsets = [192, 0], sizes = [64, 8], strides = [1, 1]} : vector<256x8xf32> to vector<64x8xf32>
    %cst_24 = arith.constant 0.000000e+00 : f32
    %43 = vector.broadcast %cst_24 : f32 to vector<64x1xf32>
    %44 = vector.extract_strided_slice %42 {offsets = [0, 0], sizes = [64, 7], strides = [1, 1]} : vector<64x8xf32> to vector<64x7xf32>
    %45 = tpu.concatenate %43, %44 in 1 : vector<64x1xf32>, vector<64x7xf32> -> vector<64x8xf32>
    %46 = arith.addf %36, %45 : vector<64x8xf32>
    %47 = vector.broadcast %5 : vector<64x1xf32> to vector<64x8xf32>
    %48 = arith.addf %46, %47 : vector<64x8xf32>
    %cst_25 = arith.constant 0.000000e+00 : f32
    %49 = vector.broadcast %cst_25 : f32 to vector<64x8xf32>
    %50 = arith.maximumf %48, %49 : vector<64x8xf32>
    %51 = arith.addf %39, %37 : vector<64x8xf32>
    %52 = vector.broadcast %5 : vector<64x1xf32> to vector<64x8xf32>
    %53 = arith.addf %51, %52 : vector<64x8xf32>
    %cst_26 = arith.constant 0.000000e+00 : f32
    %54 = vector.broadcast %cst_26 : f32 to vector<64x8xf32>
    %55 = arith.maximumf %53, %54 : vector<64x8xf32>
    %56 = arith.addf %40, %38 : vector<64x8xf32>
    %57 = vector.broadcast %5 : vector<64x1xf32> to vector<64x8xf32>
    %58 = arith.addf %56, %57 : vector<64x8xf32>
    %cst_27 = arith.constant 0.000000e+00 : f32
    %59 = vector.broadcast %cst_27 : f32 to vector<64x8xf32>
    %60 = arith.maximumf %58, %59 : vector<64x8xf32>
    %61 = vector.extract_strided_slice %35 {offsets = [0, 1], sizes = [64, 7], strides = [1, 1]} : vector<64x8xf32> to vector<64x7xf32>
    %cst_28 = arith.constant 0.000000e+00 : f32
    %62 = vector.broadcast %cst_28 : f32 to vector<64x1xf32>
    %63 = tpu.concatenate %61, %62 in 1 : vector<64x7xf32>, vector<64x1xf32> -> vector<64x8xf32>
    %64 = arith.addf %63, %41 : vector<64x8xf32>
    %65 = vector.broadcast %5 : vector<64x1xf32> to vector<64x8xf32>
    %66 = arith.addf %64, %65 : vector<64x8xf32>
    %cst_29 = arith.constant 0.000000e+00 : f32
    %67 = vector.broadcast %cst_29 : f32 to vector<64x8xf32>
    %68 = arith.maximumf %66, %67 : vector<64x8xf32>
    %c0_30 = arith.constant 0 : index
    %c0_31 = arith.constant 0 : index
    %69 = vector.load %arg8[%c0_30, %c0_31] : memref<64x4xf32, #tpu.memory_space<vmem>>, vector<64x4xf32>
    %70 = vector.extract_strided_slice %69 {offsets = [0, 0], sizes = [64, 1], strides = [1, 1]} : vector<64x4xf32> to vector<64x1xf32>
    %71 = vector.broadcast %70 : vector<64x1xf32> to vector<64x8xf32>
    %72 = arith.mulf %50, %71 : vector<64x8xf32>
    %cst_32 = arith.constant dense<0.000000e+00> : vector<8xf32>
    %73 = vector.multi_reduction <add>, %72, %cst_32 [0] : vector<64x8xf32> to vector<8xf32>
    %74 = vector.shape_cast %73 : vector<8xf32> to vector<1x8xf32>
    %75 = vector.extract_strided_slice %69 {offsets = [0, 1], sizes = [64, 1], strides = [1, 1]} : vector<64x4xf32> to vector<64x1xf32>
    %76 = vector.broadcast %75 : vector<64x1xf32> to vector<64x8xf32>
    %77 = arith.mulf %50, %76 : vector<64x8xf32>
    %cst_33 = arith.constant dense<0.000000e+00> : vector<8xf32>
    %78 = vector.multi_reduction <add>, %77, %cst_33 [0] : vector<64x8xf32> to vector<8xf32>
    %79 = vector.shape_cast %78 : vector<8xf32> to vector<1x8xf32>
    %80 = vector.extract_strided_slice %69 {offsets = [0, 2], sizes = [64, 1], strides = [1, 1]} : vector<64x4xf32> to vector<64x1xf32>
    %81 = vector.broadcast %80 : vector<64x1xf32> to vector<64x8xf32>
    %82 = arith.mulf %50, %81 : vector<64x8xf32>
    %cst_34 = arith.constant dense<0.000000e+00> : vector<8xf32>
    %83 = vector.multi_reduction <add>, %82, %cst_34 [0] : vector<64x8xf32> to vector<8xf32>
    %84 = vector.shape_cast %83 : vector<8xf32> to vector<1x8xf32>
    %85 = vector.extract_strided_slice %69 {offsets = [0, 3], sizes = [64, 1], strides = [1, 1]} : vector<64x4xf32> to vector<64x1xf32>
    %86 = vector.broadcast %85 : vector<64x1xf32> to vector<64x8xf32>
    %87 = arith.mulf %50, %86 : vector<64x8xf32>
    %cst_35 = arith.constant dense<0.000000e+00> : vector<8xf32>
    %88 = vector.multi_reduction <add>, %87, %cst_35 [0] : vector<64x8xf32> to vector<8xf32>
    %89 = vector.shape_cast %88 : vector<8xf32> to vector<1x8xf32>
    %90 = vector.extract_strided_slice %69 {offsets = [0, 0], sizes = [64, 1], strides = [1, 1]} : vector<64x4xf32> to vector<64x1xf32>
    %91 = vector.broadcast %90 : vector<64x1xf32> to vector<64x8xf32>
    %92 = arith.mulf %55, %91 : vector<64x8xf32>
    %cst_36 = arith.constant dense<0.000000e+00> : vector<8xf32>
    %93 = vector.multi_reduction <add>, %92, %cst_36 [0] : vector<64x8xf32> to vector<8xf32>
    %94 = vector.shape_cast %93 : vector<8xf32> to vector<1x8xf32>
    %95 = vector.extract_strided_slice %69 {offsets = [0, 1], sizes = [64, 1], strides = [1, 1]} : vector<64x4xf32> to vector<64x1xf32>
    %96 = vector.broadcast %95 : vector<64x1xf32> to vector<64x8xf32>
    %97 = arith.mulf %55, %96 : vector<64x8xf32>
    %cst_37 = arith.constant dense<0.000000e+00> : vector<8xf32>
    %98 = vector.multi_reduction <add>, %97, %cst_37 [0] : vector<64x8xf32> to vector<8xf32>
    %99 = vector.shape_cast %98 : vector<8xf32> to vector<1x8xf32>
    %100 = vector.extract_strided_slice %69 {offsets = [0, 2], sizes = [64, 1], strides = [1, 1]} : vector<64x4xf32> to vector<64x1xf32>
    %101 = vector.broadcast %100 : vector<64x1xf32> to vector<64x8xf32>
    %102 = arith.mulf %55, %101 : vector<64x8xf32>
    %cst_38 = arith.constant dense<0.000000e+00> : vector<8xf32>
    %103 = vector.multi_reduction <add>, %102, %cst_38 [0] : vector<64x8xf32> to vector<8xf32>
    %104 = vector.shape_cast %103 : vector<8xf32> to vector<1x8xf32>
    %105 = vector.extract_strided_slice %69 {offsets = [0, 3], sizes = [64, 1], strides = [1, 1]} : vector<64x4xf32> to vector<64x1xf32>
    %106 = vector.broadcast %105 : vector<64x1xf32> to vector<64x8xf32>
    %107 = arith.mulf %55, %106 : vector<64x8xf32>
    %cst_39 = arith.constant dense<0.000000e+00> : vector<8xf32>
    %108 = vector.multi_reduction <add>, %107, %cst_39 [0] : vector<64x8xf32> to vector<8xf32>
    %109 = vector.shape_cast %108 : vector<8xf32> to vector<1x8xf32>
    %110 = vector.extract_strided_slice %69 {offsets = [0, 0], sizes = [64, 1], strides = [1, 1]} : vector<64x4xf32> to vector<64x1xf32>
    %111 = vector.broadcast %110 : vector<64x1xf32> to vector<64x8xf32>
    %112 = arith.mulf %60, %111 : vector<64x8xf32>
    %cst_40 = arith.constant dense<0.000000e+00> : vector<8xf32>
    %113 = vector.multi_reduction <add>, %112, %cst_40 [0] : vector<64x8xf32> to vector<8xf32>
    %114 = vector.shape_cast %113 : vector<8xf32> to vector<1x8xf32>
    %115 = vector.extract_strided_slice %69 {offsets = [0, 1], sizes = [64, 1], strides = [1, 1]} : vector<64x4xf32> to vector<64x1xf32>
    %116 = vector.broadcast %115 : vector<64x1xf32> to vector<64x8xf32>
    %117 = arith.mulf %60, %116 : vector<64x8xf32>
    %cst_41 = arith.constant dense<0.000000e+00> : vector<8xf32>
    %118 = vector.multi_reduction <add>, %117, %cst_41 [0] : vector<64x8xf32> to vector<8xf32>
    %119 = vector.shape_cast %118 : vector<8xf32> to vector<1x8xf32>
    %120 = vector.extract_strided_slice %69 {offsets = [0, 2], sizes = [64, 1], strides = [1, 1]} : vector<64x4xf32> to vector<64x1xf32>
    %121 = vector.broadcast %120 : vector<64x1xf32> to vector<64x8xf32>
    %122 = arith.mulf %60, %121 : vector<64x8xf32>
    %cst_42 = arith.constant dense<0.000000e+00> : vector<8xf32>
    %123 = vector.multi_reduction <add>, %122, %cst_42 [0] : vector<64x8xf32> to vector<8xf32>
    %124 = vector.shape_cast %123 : vector<8xf32> to vector<1x8xf32>
    %125 = vector.extract_strided_slice %69 {offsets = [0, 3], sizes = [64, 1], strides = [1, 1]} : vector<64x4xf32> to vector<64x1xf32>
    %126 = vector.broadcast %125 : vector<64x1xf32> to vector<64x8xf32>
    %127 = arith.mulf %60, %126 : vector<64x8xf32>
    %cst_43 = arith.constant dense<0.000000e+00> : vector<8xf32>
    %128 = vector.multi_reduction <add>, %127, %cst_43 [0] : vector<64x8xf32> to vector<8xf32>
    %129 = vector.shape_cast %128 : vector<8xf32> to vector<1x8xf32>
    %130 = vector.extract_strided_slice %69 {offsets = [0, 0], sizes = [64, 1], strides = [1, 1]} : vector<64x4xf32> to vector<64x1xf32>
    %131 = vector.broadcast %130 : vector<64x1xf32> to vector<64x8xf32>
    %132 = arith.mulf %68, %131 : vector<64x8xf32>
    %cst_44 = arith.constant dense<0.000000e+00> : vector<8xf32>
    %133 = vector.multi_reduction <add>, %132, %cst_44 [0] : vector<64x8xf32> to vector<8xf32>
    %134 = vector.shape_cast %133 : vector<8xf32> to vector<1x8xf32>
    %135 = vector.extract_strided_slice %69 {offsets = [0, 1], sizes = [64, 1], strides = [1, 1]} : vector<64x4xf32> to vector<64x1xf32>
    %136 = vector.broadcast %135 : vector<64x1xf32> to vector<64x8xf32>
    %137 = arith.mulf %68, %136 : vector<64x8xf32>
    %cst_45 = arith.constant dense<0.000000e+00> : vector<8xf32>
    %138 = vector.multi_reduction <add>, %137, %cst_45 [0] : vector<64x8xf32> to vector<8xf32>
    %139 = vector.shape_cast %138 : vector<8xf32> to vector<1x8xf32>
    %140 = vector.extract_strided_slice %69 {offsets = [0, 2], sizes = [64, 1], strides = [1, 1]} : vector<64x4xf32> to vector<64x1xf32>
    %141 = vector.broadcast %140 : vector<64x1xf32> to vector<64x8xf32>
    %142 = arith.mulf %68, %141 : vector<64x8xf32>
    %cst_46 = arith.constant dense<0.000000e+00> : vector<8xf32>
    %143 = vector.multi_reduction <add>, %142, %cst_46 [0] : vector<64x8xf32> to vector<8xf32>
    %144 = vector.shape_cast %143 : vector<8xf32> to vector<1x8xf32>
    %145 = vector.extract_strided_slice %69 {offsets = [0, 3], sizes = [64, 1], strides = [1, 1]} : vector<64x4xf32> to vector<64x1xf32>
    %146 = vector.broadcast %145 : vector<64x1xf32> to vector<64x8xf32>
    %147 = arith.mulf %68, %146 : vector<64x8xf32>
    %cst_47 = arith.constant dense<0.000000e+00> : vector<8xf32>
    %148 = vector.multi_reduction <add>, %147, %cst_47 [0] : vector<64x8xf32> to vector<8xf32>
    %149 = vector.shape_cast %148 : vector<8xf32> to vector<1x8xf32>
    %cst_48 = arith.constant 0.000000e+00 : f32
    %150 = vector.broadcast %cst_48 : f32 to vector<1x1xf32>
    %151 = vector.extract_strided_slice %149 {offsets = [0, 0], sizes = [1, 7], strides = [1, 1]} : vector<1x8xf32> to vector<1x7xf32>
    %152 = tpu.concatenate %150, %151 in 1 : vector<1x1xf32>, vector<1x7xf32> -> vector<1x8xf32>
    %153 = arith.addf %79, %152 : vector<1x8xf32>
    %154 = vector.broadcast %6 : vector<1x1xf32> to vector<1x8xf32>
    %155 = arith.addf %153, %154 : vector<1x8xf32>
    %156 = arith.negf %155 : vector<1x8xf32>
    %157 = math.exp %156 : vector<1x8xf32>
    %cst_49 = arith.constant 1.000000e+00 : f32
    %158 = vector.broadcast %cst_49 : f32 to vector<1x8xf32>
    %159 = arith.addf %158, %157 : vector<1x8xf32>
    %160 = arith.divf %158, %159 : vector<1x8xf32>
    %161 = arith.addf %94, %84 : vector<1x8xf32>
    %162 = vector.broadcast %6 : vector<1x1xf32> to vector<1x8xf32>
    %163 = arith.addf %161, %162 : vector<1x8xf32>
    %164 = arith.negf %163 : vector<1x8xf32>
    %165 = math.exp %164 : vector<1x8xf32>
    %cst_50 = arith.constant 1.000000e+00 : f32
    %166 = vector.broadcast %cst_50 : f32 to vector<1x8xf32>
    %167 = arith.addf %166, %165 : vector<1x8xf32>
    %168 = arith.divf %166, %167 : vector<1x8xf32>
    %169 = arith.addf %99, %89 : vector<1x8xf32>
    %170 = vector.broadcast %6 : vector<1x1xf32> to vector<1x8xf32>
    %171 = arith.addf %169, %170 : vector<1x8xf32>
    %172 = arith.negf %171 : vector<1x8xf32>
    %173 = math.exp %172 : vector<1x8xf32>
    %cst_51 = arith.constant 1.000000e+00 : f32
    %174 = vector.broadcast %cst_51 : f32 to vector<1x8xf32>
    %175 = arith.addf %174, %173 : vector<1x8xf32>
    %176 = arith.divf %174, %175 : vector<1x8xf32>
    %177 = arith.addf %114, %104 : vector<1x8xf32>
    %178 = vector.broadcast %6 : vector<1x1xf32> to vector<1x8xf32>
    %179 = arith.addf %177, %178 : vector<1x8xf32>
    %180 = arith.negf %179 : vector<1x8xf32>
    %181 = math.exp %180 : vector<1x8xf32>
    %cst_52 = arith.constant 1.000000e+00 : f32
    %182 = vector.broadcast %cst_52 : f32 to vector<1x8xf32>
    %183 = arith.addf %182, %181 : vector<1x8xf32>
    %184 = arith.divf %182, %183 : vector<1x8xf32>
    %185 = arith.addf %119, %109 : vector<1x8xf32>
    %186 = vector.broadcast %6 : vector<1x1xf32> to vector<1x8xf32>
    %187 = arith.addf %185, %186 : vector<1x8xf32>
    %188 = arith.negf %187 : vector<1x8xf32>
    %189 = math.exp %188 : vector<1x8xf32>
    %cst_53 = arith.constant 1.000000e+00 : f32
    %190 = vector.broadcast %cst_53 : f32 to vector<1x8xf32>
    %191 = arith.addf %190, %189 : vector<1x8xf32>
    %192 = arith.divf %190, %191 : vector<1x8xf32>
    %193 = arith.addf %134, %124 : vector<1x8xf32>
    %194 = vector.broadcast %6 : vector<1x1xf32> to vector<1x8xf32>
    %195 = arith.addf %193, %194 : vector<1x8xf32>
    %196 = arith.negf %195 : vector<1x8xf32>
    %197 = math.exp %196 : vector<1x8xf32>
    %cst_54 = arith.constant 1.000000e+00 : f32
    %198 = vector.broadcast %cst_54 : f32 to vector<1x8xf32>
    %199 = arith.addf %198, %197 : vector<1x8xf32>
    %200 = arith.divf %198, %199 : vector<1x8xf32>
    %201 = arith.addf %139, %129 : vector<1x8xf32>
    %202 = vector.broadcast %6 : vector<1x1xf32> to vector<1x8xf32>
    %203 = arith.addf %201, %202 : vector<1x8xf32>
    %204 = arith.negf %203 : vector<1x8xf32>
    %205 = math.exp %204 : vector<1x8xf32>
    %cst_55 = arith.constant 1.000000e+00 : f32
    %206 = vector.broadcast %cst_55 : f32 to vector<1x8xf32>
    %207 = arith.addf %206, %205 : vector<1x8xf32>
    %208 = arith.divf %206, %207 : vector<1x8xf32>
    %209 = vector.extract_strided_slice %74 {offsets = [0, 1], sizes = [1, 7], strides = [1, 1]} : vector<1x8xf32> to vector<1x7xf32>
    %cst_56 = arith.constant 0.000000e+00 : f32
    %210 = vector.broadcast %cst_56 : f32 to vector<1x1xf32>
    %211 = tpu.concatenate %209, %210 in 1 : vector<1x7xf32>, vector<1x1xf32> -> vector<1x8xf32>
    %212 = arith.addf %211, %144 : vector<1x8xf32>
    %213 = vector.broadcast %6 : vector<1x1xf32> to vector<1x8xf32>
    %214 = arith.addf %212, %213 : vector<1x8xf32>
    %215 = arith.negf %214 : vector<1x8xf32>
    %216 = math.exp %215 : vector<1x8xf32>
    %cst_57 = arith.constant 1.000000e+00 : f32
    %217 = vector.broadcast %cst_57 : f32 to vector<1x8xf32>
    %218 = arith.addf %217, %216 : vector<1x8xf32>
    %219 = arith.divf %217, %218 : vector<1x8xf32>
    %c0_58 = arith.constant 0 : index
    %c0_59 = arith.constant 0 : index
    %220 = vector.load %arg10[%c0_58, %c0_59] : memref<8x8xf32, #tpu.memory_space<vmem>>, vector<8x8xf32>
    %221 = vector.extract_strided_slice %220 {offsets = [0, 0], sizes = [1, 8], strides = [1, 1]} : vector<8x8xf32> to vector<1x8xf32>
    %222 = arith.mulf %160, %221 : vector<1x8xf32>
    %223 = vector.extract_strided_slice %220 {offsets = [1, 0], sizes = [1, 8], strides = [1, 1]} : vector<8x8xf32> to vector<1x8xf32>
    %224 = arith.mulf %168, %223 : vector<1x8xf32>
    %225 = arith.addf %222, %224 : vector<1x8xf32>
    %226 = vector.extract_strided_slice %220 {offsets = [2, 0], sizes = [1, 8], strides = [1, 1]} : vector<8x8xf32> to vector<1x8xf32>
    %227 = arith.mulf %176, %226 : vector<1x8xf32>
    %228 = arith.addf %225, %227 : vector<1x8xf32>
    %229 = vector.extract_strided_slice %220 {offsets = [3, 0], sizes = [1, 8], strides = [1, 1]} : vector<8x8xf32> to vector<1x8xf32>
    %230 = arith.mulf %184, %229 : vector<1x8xf32>
    %231 = arith.addf %228, %230 : vector<1x8xf32>
    %232 = vector.extract_strided_slice %220 {offsets = [4, 0], sizes = [1, 8], strides = [1, 1]} : vector<8x8xf32> to vector<1x8xf32>
    %233 = arith.mulf %192, %232 : vector<1x8xf32>
    %234 = arith.addf %231, %233 : vector<1x8xf32>
    %235 = vector.extract_strided_slice %220 {offsets = [5, 0], sizes = [1, 8], strides = [1, 1]} : vector<8x8xf32> to vector<1x8xf32>
    %236 = arith.mulf %200, %235 : vector<1x8xf32>
    %237 = arith.addf %234, %236 : vector<1x8xf32>
    %238 = vector.extract_strided_slice %220 {offsets = [6, 0], sizes = [1, 8], strides = [1, 1]} : vector<8x8xf32> to vector<1x8xf32>
    %239 = arith.mulf %208, %238 : vector<1x8xf32>
    %240 = arith.addf %237, %239 : vector<1x8xf32>
    %241 = vector.extract_strided_slice %220 {offsets = [7, 0], sizes = [1, 8], strides = [1, 1]} : vector<8x8xf32> to vector<1x8xf32>
    %242 = arith.mulf %219, %241 : vector<1x8xf32>
    %243 = arith.addf %240, %242 : vector<1x8xf32>
    %c0_60 = arith.constant 0 : index
    %c0_61 = arith.constant 0 : index
    %c0_62 = arith.constant 0 : index
    %244 = vector.load %arg11[%c0_60, %c0_61, %c0_62] : memref<1x1x8xf32, #tpu.memory_space<vmem>>, vector<1x1x8xf32>
    %245 = vector.shape_cast %244 : vector<1x1x8xf32> to vector<1x8xf32>
    %246 = vector.shape_cast %243 : vector<1x8xf32> to vector<1x1x8xf32>
    tpu.vector_store %arg11[%c0_60, %c0_61, %c0_62], %246 {strides = array<i32>} : memref<1x1x8xf32, #tpu.memory_space<vmem>>, vector<1x1x8xf32>,
    return
  }
  func.func @transform_0(%arg0: i32) -> (i32, i32, i32) {
    %c0_i32 = arith.constant 0 : i32
    %c0_i32_0 = arith.constant 0 : i32
    %c0_i32_1 = arith.constant 0 : i32
    return %arg0, %c0_i32, %c0_i32_0 : i32, i32, i32
  }
  func.func @transform_1(%arg0: i32) -> (i32, i32, i32) {
    %c0_i32 = arith.constant 0 : i32
    %c0_i32_0 = arith.constant 0 : i32
    %c0_i32_1 = arith.constant 0 : i32
    return %arg0, %c0_i32, %c0_i32_0 : i32, i32, i32
  }
  func.func @transform_2(%arg0: i32) -> (i32, i32) {
    %c0_i32 = arith.constant 0 : i32
    %c0_i32_0 = arith.constant 0 : i32
    %c0_i32_1 = arith.constant 0 : i32
    return %c0_i32, %c0_i32_0 : i32, i32
  }
  func.func @transform_3(%arg0: i32) -> (i32, i32) {
    %c0_i32 = arith.constant 0 : i32
    %c0_i32_0 = arith.constant 0 : i32
    %c0_i32_1 = arith.constant 0 : i32
    return %c0_i32, %c0_i32_0 : i32, i32
  }
  func.func @transform_4(%arg0: i32) -> (i32, i32) {
    %c0_i32 = arith.constant 0 : i32
    %c0_i32_0 = arith.constant 0 : i32
    %c0_i32_1 = arith.constant 0 : i32
    return %c0_i32, %c0_i32_0 : i32, i32
  }
  func.func @transform_5(%arg0: i32) -> (i32, i32) {
    %c0_i32 = arith.constant 0 : i32
    %c0_i32_0 = arith.constant 0 : i32
    %c0_i32_1 = arith.constant 0 : i32
    return %c0_i32, %c0_i32_0 : i32, i32
  }
  func.func @transform_6(%arg0: i32) -> (i32, i32) {
    %c0_i32 = arith.constant 0 : i32
    %c0_i32_0 = arith.constant 0 : i32
    %c0_i32_1 = arith.constant 0 : i32
    return %c0_i32, %c0_i32_0 : i32, i32
  }
  func.func @transform_7(%arg0: i32) -> (i32, i32) {
    %c0_i32 = arith.constant 0 : i32
    %c0_i32_0 = arith.constant 0 : i32
    %c0_i32_1 = arith.constant 0 : i32
    return %c0_i32, %c0_i32_0 : i32, i32
  }
  func.func @transform_8(%arg0: i32) -> (i32, i32) {
    %c0_i32 = arith.constant 0 : i32
    %c0_i32_0 = arith.constant 0 : i32
    %c0_i32_1 = arith.constant 0 : i32
    return %c0_i32, %c0_i32_0 : i32, i32
  }
  func.func @transform_9(%arg0: i32) -> (i32, i32) {
    %c0_i32 = arith.constant 0 : i32
    %c0_i32_0 = arith.constant 0 : i32
    %c0_i32_1 = arith.constant 0 : i32
    return %c0_i32, %c0_i32_0 : i32, i32
  }
  func.func @transform_10(%arg0: i32) -> (i32, i32, i32) {
    %c0_i32 = arith.constant 0 : i32
    %c0_i32_0 = arith.constant 0 : i32
    %c0_i32_1 = arith.constant 0 : i32
    return %arg0, %c0_i32, %c0_i32_0 : i32, i32, i32
  }
}

</mosaic_0001>

<llo_original>
// kernel: tpu_custom_call.1
$region0: #{tpu_custom_call.1}
  #allocation0 [shape = 'u32[]', space=smem, size = 0x4, offset = 0x4, fixed_abs, tag = 'smem constant byte address 0x4 - core index']
  #allocation1 [shape = 'u32[144,128]{1,0:T(1,128)}', space=vmem, size = 0x12000, scoped, tag = 'internal scratch']
  #allocation2 [shape = 'f32[1,1]{1,0:T(1,128)S(1)}', space=vmem, size = 0x200, scoped, tag = 'scoped memory for tpu_custom_call.1']
  %s0 = inlined_call_operand.vmem [shape: f32[2,128,8], index: 0, kind: input, shape index: {}]
  %s1 = inlined_call_operand.vmem [shape: f32[2,128,8], index: 1, kind: input, shape index: {}]
  %s2 = inlined_call_operand.vmem [shape: f32[512,128], index: 2, kind: input, shape index: {}]
  %s3 = inlined_call_operand.hbm [shape: f32[512,128], index: 3, kind: input, shape index: {}]
  %s4 = inlined_call_operand.vmem [shape: f32[128,1], index: 4, kind: input, shape index: {}]
  %s5 = inlined_call_operand.vmem [shape: f32[256,128], index: 5, kind: input, shape index: {}]
  %s6 = inlined_call_operand.vmem [shape: f32[64,1], index: 6, kind: input, shape index: {}]
  %s7 = inlined_call_operand.vmem [shape: f32[64,4], index: 7, kind: input, shape index: {}]
  %s8 = inlined_call_operand.<no memory space> [shape: f32[1,1], index: 8, kind: input, shape index: {}]
  %s9 = inlined_call_operand.vmem [shape: f32[8,8], index: 9, kind: input, shape index: {}]
  %s10 = inlined_call_operand.hbm [shape: f32[2,1,8], index: 10, kind: output, shape index: {}]
  %s11 = sld [smem:[#allocation0]]
  $region77: #{tpu_custom_call.1} parent=0
    _
  %s13 = ssub.s32 1, %s11
  %s14 = scalar_select 0, %s13, %s11
  %v15 = vstv %s8
  %16 = vst [vmem:[#allocation2] sm:$0x1] %v15
  $region1: #{tpu_custom_call.1} parent=0
    #allocation3 [shape = 'u8[262144]{0}', space=vmem, size = 0x40000, scoped, tag = 'input window, operand 3, single buffered']
    #allocation4 [shape = 's32[2]{0}', space=sflag, size = 0x8, scoped, tag = 'scoped memory for tpu_custom_call.1']
    #allocation5 [shape = 's32[2]{0}', space=sflag, size = 0x8, scoped, tag = 'scoped memory for tpu_custom_call.1']
    #allocation6 [shape = 'u8[1024]{0}', space=vmem, size = 0x400, scoped, tag = 'output window, operand 0']
    %17 = vsyncpa [#allocation4], 0
    %18 = vsyncpa [#allocation5], 0
    %s19 = scalar_lea.sflag [#allocation5], 1
    %20 = vsyncpa %s19, 0
    loop: start=0, step=1, limit=4
    $region2: #{tpu_custom_call.1} parent=1 // loop_pre_header
      _
    $region3: #{tpu_custom_call.1} parent=1 // loop_header
      %s22 = sphi 0, %s26
      %p23 = scmp.ge.s32.totalorder %s22, 4
      %s32 = sphi 0, %s34
      %s35 = sphi 0, %s32
      %s36 = sphi 0, %s35
      %s52 = sphi 0, %s36
      %s58 = sphi 0, %s60
      %s61 = sphi 0, %s58
      %s62 = sphi 0, %s61
      %s78 = sphi 0, %s62
      %s82 = sphi 0, %s82
      %s84 = sphi 0, %s82
      %s85 = sphi 0, %s84
      %s99 = sphi 0, %s85
      %s103 = sphi 0, %s103
      %s105 = sphi 0, %s103
      %s106 = sphi 0, %s105
      %s120 = sphi 0, %s106
      %s124 = sphi 0, %s124
      %s126 = sphi 0, %s124
      %s127 = sphi 0, %s126
      %s141 = sphi 0, %s127
      %s145 = sphi 0, %s145
      %s147 = sphi 0, %s145
      %s148 = sphi 0, %s147
      %s162 = sphi 0, %s148
      %s166 = sphi 0, %s166
      %s168 = sphi 0, %s166
      %s169 = sphi 0, %s168
      %s183 = sphi 0, %s169
      %s187 = sphi 0, %s187
      %s189 = sphi 0, %s187
      %s190 = sphi 0, %s189
      %s204 = sphi 0, %s190
      %s208 = sphi 0, %s208
      %s210 = sphi 0, %s208
      %s211 = sphi 0, %s210
      %s225 = sphi 0, %s211
      %s229 = sphi 0, %s229
      %s231 = sphi 0, %s229
      %s232 = sphi 0, %s231
      %s246 = sphi 0, %s232
      %s252 = sphi 0, %s254
      %s255 = sphi 0, %s252
      %s256 = sphi 0, %s255
      %s272 = sphi 0, %s256
    $region4: #{tpu_custom_call.1} parent=1 // loop_header_branch
      %25 = sbr.rel (%p23) target = $region8
    $region5: #{tpu_custom_call.1} parent=1 // loop_body
      %s27 = ssub.s32 %s22, 1
      %s28 = ssub.s32 %s22, 2
      %s29 = sadd.s32 %s22, 1
      %s30 = ssub.s32 %s22, %s29
      %p31 = scmp.eq.s32.totalorder %s30, 0
      %s33 = sadd.s32 %s32, 1
      %s34 = scalar_select %p31, %s32, %s33
      %p37 = pneg %p31
      %p38 = scmp.eq.s32.totalorder %s22, 1
      %p39 = por %p37, %p38
      %p40 = scmp.ne.s32.totalorder %s32, %s35
      %p41 = scmp.eq.s32.totalorder %s22, 0
      %p42 = por %p40, %p41
      %p43 = scmp.ne.s32.totalorder %s32, %s35
      %p44 = scmp.eq.s32.totalorder %s27, 1
      %p45 = por %p43, %p44
      %p46 = scmp.ne.s32.totalorder %s35, %s36
      %p47 = scmp.eq.s32.totalorder %s27, 0
      %p48 = por %p46, %p47
      %p49 = scmp.ne.s32.totalorder %s35, %s36
      %p50 = scmp.eq.s32.totalorder %s28, 1
      %p51 = por %p49, %p50
      %p53 = scmp.ne.s32.totalorder %s36, %s52
      %p54 = scmp.eq.s32.totalorder %s28, 0
      %p55 = por %p53, %p54
      %s56 = ssub.s32 %s22, %s29
      %p57 = scmp.eq.s32.totalorder %s56, 0
      %s59 = sadd.s32 %s58, 1
      %s60 = scalar_select %p57, %s58, %s59
      %p63 = pneg %p57
      %p64 = scmp.eq.s32.totalorder %s22, 1
      %p65 = por %p63, %p64
      %p66 = scmp.ne.s32.totalorder %s58, %s61
      %p67 = scmp.eq.s32.totalorder %s22, 0
      %p68 = por %p66, %p67
      %p69 = scmp.ne.s32.totalorder %s58, %s61
      %p70 = scmp.eq.s32.totalorder %s27, 1
      %p71 = por %p69, %p70
      %p72 = scmp.ne.s32.totalorder %s61, %s62
      %p73 = scmp.eq.s32.totalorder %s27, 0
      %p74 = por %p72, %p73
      %p75 = scmp.ne.s32.totalorder %s61, %s62
      %p76 = scmp.eq.s32.totalorder %s28, 1
      %p77 = por %p75, %p76
      %p79 = scmp.ne.s32.totalorder %s62, %s78
      %p80 = scmp.eq.s32.totalorder %s28, 0
      %p81 = por %p79, %p80
      %s83 = sadd.s32 %s82, 1
      %p86 = scmp.eq.s32.totalorder %s22, 1
      %p87 = scmp.ne.s32.totalorder %s82, %s84
      %p88 = scmp.eq.s32.totalorder %s22, 0
      %p89 = por %p87, %p88
      %p90 = scmp.ne.s32.totalorder %s82, %s84
      %p91 = scmp.eq.s32.totalorder %s27, 1
      %p92 = por %p90, %p91
      %p93 = scmp.ne.s32.totalorder %s84, %s85
      %p94 = scmp.eq.s32.totalorder %s27, 0
      %p95 = por %p93, %p94
      %p96 = scmp.ne.s32.totalorder %s84, %s85
      %p97 = scmp.eq.s32.totalorder %s28, 1
      %p98 = por %p96, %p97
      %p100 = scmp.ne.s32.totalorder %s85, %s99
      %p101 = scmp.eq.s32.totalorder %s28, 0
      %p102 = por %p100, %p101
      %s104 = sadd.s32 %s103, 1
      %p107 = scmp.eq.s32.totalorder %s22, 1
      %p108 = scmp.ne.s32.totalorder %s103, %s105
      %p109 = scmp.eq.s32.totalorder %s22, 0
      %p110 = por %p108, %p109
      %p111 = scmp.ne.s32.totalorder %s103, %s105
      %p112 = scmp.eq.s32.totalorder %s27, 1
      %p113 = por %p111, %p112
      %p114 = scmp.ne.s32.totalorder %s105, %s106
      %p115 = scmp.eq.s32.totalorder %s27, 0
      %p116 = por %p114, %p115
      %p117 = scmp.ne.s32.totalorder %s105, %s106
      %p118 = scmp.eq.s32.totalorder %s28, 1
      %p119 = por %p117, %p118
      %p121 = scmp.ne.s32.totalorder %s106, %s120
      %p122 = scmp.eq.s32.totalorder %s28, 0
      %p123 = por %p121, %p122
      %s125 = sadd.s32 %s124, 1
      %p128 = scmp.eq.s32.totalorder %s22, 1
      %p129 = scmp.ne.s32.totalorder %s124, %s126
      %p130 = scmp.eq.s32.totalorder %s22, 0
      %p131 = por %p129, %p130
      %p132 = scmp.ne.s32.totalorder %s124, %s126
      %p133 = scmp.eq.s32.totalorder %s27, 1
      %p134 = por %p132, %p133
      %p135 = scmp.ne.s32.totalorder %s126, %s127
      %p136 = scmp.eq.s32.totalorder %s27, 0
      %p137 = por %p135, %p136
      %p138 = scmp.ne.s32.totalorder %s126, %s127
      %p139 = scmp.eq.s32.totalorder %s28, 1
      %p140 = por %p138, %p139
      %p142 = scmp.ne.s32.totalorder %s127, %s141
      %p143 = scmp.eq.s32.totalorder %s28, 0
      %p144 = por %p142, %p143
      %s146 = sadd.s32 %s145, 1
      %p149 = scmp.eq.s32.totalorder %s22, 1
      %p150 = scmp.ne.s32.totalorder %s145, %s147
      %p151 = scmp.eq.s32.totalorder %s22, 0
      %p152 = por %p150, %p151
      %p153 = scmp.ne.s32.totalorder %s145, %s147
      %p154 = scmp.eq.s32.totalorder %s27, 1
      %p155 = por %p153, %p154
      %p156 = scmp.ne.s32.totalorder %s147, %s148
      %p157 = scmp.eq.s32.totalorder %s27, 0
      %p158 = por %p156, %p157
      %p159 = scmp.ne.s32.totalorder %s147, %s148
      %p160 = scmp.eq.s32.totalorder %s28, 1
      %p161 = por %p159, %p160
      %p163 = scmp.ne.s32.totalorder %s148, %s162
      %p164 = scmp.eq.s32.totalorder %s28, 0
      %p165 = por %p163, %p164
      %s167 = sadd.s32 %s166, 1
      %p170 = scmp.eq.s32.totalorder %s22, 1
      %p171 = scmp.ne.s32.totalorder %s166, %s168
      %p172 = scmp.eq.s32.totalorder %s22, 0
      %p173 = por %p171, %p172
      %p174 = scmp.ne.s32.totalorder %s166, %s168
      %p175 = scmp.eq.s32.totalorder %s27, 1
      %p176 = por %p174, %p175
      %p177 = scmp.ne.s32.totalorder %s168, %s169
      %p178 = scmp.eq.s32.totalorder %s27, 0
      %p179 = por %p177, %p178
      %p180 = scmp.ne.s32.totalorder %s168, %s169
      %p181 = scmp.eq.s32.totalorder %s28, 1
      %p182 = por %p180, %p181
      %p184 = scmp.ne.s32.totalorder %s169, %s183
      %p185 = scmp.eq.s32.totalorder %s28, 0
      %p186 = por %p184, %p185
      %s188 = sadd.s32 %s187, 1
      %p191 = scmp.eq.s32.totalorder %s22, 1
      %p192 = scmp.ne.s32.totalorder %s187, %s189
      %p193 = scmp.eq.s32.totalorder %s22, 0
      %p194 = por %p192, %p193
      %p195 = scmp.ne.s32.totalorder %s187, %s189
      %p196 = scmp.eq.s32.totalorder %s27, 1
      %p197 = por %p195, %p196
      %p198 = scmp.ne.s32.totalorder %s189, %s190
      %p199 = scmp.eq.s32.totalorder %s27, 0
      %p200 = por %p198, %p199
      %p201 = scmp.ne.s32.totalorder %s189, %s190
      %p202 = scmp.eq.s32.totalorder %s28, 1
      %p203 = por %p201, %p202
      %p205 = scmp.ne.s32.totalorder %s190, %s204
      %p206 = scmp.eq.s32.totalorder %s28, 0
      %p207 = por %p205, %p206
      %s209 = sadd.s32 %s208, 1
      %p212 = scmp.eq.s32.totalorder %s22, 1
      %p213 = scmp.ne.s32.totalorder %s208, %s210
      %p214 = scmp.eq.s32.totalorder %s22, 0
      %p215 = por %p213, %p214
      %p216 = scmp.ne.s32.totalorder %s208, %s210
      %p217 = scmp.eq.s32.totalorder %s27, 1
      %p218 = por %p216, %p217
      %p219 = scmp.ne.s32.totalorder %s210, %s211
      %p220 = scmp.eq.s32.totalorder %s27, 0
      %p221 = por %p219, %p220
      %p222 = scmp.ne.s32.totalorder %s210, %s211
      %p223 = scmp.eq.s32.totalorder %s28, 1
      %p224 = por %p222, %p223
      %p226 = scmp.ne.s32.totalorder %s211, %s225
      %p227 = scmp.eq.s32.totalorder %s28, 0
      %p228 = por %p226, %p227
      %s230 = sadd.s32 %s229, 1
      %p233 = scmp.eq.s32.totalorder %s22, 1
      %p234 = scmp.ne.s32.totalorder %s229, %s231
      %p235 = scmp.eq.s32.totalorder %s22, 0
      %p236 = por %p234, %p235
      %p237 = scmp.ne.s32.totalorder %s229, %s231
      %p238 = scmp.eq.s32.totalorder %s27, 1
      %p239 = por %p237, %p238
      %p240 = scmp.ne.s32.totalorder %s231, %s232
      %p241 = scmp.eq.s32.totalorder %s27, 0
      %p242 = por %p240, %p241
      %p243 = scmp.ne.s32.totalorder %s231, %s232
      %p244 = scmp.eq.s32.totalorder %s28, 1
      %p245 = por %p243, %p244
      %p247 = scmp.ne.s32.totalorder %s232, %s246
      %p248 = scmp.eq.s32.totalorder %s28, 0
      %p249 = por %p247, %p248
      %s250 = ssub.s32 %s22, %s29
      %p251 = scmp.eq.s32.totalorder %s250, 0
      %s253 = sadd.s32 %s252, 1
      %s254 = scalar_select %p251, %s252, %s253
      %p257 = pneg %p251
      %p258 = scmp.eq.s32.totalorder %s22, 1
      %p259 = por %p257, %p258
      %p260 = scmp.ne.s32.totalorder %s252, %s255
      %p261 = scmp.eq.s32.totalorder %s22, 0
      %p262 = por %p260, %p261
      %p263 = scmp.ne.s32.totalorder %s252, %s255
      %p264 = scmp.eq.s32.totalorder %s27, 1
      %p265 = por %p263, %p264
      %p266 = scmp.ne.s32.totalorder %s255, %s256
      %p267 = scmp.eq.s32.totalorder %s27, 0
      %p268 = por %p266, %p267
      %p269 = scmp.ne.s32.totalorder %s255, %s256
      %p270 = scmp.eq.s32.totalorder %s28, 1
      %p271 = por %p269, %p270
      %p273 = scmp.ne.s32.totalorder %s256, %s272
      %p274 = scmp.eq.s32.totalorder %s28, 0
      %p275 = por %p273, %p274
      %p276 = scmp.le.s32.totalorder 1, %s22
      %p277 = scmp.lt.s32.totalorder %s22, 3
      %p278 = pnand %p276, %p277
      %p279 = pneg %p278
      // Predicated region
      $region9: #{tpu_custom_call.1} parent=5 // pred_check
        _
      $region10: #{tpu_custom_call.1} parent=5 // pred_check_branch
        %281 = sbr.rel (%p278) target = $region12
      $region11: #{tpu_custom_call.1} parent=5 // pred_region
        %s282 = ssub.s32 %s22, 1
        // Predicated region
        $region13: #{tpu_custom_call.1} parent=11 // pred_check
          %p283 = pneg %p95
        $region14: #{tpu_custom_call.1} parent=11 // pred_check_branch
          %285 = sbr.rel (%p283) target = $region16
        $region15: #{tpu_custom_call.1} parent=11 // pred_region
          _
        $region16: #{tpu_custom_call.1} parent=11 // pred_fallthru
          _
        // Predicated region
        $region17: #{tpu_custom_call.1} parent=11 // pred_check
          %p286 = pneg %p116
        $region18: #{tpu_custom_call.1} parent=11 // pred_check_branch
          %288 = sbr.rel (%p286) target = $region20
        $region19: #{tpu_custom_call.1} parent=11 // pred_region
          %s290 = ssub.s32 8192, 8192
          %291 = vsyncadd [#allocation4], %s290
          %s292 = sshll.u32 [#allocation3], 4
          %s293 = int_to_ptr.vmem [resolvable:$true] %s292
          %298 = dma.hbm_to_vmem [thread:$0]  %s3, 8192, %s293, [#allocation4], 128, 128, 8
        $region20: #{tpu_custom_call.1} parent=11 // pred_fallthru
          _
        // Predicated region
        $region21: #{tpu_custom_call.1} parent=11 // pred_check
          %p299 = pneg %p137
        $region22: #{tpu_custom_call.1} parent=11 // pred_check_branch
          %301 = sbr.rel (%p299) target = $region24
        $region23: #{tpu_custom_call.1} parent=11 // pred_region
          _
        $region24: #{tpu_custom_call.1} parent=11 // pred_fallthru
          _
        // Predicated region
        $region25: #{tpu_custom_call.1} parent=11 // pred_check
          %p302 = pneg %p158
        $region26: #{tpu_custom_call.1} parent=11 // pred_check_branch
          %304 = sbr.rel (%p302) target = $region28
        $region27: #{tpu_custom_call.1} parent=11 // pred_region
          _
        $region28: #{tpu_custom_call.1} parent=11 // pred_fallthru
          _
        // Predicated region
        $region29: #{tpu_custom_call.1} parent=11 // pred_check
          %p305 = pneg %p179
        $region30: #{tpu_custom_call.1} parent=11 // pred_check_branch
          %307 = sbr.rel (%p305) target = $region32
        $region31: #{tpu_custom_call.1} parent=11 // pred_region
          _
        $region32: #{tpu_custom_call.1} parent=11 // pred_fallthru
          _
        // Predicated region
        $region33: #{tpu_custom_call.1} parent=11 // pred_check
          %p308 = pneg %p200
        $region34: #{tpu_custom_call.1} parent=11 // pred_check_branch
          %310 = sbr.rel (%p308) target = $region36
        $region35: #{tpu_custom_call.1} parent=11 // pred_region
          _
        $region36: #{tpu_custom_call.1} parent=11 // pred_fallthru
          _
        // Predicated region
        $region37: #{tpu_custom_call.1} parent=11 // pred_check
          %p311 = pneg %p221
        $region38: #{tpu_custom_call.1} parent=11 // pred_check_branch
          %313 = sbr.rel (%p311) target = $region40
        $region39: #{tpu_custom_call.1} parent=11 // pred_region
          _
        $region40: #{tpu_custom_call.1} parent=11 // pred_fallthru
          _
        // Predicated region
        $region41: #{tpu_custom_call.1} parent=11 // pred_check
          %p314 = pneg %p242
        $region42: #{tpu_custom_call.1} parent=11 // pred_check_branch
          %316 = sbr.rel (%p314) target = $region44
        $region43: #{tpu_custom_call.1} parent=11 // pred_region
          _
        $region44: #{tpu_custom_call.1} parent=11 // pred_fallthru
          _
      $region12: #{tpu_custom_call.1} parent=5 // pred_fallthru
        _
      %p317 = scmp.lt.s32.totalorder %s22, 2
      // Predicated region
      $region45: #{tpu_custom_call.1} parent=5 // pred_check
        %p318 = pneg %p317
      $region46: #{tpu_custom_call.1} parent=5 // pred_check_branch
        %320 = sbr.rel (%p318) target = $region48
      $region47: #{tpu_custom_call.1} parent=5 // pred_region
        // Predicated region
        $region49: #{tpu_custom_call.1} parent=47 // pred_check
          %p321 = pneg %p42
        $region50: #{tpu_custom_call.1} parent=47 // pred_check_branch
          %323 = sbr.rel (%p321) target = $region52
        $region51: #{tpu_custom_call.1} parent=47 // pred_region
          %p324 = scmp.lt.s32.totalorder %s22, 1
          %s325 = scalar_select %p324, %s22, 1
          %s326 = smul.addr %s325, 16
          %s327 = smul.addr %s326, 8
          %s328 = scalar_lea.vmem %s0, %s327
        $region52: #{tpu_custom_call.1} parent=47 // pred_fallthru
          _
        // Predicated region
        $region53: #{tpu_custom_call.1} parent=47 // pred_check
          %p329 = pneg %p68
        $region54: #{tpu_custom_call.1} parent=47 // pred_check_branch
          %331 = sbr.rel (%p329) target = $region56
        $region55: #{tpu_custom_call.1} parent=47 // pred_region
          %p332 = scmp.lt.s32.totalorder %s22, 1
          %s333 = scalar_select %p332, %s22, 1
          %s334 = smul.addr %s333, 16
          %s335 = smul.addr %s334, 8
          %s336 = scalar_lea.vmem %s1, %s335
        $region56: #{tpu_custom_call.1} parent=47 // pred_fallthru
          _
      $region48: #{tpu_custom_call.1} parent=5 // pred_fallthru
        _
      %p337 = scmp.le.s32.totalorder 1, %s22
      %p338 = scmp.lt.s32.totalorder %s22, 3
      %p339 = pnand %p337, %p338
      %p340 = pneg %p339
      // Predicated region
      $region57: #{tpu_custom_call.1} parent=5 // pred_check
        _
      $region58: #{tpu_custom_call.1} parent=5 // pred_check_branch
        %342 = sbr.rel (%p339) target = $region60
      $region59: #{tpu_custom_call.1} parent=5 // pred_region
        %s343 = ssub.s32 %s22, 1
        // Predicated region
        $region61: #{tpu_custom_call.1} parent=59 // pred_check
          %p344 = pneg %p116
        $region62: #{tpu_custom_call.1} parent=59 // pred_check_branch
          %346 = sbr.rel (%p344) target = $region64
        $region63: #{tpu_custom_call.1} parent=59 // pred_region
          %347 = dma.done [#allocation4], 8192
        $region64: #{tpu_custom_call.1} parent=59 // pred_fallthru
          _
        %p348 = scmp.lt.s32.totalorder %s27, 1
        %s349 = scalar_select %p348, %s27, 1
        %s350 = smul.addr %s349, 16
        %s351 = smul.addr %s350, 8
        %s352 = scalar_lea.vmem %s0, %s351
        %p353 = pneg %p48
        %p354 = pneg %p45
        %p355 = scmp.lt.s32.totalorder %s27, 1
        %s356 = scalar_select %p355, %s27, 1
        %s357 = smul.addr %s356, 16
        %s358 = smul.addr %s357, 8
        %s359 = scalar_lea.vmem %s1, %s358
        %p360 = pneg %p74
        %p361 = pneg %p71
        %p362 = pneg %p95
        %p363 = pneg %p92
        %p364 = pneg %p116
        %p365 = pneg %p113
        %p366 = pneg %p137
        %p367 = pneg %p134
        %p368 = pneg %p158
        %p369 = pneg %p155
        %p370 = pneg %p179
        %p371 = pneg %p176
        %p372 = pneg %p200
        %p373 = pneg %p197
        %p374 = pneg %p221
        %p375 = pneg %p218
        %p376 = pneg %p242
        %p377 = pneg %p239
        %p378 = pneg %p268
        %p379 = pneg %p265
        %s380 = sand.u32 %s255, 1
        %s381 = scalar_lea.sflag [#allocation5], %s380
        %s382 = sand.u32 %s255, 1
        %s383 = scalar_lea.vmem [#allocation6], %s382
        %p384 = scmp.lt.s32.totalorder %s27, 1
        %s385 = scalar_select %p384, %s27, 1
        %s386 = smul.addr %s385, 16
        %s387 = smul.addr %s386, 8
        %s388 = scalar_lea.vmem %s0, %s387
        %p389 = scmp.lt.s32.totalorder %s27, 1
        %s390 = scalar_select %p389, %s27, 1
        %s391 = smul.addr %s390, 16
        %s392 = smul.addr %s391, 8
        %s393 = scalar_lea.vmem %s1, %s392
        %v394 = vld [vmem:[%s388] sm:$0xff]
        %v395 = vld [vmem:[%s388 + $0x8] sm:$0xff]
        %v396 = vld [vmem:[%s388 + $0x10] sm:$0xff]
        %v397 = vld [vmem:[%s388 + $0x18] sm:$0xff]
        %v398 = vld [vmem:[%s388 + $0x20] sm:$0xff]
        %v399 = vld [vmem:[%s388 + $0x28] sm:$0xff]
        %v400 = vld [vmem:[%s388 + $0x30] sm:$0xff]
        %v401 = vld [vmem:[%s388 + $0x38] sm:$0xff]
        %v402 = vld [vmem:[%s388 + $0x40] sm:$0xff]
        %v403 = vld [vmem:[%s388 + $0x48] sm:$0xff]
        %v404 = vld [vmem:[%s388 + $0x50] sm:$0xff]
        %v405 = vld [vmem:[%s388 + $0x58] sm:$0xff]
        %v406 = vld [vmem:[%s388 + $0x60] sm:$0xff]
        %v407 = vld [vmem:[%s388 + $0x68] sm:$0xff]
        %v408 = vld [vmem:[%s388 + $0x70] sm:$0xff]
        %v409 = vld [vmem:[%s388 + $0x78] sm:$0xff]
        %v410 = vld [vmem:[%s393] sm:$0xff]
        %v411 = vld [vmem:[%s393 + $0x8] sm:$0xff]
        %v412 = vld [vmem:[%s393 + $0x10] sm:$0xff]
        %v413 = vld [vmem:[%s393 + $0x18] sm:$0xff]
        %v414 = vld [vmem:[%s393 + $0x20] sm:$0xff]
        %v415 = vld [vmem:[%s393 + $0x28] sm:$0xff]
        %v416 = vld [vmem:[%s393 + $0x30] sm:$0xff]
        %v417 = vld [vmem:[%s393 + $0x38] sm:$0xff]
        %v418 = vld [vmem:[%s393 + $0x40] sm:$0xff]
        %v419 = vld [vmem:[%s393 + $0x48] sm:$0xff]
        %v420 = vld [vmem:[%s393 + $0x50] sm:$0xff]
        %v421 = vld [vmem:[%s393 + $0x58] sm:$0xff]
        %v422 = vld [vmem:[%s393 + $0x60] sm:$0xff]
        %v423 = vld [vmem:[%s393 + $0x68] sm:$0xff]
        %v424 = vld [vmem:[%s393 + $0x70] sm:$0xff]
        %v425 = vld [vmem:[%s393 + $0x78] sm:$0xff]
        %v426 = vld [vmem:[%s4] sm:$0xff]
        %v427 = vld [vmem:[%s4 + $0x8] sm:$0xff]
        %v428 = vld [vmem:[%s4 + $0x10] sm:$0xff]
        %v429 = vld [vmem:[%s4 + $0x18] sm:$0xff]
        %v430 = vld [vmem:[%s4 + $0x20] sm:$0xff]
        %v431 = vld [vmem:[%s4 + $0x28] sm:$0xff]
        %v432 = vld [vmem:[%s4 + $0x30] sm:$0xff]
        %v433 = vld [vmem:[%s4 + $0x38] sm:$0xff]
        %v434 = vld [vmem:[%s4 + $0x40] sm:$0xff]
        %v435 = vld [vmem:[%s4 + $0x48] sm:$0xff]
        %v436 = vld [vmem:[%s4 + $0x50] sm:$0xff]
        %v437 = vld [vmem:[%s4 + $0x58] sm:$0xff]
        %v438 = vld [vmem:[%s4 + $0x60] sm:$0xff]
        %v439 = vld [vmem:[%s4 + $0x68] sm:$0xff]
        %v440 = vld [vmem:[%s4 + $0x70] sm:$0xff]
        %v441 = vld [vmem:[%s4 + $0x78] sm:$0xff]
        %v442 = vld [vmem:[%s6] sm:$0xff]
        %v443 = vld [vmem:[%s6 + $0x8] sm:$0xff]
        %v444 = vld [vmem:[%s6 + $0x10] sm:$0xff]
        %v445 = vld [vmem:[%s6 + $0x18] sm:$0xff]
        %v446 = vld [vmem:[%s6 + $0x20] sm:$0xff]
        %v447 = vld [vmem:[%s6 + $0x28] sm:$0xff]
        %v448 = vld [vmem:[%s6 + $0x30] sm:$0xff]
        %v449 = vld [vmem:[%s6 + $0x38] sm:$0xff]
        %v450 = vld [vmem:[#allocation2] sm:$0x1]
        %v451 = vld [vmem:[%s2] sm:$0xff]
        %v452 = vld [vmem:[%s2 + $0x8] sm:$0xff]
        %v453 = vld [vmem:[%s2 + $0x10] sm:$0xff]
        %v454 = vld [vmem:[%s2 + $0x18] sm:$0xff]
        %v455 = vld [vmem:[%s2 + $0x20] sm:$0xff]
        %v456 = vld [vmem:[%s2 + $0x28] sm:$0xff]
        %v457 = vld [vmem:[%s2 + $0x30] sm:$0xff]
        %v458 = vld [vmem:[%s2 + $0x38] sm:$0xff]
        %v459 = vld [vmem:[%s2 + $0x40] sm:$0xff]
        %v460 = vld [vmem:[%s2 + $0x48] sm:$0xff]
        %v461 = vld [vmem:[%s2 + $0x50] sm:$0xff]
        %v462 = vld [vmem:[%s2 + $0x58] sm:$0xff]
        %v463 = vld [vmem:[%s2 + $0x60] sm:$0xff]
        %v464 = vld [vmem:[%s2 + $0x68] sm:$0xff]
        %v465 = vld [vmem:[%s2 + $0x70] sm:$0xff]
        %v466 = vld [vmem:[%s2 + $0x78] sm:$0xff]
        %v467 = vld [vmem:[%s2 + $0x80] sm:$0xff]
        %v468 = vld [vmem:[%s2 + $0x88] sm:$0xff]
        %v469 = vld [vmem:[%s2 + $0x90] sm:$0xff]
        %v470 = vld [vmem:[%s2 + $0x98] sm:$0xff]
        %v471 = vld [vmem:[%s2 + $0xa0] sm:$0xff]
        %v472 = vld [vmem:[%s2 + $0xa8] sm:$0xff]
        %v473 = vld [vmem:[%s2 + $0xb0] sm:$0xff]
        %v474 = vld [vmem:[%s2 + $0xb8] sm:$0xff]
        %v475 = vld [vmem:[%s2 + $0xc0] sm:$0xff]
        %v476 = vld [vmem:[%s2 + $0xc8] sm:$0xff]
        %v477 = vld [vmem:[%s2 + $0xd0] sm:$0xff]
        %v478 = vld [vmem:[%s2 + $0xd8] sm:$0xff]
        %v479 = vld [vmem:[%s2 + $0xe0] sm:$0xff]
        %v480 = vld [vmem:[%s2 + $0xe8] sm:$0xff]
        %v481 = vld [vmem:[%s2 + $0xf0] sm:$0xff]
        %v482 = vld [vmem:[%s2 + $0xf8] sm:$0xff]
        %v483 = vld [vmem:[%s2 + $0x100] sm:$0xff]
        %v484 = vld [vmem:[%s2 + $0x108] sm:$0xff]
        %v485 = vld [vmem:[%s2 + $0x110] sm:$0xff]
        %v486 = vld [vmem:[%s2 + $0x118] sm:$0xff]
        %v487 = vld [vmem:[%s2 + $0x120] sm:$0xff]
        %v488 = vld [vmem:[%s2 + $0x128] sm:$0xff]
        %v489 = vld [vmem:[%s2 + $0x130] sm:$0xff]
        %v490 = vld [vmem:[%s2 + $0x138] sm:$0xff]
        %v491 = vld [vmem:[%s2 + $0x140] sm:$0xff]
        %v492 = vld [vmem:[%s2 + $0x148] sm:$0xff]
        %v493 = vld [vmem:[%s2 + $0x150] sm:$0xff]
        %v494 = vld [vmem:[%s2 + $0x158] sm:$0xff]
        %v495 = vld [vmem:[%s2 + $0x160] sm:$0xff]
        %v496 = vld [vmem:[%s2 + $0x168] sm:$0xff]
        %v497 = vld [vmem:[%s2 + $0x170] sm:$0xff]
        %v498 = vld [vmem:[%s2 + $0x178] sm:$0xff]
        %v499 = vld [vmem:[%s2 + $0x180] sm:$0xff]
        %v500 = vld [vmem:[%s2 + $0x188] sm:$0xff]
        %v501 = vld [vmem:[%s2 + $0x190] sm:$0xff]
        %v502 = vld [vmem:[%s2 + $0x198] sm:$0xff]
        %v503 = vld [vmem:[%s2 + $0x1a0] sm:$0xff]
        %v504 = vld [vmem:[%s2 + $0x1a8] sm:$0xff]
        %v505 = vld [vmem:[%s2 + $0x1b0] sm:$0xff]
        %v506 = vld [vmem:[%s2 + $0x1b8] sm:$0xff]
        %v507 = vld [vmem:[%s2 + $0x1c0] sm:$0xff]
        %v508 = vld [vmem:[%s2 + $0x1c8] sm:$0xff]
        %v509 = vld [vmem:[%s2 + $0x1d0] sm:$0xff]
        %v510 = vld [vmem:[%s2 + $0x1d8] sm:$0xff]
        %v511 = vld [vmem:[%s2 + $0x1e0] sm:$0xff]
        %v512 = vld [vmem:[%s2 + $0x1e8] sm:$0xff]
        %v513 = vld [vmem:[%s2 + $0x1f0] sm:$0xff]
        %v514 = vld [vmem:[%s2 + $0x1f8] sm:$0xff]
        %v515 = vld [vmem:[#allocation3] sm:$0xff]
        %v516 = vld [vmem:[#allocation3 + $0x8] sm:$0xff]
        %v517 = vld [vmem:[#allocation3 + $0x10] sm:$0xff]
        %v518 = vld [vmem:[#allocation3 + $0x18] sm:$0xff]
        %v519 = vld [vmem:[#allocation3 + $0x20] sm:$0xff]
        %v520 = vld [vmem:[#allocation3 + $0x28] sm:$0xff]
        %v521 = vld [vmem:[#allocation3 + $0x30] sm:$0xff]
        %v522 = vld [vmem:[#allocation3 + $0x38] sm:$0xff]
        %v523 = vld [vmem:[#allocation3 + $0x40] sm:$0xff]
        %v524 = vld [vmem:[#allocation3 + $0x48] sm:$0xff]
        %v525 = vld [vmem:[#allocation3 + $0x50] sm:$0xff]
        %v526 = vld [vmem:[#allocation3 + $0x58] sm:$0xff]
        %v527 = vld [vmem:[#allocation3 + $0x60] sm:$0xff]
        %v528 = vld [vmem:[#allocation3 + $0x68] sm:$0xff]
        %v529 = vld [vmem:[#allocation3 + $0x70] sm:$0xff]
        %v530 = vld [vmem:[#allocation3 + $0x78] sm:$0xff]
        %v531 = vld [vmem:[#allocation3 + $0x80] sm:$0xff]
        %v532 = vld [vmem:[#allocation3 + $0x88] sm:$0xff]
        %v533 = vld [vmem:[#allocation3 + $0x90] sm:$0xff]
        %v534 = vld [vmem:[#allocation3 + $0x98] sm:$0xff]
        %v535 = vld [vmem:[#allocation3 + $0xa0] sm:$0xff]
        %v536 = vld [vmem:[#allocation3 + $0xa8] sm:$0xff]
        %v537 = vld [vmem:[#allocation3 + $0xb0] sm:$0xff]
        %v538 = vld [vmem:[#allocation3 + $0xb8] sm:$0xff]
        %v539 = vld [vmem:[#allocation3 + $0xc0] sm:$0xff]
        %v540 = vld [vmem:[#allocation3 + $0xc8] sm:$0xff]
        %v541 = vld [vmem:[#allocation3 + $0xd0] sm:$0xff]
        %v542 = vld [vmem:[#allocation3 + $0xd8] sm:$0xff]
        %v543 = vld [vmem:[#allocation3 + $0xe0] sm:$0xff]
        %v544 = vld [vmem:[#allocation3 + $0xe8] sm:$0xff]
        %v545 = vld [vmem:[#allocation3 + $0xf0] sm:$0xff]
        %v546 = vld [vmem:[#allocation3 + $0xf8] sm:$0xff]
        %v547 = vld [vmem:[#allocation3 + $0x100] sm:$0xff]
        %v548 = vld [vmem:[#allocation3 + $0x108] sm:$0xff]
        %v549 = vld [vmem:[#allocation3 + $0x110] sm:$0xff]
        %v550 = vld [vmem:[#allocation3 + $0x118] sm:$0xff]
        %v551 = vld [vmem:[#allocation3 + $0x120] sm:$0xff]
        %v552 = vld [vmem:[#allocation3 + $0x128] sm:$0xff]
        %v553 = vld [vmem:[#allocation3 + $0x130] sm:$0xff]
        %v554 = vld [vmem:[#allocation3 + $0x138] sm:$0xff]
        %v555 = vld [vmem:[#allocation3 + $0x140] sm:$0xff]
        %v556 = vld [vmem:[#allocation3 + $0x148] sm:$0xff]
        %v557 = vld [vmem:[#allocation3 + $0x150] sm:$0xff]
        %v558 = vld [vmem:[#allocation3 + $0x158] sm:$0xff]
        %v559 = vld [vmem:[#allocation3 + $0x160] sm:$0xff]
        %v560 = vld [vmem:[#allocation3 + $0x168] sm:$0xff]
        %v561 = vld [vmem:[#allocation3 + $0x170] sm:$0xff]
        %v562 = vld [vmem:[#allocation3 + $0x178] sm:$0xff]
        %v563 = vld [vmem:[#allocation3 + $0x180] sm:$0xff]
        %v564 = vld [vmem:[#allocation3 + $0x188] sm:$0xff]
        %v565 = vld [vmem:[#allocation3 + $0x190] sm:$0xff]
        %v566 = vld [vmem:[#allocation3 + $0x198] sm:$0xff]
        %v567 = vld [vmem:[#allocation3 + $0x1a0] sm:$0xff]
        %v568 = vld [vmem:[#allocation3 + $0x1a8] sm:$0xff]
        %v569 = vld [vmem:[#allocation3 + $0x1b0] sm:$0xff]
        %v570 = vld [vmem:[#allocation3 + $0x1b8] sm:$0xff]
        %v571 = vld [vmem:[#allocation3 + $0x1c0] sm:$0xff]
        %v572 = vld [vmem:[#allocation3 + $0x1c8] sm:$0xff]
        %v573 = vld [vmem:[#allocation3 + $0x1d0] sm:$0xff]
        %v574 = vld [vmem:[#allocation3 + $0x1d8] sm:$0xff]
        %v575 = vld [vmem:[#allocation3 + $0x1e0] sm:$0xff]
        %v576 = vld [vmem:[#allocation3 + $0x1e8] sm:$0xff]
        %v577 = vld [vmem:[#allocation3 + $0x1f0] sm:$0xff]
        %v578 = vld [vmem:[#allocation3 + $0x1f8] sm:$0xff]
        %579 = vmatprep.subr.mxu0 0.0
        %580 = vmatpush1.msra.mxu0 %v425
        %581 = vmatprep.subr.mxu0 0.0
        %582 = vmatpush1.msra.mxu0 %v424
        %583 = vmatprep.subr.mxu0 0.0
        %584 = vmatpush1.msra.mxu0 %v423
        %585 = vmatprep.subr.mxu0 0.0
        %586 = vmatpush1.msra.mxu0 %v422
        %587 = vmatprep.subr.mxu0 0.0
        %588 = vmatpush1.msra.mxu0 %v421
        %589 = vmatprep.subr.mxu0 0.0
        %590 = vmatpush1.msra.mxu0 %v420
        %591 = vmatprep.subr.mxu0 0.0
        %592 = vmatpush1.msra.mxu0 %v419
        %593 = vmatprep.subr.mxu0 0.0
        %594 = vmatpush1.msra.mxu0 %v418
        %595 = vmatprep.subr.mxu0 0.0
        %596 = vmatpush1.msra.mxu0 %v417
        %597 = vmatprep.subr.mxu0 0.0
        %598 = vmatpush1.msra.mxu0 %v416
        %599 = vmatprep.subr.mxu0 0.0
        %600 = vmatpush1.msra.mxu0 %v415
        %601 = vmatprep.subr.mxu0 0.0
        %602 = vmatpush1.msra.mxu0 %v414
        %603 = vmatprep.subr.mxu0 0.0
        %604 = vmatpush1.msra.mxu0 %v413
        %605 = vmatprep.subr.mxu0 0.0
        %606 = vmatpush1.msra.mxu0 %v412
        %607 = vmatprep.subr.mxu0 0.0
        %608 = vmatpush1.msra.mxu0 %v411
        %609 = vmatprep.subr.mxu0 0.0
        %610 = vmatpush1.msra.mxu0 %v410
        %611 = vmatprep.subr.mxu0 0.0
        %612 = vmatpush2.msra.mxu0 0.0
        %613 = vmatprep.subr.mxu0 0.0
        %614 = vmatpush2.msra.mxu0 0.0
        %615 = vmatprep.subr.mxu0 0.0
        %616 = vmatpush2.msra.mxu0 0.0
        %617 = vmatprep.subr.mxu0 0.0
        %618 = vmatpush2.msra.mxu0 0.0
        %619 = vmatprep.subr.mxu0 0.0
        %620 = vmatpush2.msra.mxu0 0.0
        %621 = vmatprep.subr.mxu0 0.0
        %622 = vmatpush2.msra.mxu0 0.0
        %623 = vmatprep.subr.mxu0 0.0
        %624 = vmatpush2.msra.mxu0 0.0
        %625 = vmatprep.subr.mxu0 0.0
        %626 = vmatpush2.msra.mxu0 0.0
        %627 = vmatprep.subr.mxu0 0.0
        %628 = vmatpush2.msra.mxu0 0.0
        %629 = vmatprep.subr.mxu0 0.0
        %630 = vmatpush2.msra.mxu0 0.0
        %631 = vmatprep.subr.mxu0 0.0
        %632 = vmatpush2.msra.mxu0 0.0
        %633 = vmatprep.subr.mxu0 0.0
        %634 = vmatpush2.msra.mxu0 0.0
        %635 = vmatprep.subr.mxu0 0.0
        %636 = vmatpush2.msra.mxu0 0.0
        %637 = vmatprep.subr.mxu0 0.0
        %638 = vmatpush2.msra.mxu0 0.0
        %639 = vmatprep.subr.mxu0 0.0
        %640 = vmatpush2.msra.mxu0 0.0
        %641 = vmatprep.subr.mxu0 0.0
        %642 = vmatpush2.msra.mxu0 0.0
        %643 = vmatprep.mubr.f32.mxu0 0.0
        %644 = vmatmul.mubr.f32.gmra.mxu0 %v515
        %v645 = vpop.f32.mrf.mxu0
        %v646 = vadd.f32 0.0, %v645
        %v647 = vpop.f32.mrf.mxu0
        %648 = vmatprep.mubr.f32.mxu0 0.0
        %649 = vmatmul.mubr.f32.gmra.mxu0 %v516
        %v650 = vpop.f32.mrf.mxu0
        %v651 = vadd.f32 0.0, %v650
        %v652 = vpop.f32.mrf.mxu0
        %653 = vmatprep.mubr.f32.mxu0 0.0
        %654 = vmatmul.mubr.f32.gmra.mxu0 %v517
        %v655 = vpop.f32.mrf.mxu0
        %v656 = vadd.f32 0.0, %v655
        %v657 = vpop.f32.mrf.mxu0
        %658 = vmatprep.mubr.f32.mxu0 0.0
        %659 = vmatmul.mubr.f32.gmra.mxu0 %v518
        %v660 = vpop.f32.mrf.mxu0
        %v661 = vadd.f32 0.0, %v660
        %v662 = vpop.f32.mrf.mxu0
        %663 = vmatprep.mubr.f32.mxu0 0.0
        %664 = vmatmul.mubr.f32.gmra.mxu0 %v519
        %v665 = vpop.f32.mrf.mxu0
        %v666 = vadd.f32 0.0, %v665
        %v667 = vpop.f32.mrf.mxu0
        %668 = vmatprep.mubr.f32.mxu0 0.0
        %669 = vmatmul.mubr.f32.gmra.mxu0 %v520
        %v670 = vpop.f32.mrf.mxu0
        %v671 = vadd.f32 0.0, %v670
        %v672 = vpop.f32.mrf.mxu0
        %673 = vmatprep.mubr.f32.mxu0 0.0
        %674 = vmatmul.mubr.f32.gmra.mxu0 %v521
        %v675 = vpop.f32.mrf.mxu0
        %v676 = vadd.f32 0.0, %v675
        %v677 = vpop.f32.mrf.mxu0
        %678 = vmatprep.mubr.f32.mxu0 0.0
        %679 = vmatmul.mubr.f32.gmra.mxu0 %v522
        %v680 = vpop.f32.mrf.mxu0
        %v681 = vadd.f32 0.0, %v680
        %v682 = vpop.f32.mrf.mxu0
        %683 = vmatprep.mubr.f32.mxu0 0.0
        %684 = vmatmul.mubr.f32.gmra.mxu0 %v523
        %v685 = vpop.f32.mrf.mxu0
        %v686 = vadd.f32 0.0, %v685
        %v687 = vpop.f32.mrf.mxu0
        %688 = vmatprep.mubr.f32.mxu0 0.0
        %689 = vmatmul.mubr.f32.gmra.mxu0 %v524
        %v690 = vpop.f32.mrf.mxu0
        %v691 = vadd.f32 0.0, %v690
        %v692 = vpop.f32.mrf.mxu0
        %693 = vmatprep.mubr.f32.mxu0 0.0
        %694 = vmatmul.mubr.f32.gmra.mxu0 %v525
        %v695 = vpop.f32.mrf.mxu0
        %v696 = vadd.f32 0.0, %v695
        %v697 = vpop.f32.mrf.mxu0
        %698 = vmatprep.mubr.f32.mxu0 0.0
        %699 = vmatmul.mubr.f32.gmra.mxu0 %v526
        %v700 = vpop.f32.mrf.mxu0
        %v701 = vadd.f32 0.0, %v700
        %v702 = vpop.f32.mrf.mxu0
        %703 = vmatprep.mubr.f32.mxu0 0.0
        %704 = vmatmul.mubr.f32.gmra.mxu0 %v527
        %v705 = vpop.f32.mrf.mxu0
        %v706 = vadd.f32 0.0, %v705
        %v707 = vpop.f32.mrf.mxu0
        %708 = vmatprep.mubr.f32.mxu0 0.0
        %709 = vmatmul.mubr.f32.gmra.mxu0 %v528
        %v710 = vpop.f32.mrf.mxu0
        %v711 = vadd.f32 0.0, %v710
        %v712 = vpop.f32.mrf.mxu0
        %713 = vmatprep.mubr.f32.mxu0 0.0
        %714 = vmatmul.mubr.f32.gmra.mxu0 %v529
        %v715 = vpop.f32.mrf.mxu0
        %v716 = vadd.f32 0.0, %v715
        %v717 = vpop.f32.mrf.mxu0
        %718 = vmatprep.mubr.f32.mxu0 0.0
        %719 = vmatmul.mubr.f32.gmra.mxu0 %v530
        %v720 = vpop.f32.mrf.mxu0
        %v721 = vadd.f32 0.0, %v720
        %v722 = vpop.f32.mrf.mxu0
        %723 = vmatprep.mubr.f32.mxu0 0.0
        %724 = vmatmul.mubr.f32.gmra.mxu0 %v531
        %v725 = vpop.f32.mrf.mxu0
        %v726 = vadd.f32 0.0, %v725
        %v727 = vpop.f32.mrf.mxu0
        %728 = vmatprep.mubr.f32.mxu0 0.0
        %729 = vmatmul.mubr.f32.gmra.mxu0 %v532
        %v730 = vpop.f32.mrf.mxu0
        %v731 = vadd.f32 0.0, %v730
        %v732 = vpop.f32.mrf.mxu0
        %733 = vmatprep.mubr.f32.mxu0 0.0
        %734 = vmatmul.mubr.f32.gmra.mxu0 %v533
        %v735 = vpop.f32.mrf.mxu0
        %v736 = vadd.f32 0.0, %v735
        %v737 = vpop.f32.mrf.mxu0
        %738 = vmatprep.mubr.f32.mxu0 0.0
        %739 = vmatmul.mubr.f32.gmra.mxu0 %v534
        %v740 = vpop.f32.mrf.mxu0
        %v741 = vadd.f32 0.0, %v740
        %v742 = vpop.f32.mrf.mxu0
        %743 = vmatprep.mubr.f32.mxu0 0.0
        %744 = vmatmul.mubr.f32.gmra.mxu0 %v535
        %v745 = vpop.f32.mrf.mxu0
        %v746 = vadd.f32 0.0, %v745
        %v747 = vpop.f32.mrf.mxu0
        %748 = vmatprep.mubr.f32.mxu0 0.0
        %749 = vmatmul.mubr.f32.gmra.mxu0 %v536
        %v750 = vpop.f32.mrf.mxu0
        %v751 = vadd.f32 0.0, %v750
        %v752 = vpop.f32.mrf.mxu0
        %753 = vmatprep.mubr.f32.mxu0 0.0
        %754 = vmatmul.mubr.f32.gmra.mxu0 %v537
        %v755 = vpop.f32.mrf.mxu0
        %v756 = vadd.f32 0.0, %v755
        %v757 = vpop.f32.mrf.mxu0
        %758 = vmatprep.mubr.f32.mxu0 0.0
        %759 = vmatmul.mubr.f32.gmra.mxu0 %v538
        %v760 = vpop.f32.mrf.mxu0
        %v761 = vadd.f32 0.0, %v760
        %v762 = vpop.f32.mrf.mxu0
        %763 = vmatprep.mubr.f32.mxu0 0.0
        %764 = vmatmul.mubr.f32.gmra.mxu0 %v539
        %v765 = vpop.f32.mrf.mxu0
        %v766 = vadd.f32 0.0, %v765
        %v767 = vpop.f32.mrf.mxu0
        %768 = vmatprep.mubr.f32.mxu0 0.0
        %769 = vmatmul.mubr.f32.gmra.mxu0 %v540
        %v770 = vpop.f32.mrf.mxu0
        %v771 = vadd.f32 0.0, %v770
        %v772 = vpop.f32.mrf.mxu0
        %773 = vmatprep.mubr.f32.mxu0 0.0
        %774 = vmatmul.mubr.f32.gmra.mxu0 %v541
        %v775 = vpop.f32.mrf.mxu0
        %v776 = vadd.f32 0.0, %v775
        %v777 = vpop.f32.mrf.mxu0
        %778 = vmatprep.mubr.f32.mxu0 0.0
        %779 = vmatmul.mubr.f32.gmra.mxu0 %v542
        %v780 = vpop.f32.mrf.mxu0
        %v781 = vadd.f32 0.0, %v780
        %v782 = vpop.f32.mrf.mxu0
        %783 = vmatprep.mubr.f32.mxu0 0.0
        %784 = vmatmul.mubr.f32.gmra.mxu0 %v543
        %v785 = vpop.f32.mrf.mxu0
        %v786 = vadd.f32 0.0, %v785
        %v787 = vpop.f32.mrf.mxu0
        %788 = vmatprep.mubr.f32.mxu0 0.0
        %789 = vmatmul.mubr.f32.gmra.mxu0 %v544
        %v790 = vpop.f32.mrf.mxu0
        %v791 = vadd.f32 0.0, %v790
        %v792 = vpop.f32.mrf.mxu0
        %793 = vmatprep.mubr.f32.mxu0 0.0
        %794 = vmatmul.mubr.f32.gmra.mxu0 %v545
        %v795 = vpop.f32.mrf.mxu0
        %v796 = vadd.f32 0.0, %v795
        %v797 = vpop.f32.mrf.mxu0
        %798 = vmatprep.mubr.f32.mxu0 0.0
        %799 = vmatmul.mubr.f32.gmra.mxu0 %v546
        %v800 = vpop.f32.mrf.mxu0
        %v801 = vadd.f32 0.0, %v800
        %v802 = vpop.f32.mrf.mxu0
        %803 = vmatprep.mubr.f32.mxu0 0.0
        %804 = vmatmul.mubr.f32.gmra.mxu0 %v547
        %v805 = vpop.f32.mrf.mxu0
        %v806 = vadd.f32 0.0, %v805
        %v807 = vpop.f32.mrf.mxu0
        %808 = vmatprep.mubr.f32.mxu0 0.0
        %809 = vmatmul.mubr.f32.gmra.mxu0 %v548
        %v810 = vpop.f32.mrf.mxu0
        %v811 = vadd.f32 0.0, %v810
        %v812 = vpop.f32.mrf.mxu0
        %813 = vmatprep.mubr.f32.mxu0 0.0
        %814 = vmatmul.mubr.f32.gmra.mxu0 %v549
        %v815 = vpop.f32.mrf.mxu0
        %v816 = vadd.f32 0.0, %v815
        %v817 = vpop.f32.mrf.mxu0
        %818 = vmatprep.mubr.f32.mxu0 0.0
        %819 = vmatmul.mubr.f32.gmra.mxu0 %v550
        %v820 = vpop.f32.mrf.mxu0
        %v821 = vadd.f32 0.0, %v820
        %v822 = vpop.f32.mrf.mxu0
        %823 = vmatprep.mubr.f32.mxu0 0.0
        %824 = vmatmul.mubr.f32.gmra.mxu0 %v551
        %v825 = vpop.f32.mrf.mxu0
        %v826 = vadd.f32 0.0, %v825
        %v827 = vpop.f32.mrf.mxu0
        %828 = vmatprep.mubr.f32.mxu0 0.0
        %829 = vmatmul.mubr.f32.gmra.mxu0 %v552
        %v830 = vpop.f32.mrf.mxu0
        %v831 = vadd.f32 0.0, %v830
        %v832 = vpop.f32.mrf.mxu0
        %833 = vmatprep.mubr.f32.mxu0 0.0
        %834 = vmatmul.mubr.f32.gmra.mxu0 %v553
        %v835 = vpop.f32.mrf.mxu0
        %v836 = vadd.f32 0.0, %v835
        %v837 = vpop.f32.mrf.mxu0
        %838 = vmatprep.mubr.f32.mxu0 0.0
        %839 = vmatmul.mubr.f32.gmra.mxu0 %v554
        %v840 = vpop.f32.mrf.mxu0
        %v841 = vadd.f32 0.0, %v840
        %v842 = vpop.f32.mrf.mxu0
        %843 = vmatprep.mubr.f32.mxu0 0.0
        %844 = vmatmul.mubr.f32.gmra.mxu0 %v555
        %v845 = vpop.f32.mrf.mxu0
        %v846 = vadd.f32 0.0, %v845
        %v847 = vpop.f32.mrf.mxu0
        %848 = vmatprep.mubr.f32.mxu0 0.0
        %849 = vmatmul.mubr.f32.gmra.mxu0 %v556
        %v850 = vpop.f32.mrf.mxu0
        %v851 = vadd.f32 0.0, %v850
        %v852 = vpop.f32.mrf.mxu0
        %853 = vmatprep.mubr.f32.mxu0 0.0
        %854 = vmatmul.mubr.f32.gmra.mxu0 %v557
        %v855 = vpop.f32.mrf.mxu0
        %v856 = vadd.f32 0.0, %v855
        %v857 = vpop.f32.mrf.mxu0
        %858 = vmatprep.mubr.f32.mxu0 0.0
        %859 = vmatmul.mubr.f32.gmra.mxu0 %v558
        %v860 = vpop.f32.mrf.mxu0
        %v861 = vadd.f32 0.0, %v860
        %v862 = vpop.f32.mrf.mxu0
        %863 = vmatprep.mubr.f32.mxu0 0.0
        %864 = vmatmul.mubr.f32.gmra.mxu0 %v559
        %v865 = vpop.f32.mrf.mxu0
        %v866 = vadd.f32 0.0, %v865
        %v867 = vpop.f32.mrf.mxu0
        %868 = vmatprep.mubr.f32.mxu0 0.0
        %869 = vmatmul.mubr.f32.gmra.mxu0 %v560
        %v870 = vpop.f32.mrf.mxu0
        %v871 = vadd.f32 0.0, %v870
        %v872 = vpop.f32.mrf.mxu0
        %873 = vmatprep.mubr.f32.mxu0 0.0
        %874 = vmatmul.mubr.f32.gmra.mxu0 %v561
        %v875 = vpop.f32.mrf.mxu0
        %v876 = vadd.f32 0.0, %v875
        %v877 = vpop.f32.mrf.mxu0
        %878 = vmatprep.mubr.f32.mxu0 0.0
        %879 = vmatmul.mubr.f32.gmra.mxu0 %v562
        %v880 = vpop.f32.mrf.mxu0
        %v881 = vadd.f32 0.0, %v880
        %v882 = vpop.f32.mrf.mxu0
        %883 = vmatprep.mubr.f32.mxu0 0.0
        %884 = vmatmul.mubr.f32.gmra.mxu0 %v563
        %v885 = vpop.f32.mrf.mxu0
        %v886 = vadd.f32 0.0, %v885
        %v887 = vpop.f32.mrf.mxu0
        %888 = vmatprep.mubr.f32.mxu0 0.0
        %889 = vmatmul.mubr.f32.gmra.mxu0 %v564
        %v890 = vpop.f32.mrf.mxu0
        %v891 = vadd.f32 0.0, %v890
        %v892 = vpop.f32.mrf.mxu0
        %893 = vmatprep.mubr.f32.mxu0 0.0
        %894 = vmatmul.mubr.f32.gmra.mxu0 %v565
        %v895 = vpop.f32.mrf.mxu0
        %v896 = vadd.f32 0.0, %v895
        %v897 = vpop.f32.mrf.mxu0
        %898 = vmatprep.mubr.f32.mxu0 0.0
        %899 = vmatmul.mubr.f32.gmra.mxu0 %v566
        %v900 = vpop.f32.mrf.mxu0
        %v901 = vadd.f32 0.0, %v900
        %v902 = vpop.f32.mrf.mxu0
        %903 = vmatprep.mubr.f32.mxu0 0.0
        %904 = vmatmul.mubr.f32.gmra.mxu0 %v567
        %v905 = vpop.f32.mrf.mxu0
        %v906 = vadd.f32 0.0, %v905
        %v907 = vpop.f32.mrf.mxu0
        %908 = vmatprep.mubr.f32.mxu0 0.0
        %909 = vmatmul.mubr.f32.gmra.mxu0 %v568
        %v910 = vpop.f32.mrf.mxu0
        %v911 = vadd.f32 0.0, %v910
        %v912 = vpop.f32.mrf.mxu0
        %913 = vmatprep.mubr.f32.mxu0 0.0
        %914 = vmatmul.mubr.f32.gmra.mxu0 %v569
        %v915 = vpop.f32.mrf.mxu0
        %v916 = vadd.f32 0.0, %v915
        %v917 = vpop.f32.mrf.mxu0
        %918 = vmatprep.mubr.f32.mxu0 0.0
        %919 = vmatmul.mubr.f32.gmra.mxu0 %v570
        %v920 = vpop.f32.mrf.mxu0
        %v921 = vadd.f32 0.0, %v920
        %v922 = vpop.f32.mrf.mxu0
        %923 = vmatprep.mubr.f32.mxu0 0.0
        %924 = vmatmul.mubr.f32.gmra.mxu0 %v571
        %v925 = vpop.f32.mrf.mxu0
        %v926 = vadd.f32 0.0, %v925
        %v927 = vpop.f32.mrf.mxu0
        %928 = vmatprep.mubr.f32.mxu0 0.0
        %929 = vmatmul.mubr.f32.gmra.mxu0 %v572
        %v930 = vpop.f32.mrf.mxu0
        %v931 = vadd.f32 0.0, %v930
        %v932 = vpop.f32.mrf.mxu0
        %933 = vmatprep.mubr.f32.mxu0 0.0
        %934 = vmatmul.mubr.f32.gmra.mxu0 %v573
        %v935 = vpop.f32.mrf.mxu0
        %v936 = vadd.f32 0.0, %v935
        %v937 = vpop.f32.mrf.mxu0
        %938 = vmatprep.mubr.f32.mxu0 0.0
        %939 = vmatmul.mubr.f32.gmra.mxu0 %v574
        %v940 = vpop.f32.mrf.mxu0
        %v941 = vadd.f32 0.0, %v940
        %v942 = vpop.f32.mrf.mxu0
        %943 = vmatprep.mubr.f32.mxu0 0.0
        %944 = vmatmul.mubr.f32.gmra.mxu0 %v575
        %v945 = vpop.f32.mrf.mxu0
        %v946 = vadd.f32 0.0, %v945
        %v947 = vpop.f32.mrf.mxu0
        %948 = vmatprep.mubr.f32.mxu0 0.0
        %949 = vmatmul.mubr.f32.gmra.mxu0 %v576
        %v950 = vpop.f32.mrf.mxu0
        %v951 = vadd.f32 0.0, %v950
        %v952 = vpop.f32.mrf.mxu0
        %953 = vmatprep.mubr.f32.mxu0 0.0
        %954 = vmatmul.mubr.f32.gmra.mxu0 %v577
        %v955 = vpop.f32.mrf.mxu0
        %v956 = vadd.f32 0.0, %v955
        %v957 = vpop.f32.mrf.mxu0
        %958 = vmatprep.mubr.f32.mxu0 0.0
        %959 = vmatmul.mubr.f32.gmra.mxu0 %v578
        %v960 = vpop.f32.mrf.mxu0
        %v961 = vadd.f32 0.0, %v960
        %v962 = vpop.f32.mrf.mxu0
        %963 = vdwg.mxu0
        %964 = vmatprep.subr.mxu0 0.0
        %965 = vmatpush1.msra.mxu0 %v409
        %966 = vmatprep.subr.mxu0 0.0
        %967 = vmatpush1.msra.mxu0 %v408
        %968 = vmatprep.subr.mxu0 0.0
        %969 = vmatpush1.msra.mxu0 %v407
        %970 = vmatprep.subr.mxu0 0.0
        %971 = vmatpush1.msra.mxu0 %v406
        %972 = vmatprep.subr.mxu0 0.0
        %973 = vmatpush1.msra.mxu0 %v405
        %974 = vmatprep.subr.mxu0 0.0
        %975 = vmatpush1.msra.mxu0 %v404
        %976 = vmatprep.subr.mxu0 0.0
        %977 = vmatpush1.msra.mxu0 %v403
        %978 = vmatprep.subr.mxu0 0.0
        %979 = vmatpush1.msra.mxu0 %v402
        %980 = vmatprep.subr.mxu0 0.0
        %981 = vmatpush1.msra.mxu0 %v401
        %982 = vmatprep.subr.mxu0 0.0
        %983 = vmatpush1.msra.mxu0 %v400
        %984 = vmatprep.subr.mxu0 0.0
        %985 = vmatpush1.msra.mxu0 %v399
        %986 = vmatprep.subr.mxu0 0.0
        %987 = vmatpush1.msra.mxu0 %v398
        %988 = vmatprep.subr.mxu0 0.0
        %989 = vmatpush1.msra.mxu0 %v397
        %990 = vmatprep.subr.mxu0 0.0
        %991 = vmatpush1.msra.mxu0 %v396
        %992 = vmatprep.subr.mxu0 0.0
        %993 = vmatpush1.msra.mxu0 %v395
        %994 = vmatprep.subr.mxu0 0.0
        %995 = vmatpush1.msra.mxu0 %v394
        %996 = vmatprep.subr.mxu0 0.0
        %997 = vmatpush2.msra.mxu0 0.0
        %998 = vmatprep.subr.mxu0 0.0
        %999 = vmatpush2.msra.mxu0 0.0
        %1000 = vmatprep.subr.mxu0 0.0
        %1001 = vmatpush2.msra.mxu0 0.0
        %1002 = vmatprep.subr.mxu0 0.0
        %1003 = vmatpush2.msra.mxu0 0.0
        %1004 = vmatprep.subr.mxu0 0.0
        %1005 = vmatpush2.msra.mxu0 0.0
        %1006 = vmatprep.subr.mxu0 0.0
        %1007 = vmatpush2.msra.mxu0 0.0
        %1008 = vmatprep.subr.mxu0 0.0
        %1009 = vmatpush2.msra.mxu0 0.0
        %1010 = vmatprep.subr.mxu0 0.0
        %1011 = vmatpush2.msra.mxu0 0.0
        %1012 = vmatprep.subr.mxu0 0.0
        %1013 = vmatpush2.msra.mxu0 0.0
        %1014 = vmatprep.subr.mxu0 0.0
        %1015 = vmatpush2.msra.mxu0 0.0
        %1016 = vmatprep.subr.mxu0 0.0
        %1017 = vmatpush2.msra.mxu0 0.0
        %1018 = vmatprep.subr.mxu0 0.0
        %1019 = vmatpush2.msra.mxu0 0.0
        %1020 = vmatprep.subr.mxu0 0.0
        %1021 = vmatpush2.msra.mxu0 0.0
        %1022 = vmatprep.subr.mxu0 0.0
        %1023 = vmatpush2.msra.mxu0 0.0
        %1024 = vmatprep.subr.mxu0 0.0
        %1025 = vmatpush2.msra.mxu0 0.0
        %1026 = vmatprep.subr.mxu0 0.0
        %1027 = vmatpush2.msra.mxu0 0.0
        %1028 = vmatprep.mubr.f32.mxu0 0.0
        %1029 = vmatmul.mubr.f32.gmra.mxu0 %v451
        %v1030 = vpop.f32.mrf.mxu0
        %v1031 = vadd.f32 %v646, %v1030
        %v1032 = vpop.f32.mrf.mxu0
        %1033 = vmatprep.mubr.f32.mxu0 0.0
        %1034 = vmatmul.mubr.f32.gmra.mxu0 %v452
        %v1035 = vpop.f32.mrf.mxu0
        %v1036 = vadd.f32 %v651, %v1035
        %v1037 = vpop.f32.mrf.mxu0
        %1038 = vmatprep.mubr.f32.mxu0 0.0
        %1039 = vmatmul.mubr.f32.gmra.mxu0 %v453
        %v1040 = vpop.f32.mrf.mxu0
        %v1041 = vadd.f32 %v656, %v1040
        %v1042 = vpop.f32.mrf.mxu0
        %1043 = vmatprep.mubr.f32.mxu0 0.0
        %1044 = vmatmul.mubr.f32.gmra.mxu0 %v454
        %v1045 = vpop.f32.mrf.mxu0
        %v1046 = vadd.f32 %v661, %v1045
        %v1047 = vpop.f32.mrf.mxu0
        %1048 = vmatprep.mubr.f32.mxu0 0.0
        %1049 = vmatmul.mubr.f32.gmra.mxu0 %v455
        %v1050 = vpop.f32.mrf.mxu0
        %v1051 = vadd.f32 %v666, %v1050
        %v1052 = vpop.f32.mrf.mxu0
        %1053 = vmatprep.mubr.f32.mxu0 0.0
        %1054 = vmatmul.mubr.f32.gmra.mxu0 %v456
        %v1055 = vpop.f32.mrf.mxu0
        %v1056 = vadd.f32 %v671, %v1055
        %v1057 = vpop.f32.mrf.mxu0
        %1058 = vmatprep.mubr.f32.mxu0 0.0
        %1059 = vmatmul.mubr.f32.gmra.mxu0 %v457
        %v1060 = vpop.f32.mrf.mxu0
        %v1061 = vadd.f32 %v676, %v1060
        %v1062 = vpop.f32.mrf.mxu0
        %1063 = vmatprep.mubr.f32.mxu0 0.0
        %1064 = vmatmul.mubr.f32.gmra.mxu0 %v458
        %v1065 = vpop.f32.mrf.mxu0
        %v1066 = vadd.f32 %v681, %v1065
        %v1067 = vpop.f32.mrf.mxu0
        %1068 = vmatprep.mubr.f32.mxu0 0.0
        %1069 = vmatmul.mubr.f32.gmra.mxu0 %v459
        %v1070 = vpop.f32.mrf.mxu0
        %v1071 = vadd.f32 %v686, %v1070
        %v1072 = vpop.f32.mrf.mxu0
        %1073 = vmatprep.mubr.f32.mxu0 0.0
        %1074 = vmatmul.mubr.f32.gmra.mxu0 %v460
        %v1075 = vpop.f32.mrf.mxu0
        %v1076 = vadd.f32 %v691, %v1075
        %v1077 = vpop.f32.mrf.mxu0
        %1078 = vmatprep.mubr.f32.mxu0 0.0
        %1079 = vmatmul.mubr.f32.gmra.mxu0 %v461
        %v1080 = vpop.f32.mrf.mxu0
        %v1081 = vadd.f32 %v696, %v1080
        %v1082 = vpop.f32.mrf.mxu0
        %1083 = vmatprep.mubr.f32.mxu0 0.0
        %1084 = vmatmul.mubr.f32.gmra.mxu0 %v462
        %v1085 = vpop.f32.mrf.mxu0
        %v1086 = vadd.f32 %v701, %v1085
        %v1087 = vpop.f32.mrf.mxu0
        %1088 = vmatprep.mubr.f32.mxu0 0.0
        %1089 = vmatmul.mubr.f32.gmra.mxu0 %v463
        %v1090 = vpop.f32.mrf.mxu0
        %v1091 = vadd.f32 %v706, %v1090
        %v1092 = vpop.f32.mrf.mxu0
        %1093 = vmatprep.mubr.f32.mxu0 0.0
        %1094 = vmatmul.mubr.f32.gmra.mxu0 %v464
        %v1095 = vpop.f32.mrf.mxu0
        %v1096 = vadd.f32 %v711, %v1095
        %v1097 = vpop.f32.mrf.mxu0
        %1098 = vmatprep.mubr.f32.mxu0 0.0
        %1099 = vmatmul.mubr.f32.gmra.mxu0 %v465
        %v1100 = vpop.f32.mrf.mxu0
        %v1101 = vadd.f32 %v716, %v1100
        %v1102 = vpop.f32.mrf.mxu0
        %1103 = vmatprep.mubr.f32.mxu0 0.0
        %1104 = vmatmul.mubr.f32.gmra.mxu0 %v466
        %v1105 = vpop.f32.mrf.mxu0
        %v1106 = vadd.f32 %v721, %v1105
        %v1107 = vpop.f32.mrf.mxu0
        %1108 = vmatprep.mubr.f32.mxu0 0.0
        %1109 = vmatmul.mubr.f32.gmra.mxu0 %v467
        %v1110 = vpop.f32.mrf.mxu0
        %v1111 = vadd.f32 %v726, %v1110
        %v1112 = vpop.f32.mrf.mxu0
        %1113 = vmatprep.mubr.f32.mxu0 0.0
        %1114 = vmatmul.mubr.f32.gmra.mxu0 %v468
        %v1115 = vpop.f32.mrf.mxu0
        %v1116 = vadd.f32 %v731, %v1115
        %v1117 = vpop.f32.mrf.mxu0
        %1118 = vmatprep.mubr.f32.mxu0 0.0
        %1119 = vmatmul.mubr.f32.gmra.mxu0 %v469
        %v1120 = vpop.f32.mrf.mxu0
        %v1121 = vadd.f32 %v736, %v1120
        %v1122 = vpop.f32.mrf.mxu0
        %1123 = vmatprep.mubr.f32.mxu0 0.0
        %1124 = vmatmul.mubr.f32.gmra.mxu0 %v470
        %v1125 = vpop.f32.mrf.mxu0
        %v1126 = vadd.f32 %v741, %v1125
        %v1127 = vpop.f32.mrf.mxu0
        %1128 = vmatprep.mubr.f32.mxu0 0.0
        %1129 = vmatmul.mubr.f32.gmra.mxu0 %v471
        %v1130 = vpop.f32.mrf.mxu0
        %v1131 = vadd.f32 %v746, %v1130
        %v1132 = vpop.f32.mrf.mxu0
        %1133 = vmatprep.mubr.f32.mxu0 0.0
        %1134 = vmatmul.mubr.f32.gmra.mxu0 %v472
        %v1135 = vpop.f32.mrf.mxu0
        %v1136 = vadd.f32 %v751, %v1135
        %v1137 = vpop.f32.mrf.mxu0
        %1138 = vmatprep.mubr.f32.mxu0 0.0
        %1139 = vmatmul.mubr.f32.gmra.mxu0 %v473
        %v1140 = vpop.f32.mrf.mxu0
        %v1141 = vadd.f32 %v756, %v1140
        %v1142 = vpop.f32.mrf.mxu0
        %1143 = vmatprep.mubr.f32.mxu0 0.0
        %1144 = vmatmul.mubr.f32.gmra.mxu0 %v474
        %v1145 = vpop.f32.mrf.mxu0
        %v1146 = vadd.f32 %v761, %v1145
        %v1147 = vpop.f32.mrf.mxu0
        %1148 = vmatprep.mubr.f32.mxu0 0.0
        %1149 = vmatmul.mubr.f32.gmra.mxu0 %v475
        %v1150 = vpop.f32.mrf.mxu0
        %v1151 = vadd.f32 %v766, %v1150
        %v1152 = vpop.f32.mrf.mxu0
        %1153 = vmatprep.mubr.f32.mxu0 0.0
        %1154 = vmatmul.mubr.f32.gmra.mxu0 %v476
        %v1155 = vpop.f32.mrf.mxu0
        %v1156 = vadd.f32 %v771, %v1155
        %v1157 = vpop.f32.mrf.mxu0
        %1158 = vmatprep.mubr.f32.mxu0 0.0
        %1159 = vmatmul.mubr.f32.gmra.mxu0 %v477
        %v1160 = vpop.f32.mrf.mxu0
        %v1161 = vadd.f32 %v776, %v1160
        %v1162 = vpop.f32.mrf.mxu0
        %1163 = vmatprep.mubr.f32.mxu0 0.0
        %1164 = vmatmul.mubr.f32.gmra.mxu0 %v478
        %v1165 = vpop.f32.mrf.mxu0
        %v1166 = vadd.f32 %v781, %v1165
        %v1167 = vpop.f32.mrf.mxu0
        %1168 = vmatprep.mubr.f32.mxu0 0.0
        %1169 = vmatmul.mubr.f32.gmra.mxu0 %v479
        %v1170 = vpop.f32.mrf.mxu0
        %v1171 = vadd.f32 %v786, %v1170
        %v1172 = vpop.f32.mrf.mxu0
        %1173 = vmatprep.mubr.f32.mxu0 0.0
        %1174 = vmatmul.mubr.f32.gmra.mxu0 %v480
        %v1175 = vpop.f32.mrf.mxu0
        %v1176 = vadd.f32 %v791, %v1175
        %v1177 = vpop.f32.mrf.mxu0
        %1178 = vmatprep.mubr.f32.mxu0 0.0
        %1179 = vmatmul.mubr.f32.gmra.mxu0 %v481
        %v1180 = vpop.f32.mrf.mxu0
        %v1181 = vadd.f32 %v796, %v1180
        %v1182 = vpop.f32.mrf.mxu0
        %1183 = vmatprep.mubr.f32.mxu0 0.0
        %1184 = vmatmul.mubr.f32.gmra.mxu0 %v482
        %v1185 = vpop.f32.mrf.mxu0
        %v1186 = vadd.f32 %v801, %v1185
        %v1187 = vpop.f32.mrf.mxu0
        %1188 = vmatprep.mubr.f32.mxu0 0.0
        %1189 = vmatmul.mubr.f32.gmra.mxu0 %v483
        %v1190 = vpop.f32.mrf.mxu0
        %v1191 = vadd.f32 %v806, %v1190
        %v1192 = vpop.f32.mrf.mxu0
        %1193 = vmatprep.mubr.f32.mxu0 0.0
        %1194 = vmatmul.mubr.f32.gmra.mxu0 %v484
        %v1195 = vpop.f32.mrf.mxu0
        %v1196 = vadd.f32 %v811, %v1195
        %v1197 = vpop.f32.mrf.mxu0
        %1198 = vmatprep.mubr.f32.mxu0 0.0
        %1199 = vmatmul.mubr.f32.gmra.mxu0 %v485
        %v1200 = vpop.f32.mrf.mxu0
        %v1201 = vadd.f32 %v816, %v1200
        %v1202 = vpop.f32.mrf.mxu0
        %1203 = vmatprep.mubr.f32.mxu0 0.0
        %1204 = vmatmul.mubr.f32.gmra.mxu0 %v486
        %v1205 = vpop.f32.mrf.mxu0
        %v1206 = vadd.f32 %v821, %v1205
        %v1207 = vpop.f32.mrf.mxu0
        %1208 = vmatprep.mubr.f32.mxu0 0.0
        %1209 = vmatmul.mubr.f32.gmra.mxu0 %v487
        %v1210 = vpop.f32.mrf.mxu0
        %v1211 = vadd.f32 %v826, %v1210
        %v1212 = vpop.f32.mrf.mxu0
        %1213 = vmatprep.mubr.f32.mxu0 0.0
        %1214 = vmatmul.mubr.f32.gmra.mxu0 %v488
        %v1215 = vpop.f32.mrf.mxu0
        %v1216 = vadd.f32 %v831, %v1215
        %v1217 = vpop.f32.mrf.mxu0
        %1218 = vmatprep.mubr.f32.mxu0 0.0
        %1219 = vmatmul.mubr.f32.gmra.mxu0 %v489
        %v1220 = vpop.f32.mrf.mxu0
        %v1221 = vadd.f32 %v836, %v1220
        %v1222 = vpop.f32.mrf.mxu0
        %1223 = vmatprep.mubr.f32.mxu0 0.0
        %1224 = vmatmul.mubr.f32.gmra.mxu0 %v490
        %v1225 = vpop.f32.mrf.mxu0
        %v1226 = vadd.f32 %v841, %v1225
        %v1227 = vpop.f32.mrf.mxu0
        %1228 = vmatprep.mubr.f32.mxu0 0.0
        %1229 = vmatmul.mubr.f32.gmra.mxu0 %v491
        %v1230 = vpop.f32.mrf.mxu0
        %v1231 = vadd.f32 %v846, %v1230
        %v1232 = vpop.f32.mrf.mxu0
        %1233 = vmatprep.mubr.f32.mxu0 0.0
        %1234 = vmatmul.mubr.f32.gmra.mxu0 %v492
        %v1235 = vpop.f32.mrf.mxu0
        %v1236 = vadd.f32 %v851, %v1235
        %v1237 = vpop.f32.mrf.mxu0
        %1238 = vmatprep.mubr.f32.mxu0 0.0
        %1239 = vmatmul.mubr.f32.gmra.mxu0 %v493
        %v1240 = vpop.f32.mrf.mxu0
        %v1241 = vadd.f32 %v856, %v1240
        %v1242 = vpop.f32.mrf.mxu0
        %1243 = vmatprep.mubr.f32.mxu0 0.0
        %1244 = vmatmul.mubr.f32.gmra.mxu0 %v494
        %v1245 = vpop.f32.mrf.mxu0
        %v1246 = vadd.f32 %v861, %v1245
        %v1247 = vpop.f32.mrf.mxu0
        %1248 = vmatprep.mubr.f32.mxu0 0.0
        %1249 = vmatmul.mubr.f32.gmra.mxu0 %v495
        %v1250 = vpop.f32.mrf.mxu0
        %v1251 = vadd.f32 %v866, %v1250
        %v1252 = vpop.f32.mrf.mxu0
        %1253 = vmatprep.mubr.f32.mxu0 0.0
        %1254 = vmatmul.mubr.f32.gmra.mxu0 %v496
        %v1255 = vpop.f32.mrf.mxu0
        %v1256 = vadd.f32 %v871, %v1255
        %v1257 = vpop.f32.mrf.mxu0
        %1258 = vmatprep.mubr.f32.mxu0 0.0
        %1259 = vmatmul.mubr.f32.gmra.mxu0 %v497
        %v1260 = vpop.f32.mrf.mxu0
        %v1261 = vadd.f32 %v876, %v1260
        %v1262 = vpop.f32.mrf.mxu0
        %1263 = vmatprep.mubr.f32.mxu0 0.0
        %1264 = vmatmul.mubr.f32.gmra.mxu0 %v498
        %v1265 = vpop.f32.mrf.mxu0
        %v1266 = vadd.f32 %v881, %v1265
        %v1267 = vpop.f32.mrf.mxu0
        %1268 = vmatprep.mubr.f32.mxu0 0.0
        %1269 = vmatmul.mubr.f32.gmra.mxu0 %v499
        %v1270 = vpop.f32.mrf.mxu0
        %v1271 = vadd.f32 %v886, %v1270
        %v1272 = vpop.f32.mrf.mxu0
        %1273 = vmatprep.mubr.f32.mxu0 0.0
        %1274 = vmatmul.mubr.f32.gmra.mxu0 %v500
        %v1275 = vpop.f32.mrf.mxu0
        %v1276 = vadd.f32 %v891, %v1275
        %v1277 = vpop.f32.mrf.mxu0
        %1278 = vmatprep.mubr.f32.mxu0 0.0
        %1279 = vmatmul.mubr.f32.gmra.mxu0 %v501
        %v1280 = vpop.f32.mrf.mxu0
        %v1281 = vadd.f32 %v896, %v1280
        %v1282 = vpop.f32.mrf.mxu0
        %1283 = vmatprep.mubr.f32.mxu0 0.0
        %1284 = vmatmul.mubr.f32.gmra.mxu0 %v502
        %v1285 = vpop.f32.mrf.mxu0
        %v1286 = vadd.f32 %v901, %v1285
        %v1287 = vpop.f32.mrf.mxu0
        %1288 = vmatprep.mubr.f32.mxu0 0.0
        %1289 = vmatmul.mubr.f32.gmra.mxu0 %v503
        %v1290 = vpop.f32.mrf.mxu0
        %v1291 = vadd.f32 %v906, %v1290
        %v1292 = vpop.f32.mrf.mxu0
        %1293 = vmatprep.mubr.f32.mxu0 0.0
        %1294 = vmatmul.mubr.f32.gmra.mxu0 %v504
        %v1295 = vpop.f32.mrf.mxu0
        %v1296 = vadd.f32 %v911, %v1295
        %v1297 = vpop.f32.mrf.mxu0
        %1298 = vmatprep.mubr.f32.mxu0 0.0
        %1299 = vmatmul.mubr.f32.gmra.mxu0 %v505
        %v1300 = vpop.f32.mrf.mxu0
        %v1301 = vadd.f32 %v916, %v1300
        %v1302 = vpop.f32.mrf.mxu0
        %1303 = vmatprep.mubr.f32.mxu0 0.0
        %1304 = vmatmul.mubr.f32.gmra.mxu0 %v506
        %v1305 = vpop.f32.mrf.mxu0
        %v1306 = vadd.f32 %v921, %v1305
        %v1307 = vpop.f32.mrf.mxu0
        %1308 = vmatprep.mubr.f32.mxu0 0.0
        %1309 = vmatmul.mubr.f32.gmra.mxu0 %v507
        %v1310 = vpop.f32.mrf.mxu0
        %v1311 = vadd.f32 %v926, %v1310
        %v1312 = vpop.f32.mrf.mxu0
        %1313 = vmatprep.mubr.f32.mxu0 0.0
        %1314 = vmatmul.mubr.f32.gmra.mxu0 %v508
        %v1315 = vpop.f32.mrf.mxu0
        %v1316 = vadd.f32 %v931, %v1315
        %v1317 = vpop.f32.mrf.mxu0
        %1318 = vmatprep.mubr.f32.mxu0 0.0
        %1319 = vmatmul.mubr.f32.gmra.mxu0 %v509
        %v1320 = vpop.f32.mrf.mxu0
        %v1321 = vadd.f32 %v936, %v1320
        %v1322 = vpop.f32.mrf.mxu0
        %1323 = vmatprep.mubr.f32.mxu0 0.0
        %1324 = vmatmul.mubr.f32.gmra.mxu0 %v510
        %v1325 = vpop.f32.mrf.mxu0
        %v1326 = vadd.f32 %v941, %v1325
        %v1327 = vpop.f32.mrf.mxu0
        %1328 = vmatprep.mubr.f32.mxu0 0.0
        %1329 = vmatmul.mubr.f32.gmra.mxu0 %v511
        %v1330 = vpop.f32.mrf.mxu0
        %v1331 = vadd.f32 %v946, %v1330
        %v1332 = vpop.f32.mrf.mxu0
        %1333 = vmatprep.mubr.f32.mxu0 0.0
        %1334 = vmatmul.mubr.f32.gmra.mxu0 %v512
        %v1335 = vpop.f32.mrf.mxu0
        %v1336 = vadd.f32 %v951, %v1335
        %v1337 = vpop.f32.mrf.mxu0
        %1338 = vmatprep.mubr.f32.mxu0 0.0
        %1339 = vmatmul.mubr.f32.gmra.mxu0 %v513
        %v1340 = vpop.f32.mrf.mxu0
        %v1341 = vadd.f32 %v956, %v1340
        %v1342 = vpop.f32.mrf.mxu0
        %1343 = vmatprep.mubr.f32.mxu0 0.0
        %1344 = vmatmul.mubr.f32.gmra.mxu0 %v514
        %v1345 = vpop.f32.mrf.mxu0
        %v1346 = vadd.f32 %v961, %v1345
        %v1347 = vpop.f32.mrf.mxu0
        %1348 = vdwg.mxu0
        %1365 = vrot.lane.b32.xlu0 %v1271, 1
        %v1366 = vpop.permute.xlu0 %1365
        %1367 = vrot.lane.b32.xlu0 %v1276, 1
        %v1368 = vpop.permute.xlu0 %1367
        %1369 = vrot.lane.b32.xlu0 %v1281, 1
        %v1370 = vpop.permute.xlu0 %1369
        %1371 = vrot.lane.b32.xlu0 %v1286, 1
        %v1372 = vpop.permute.xlu0 %1371
        %1373 = vrot.lane.b32.xlu0 %v1291, 1
        %v1374 = vpop.permute.xlu0 %1373
        %1375 = vrot.lane.b32.xlu0 %v1296, 1
        %v1376 = vpop.permute.xlu0 %1375
        %1377 = vrot.lane.b32.xlu0 %v1301, 1
        %v1378 = vpop.permute.xlu0 %1377
        %1379 = vrot.lane.b32.xlu0 %v1306, 1
        %v1380 = vpop.permute.xlu0 %1379
        %1381 = vrot.lane.b32.xlu0 %v1311, 1
        %v1382 = vpop.permute.xlu0 %1381
        %1383 = vrot.lane.b32.xlu0 %v1316, 1
        %v1384 = vpop.permute.xlu0 %1383
        %1385 = vrot.lane.b32.xlu0 %v1321, 1
        %v1386 = vpop.permute.xlu0 %1385
        %1387 = vrot.lane.b32.xlu0 %v1326, 1
        %v1388 = vpop.permute.xlu0 %1387
        %1389 = vrot.lane.b32.xlu0 %v1331, 1
        %v1390 = vpop.permute.xlu0 %1389
        %1391 = vrot.lane.b32.xlu0 %v1336, 1
        %v1392 = vpop.permute.xlu0 %1391
        %1393 = vrot.lane.b32.xlu0 %v1341, 1
        %v1394 = vpop.permute.xlu0 %1393
        %1395 = vrot.lane.b32.xlu0 %v1346, 1
        %v1396 = vpop.permute.xlu0 %1395
        %vm1413 = vcmask 7168
        %v1414 = vsel %vm1413, 0.0, %v1366
        %v1415 = vsel %vm1413, 0.0, %v1368
        %v1416 = vsel %vm1413, 0.0, %v1370
        %v1417 = vsel %vm1413, 0.0, %v1372
        %v1418 = vsel %vm1413, 0.0, %v1374
        %v1419 = vsel %vm1413, 0.0, %v1376
        %v1420 = vsel %vm1413, 0.0, %v1378
        %v1421 = vsel %vm1413, 0.0, %v1380
        %v1422 = vsel %vm1413, 0.0, %v1382
        %v1423 = vsel %vm1413, 0.0, %v1384
        %v1424 = vsel %vm1413, 0.0, %v1386
        %v1425 = vsel %vm1413, 0.0, %v1388
        %v1426 = vsel %vm1413, 0.0, %v1390
        %v1427 = vsel %vm1413, 0.0, %v1392
        %v1428 = vsel %vm1413, 0.0, %v1394
        %v1429 = vsel %vm1413, 0.0, %v1396
        %v1430 = vadd.f32 %v1111, %v1414
        %v1431 = vadd.f32 %v1116, %v1415
        %v1432 = vadd.f32 %v1121, %v1416
        %v1433 = vadd.f32 %v1126, %v1417
        %v1434 = vadd.f32 %v1131, %v1418
        %v1435 = vadd.f32 %v1136, %v1419
        %v1436 = vadd.f32 %v1141, %v1420
        %v1437 = vadd.f32 %v1146, %v1421
        %v1438 = vadd.f32 %v1151, %v1422
        %v1439 = vadd.f32 %v1156, %v1423
        %v1440 = vadd.f32 %v1161, %v1424
        %v1441 = vadd.f32 %v1166, %v1425
        %v1442 = vadd.f32 %v1171, %v1426
        %v1443 = vadd.f32 %v1176, %v1427
        %v1444 = vadd.f32 %v1181, %v1428
        %v1445 = vadd.f32 %v1186, %v1429
        %1447 = vset.pattern.permute.xlu0 0
        %1448 = vperm.xlu0 %1447, %v426
        %v1449 = vpop.permute.xlu0 %1448
        %1452 = vset.pattern.permute.xlu0 0
        %1453 = vperm.xlu0 %1452, %v427
        %v1454 = vpop.permute.xlu0 %1453
        %1457 = vset.pattern.permute.xlu0 0
        %1458 = vperm.xlu0 %1457, %v428
        %v1459 = vpop.permute.xlu0 %1458
        %1462 = vset.pattern.permute.xlu0 0
        %1463 = vperm.xlu0 %1462, %v429
        %v1464 = vpop.permute.xlu0 %1463
        %1467 = vset.pattern.permute.xlu0 0
        %1468 = vperm.xlu0 %1467, %v430
        %v1469 = vpop.permute.xlu0 %1468
        %1472 = vset.pattern.permute.xlu0 0
        %1473 = vperm.xlu0 %1472, %v431
        %v1474 = vpop.permute.xlu0 %1473
        %1477 = vset.pattern.permute.xlu0 0
        %1478 = vperm.xlu0 %1477, %v432
        %v1479 = vpop.permute.xlu0 %1478
        %1482 = vset.pattern.permute.xlu0 0
        %1483 = vperm.xlu0 %1482, %v433
        %v1484 = vpop.permute.xlu0 %1483
        %1487 = vset.pattern.permute.xlu0 0
        %1488 = vperm.xlu0 %1487, %v434
        %v1489 = vpop.permute.xlu0 %1488
        %1492 = vset.pattern.permute.xlu0 0
        %1493 = vperm.xlu0 %1492, %v435
        %v1494 = vpop.permute.xlu0 %1493
        %1497 = vset.pattern.permute.xlu0 0
        %1498 = vperm.xlu0 %1497, %v436
        %v1499 = vpop.permute.xlu0 %1498
        %1502 = vset.pattern.permute.xlu0 0
        %1503 = vperm.xlu0 %1502, %v437
        %v1504 = vpop.permute.xlu0 %1503
        %1507 = vset.pattern.permute.xlu0 0
        %1508 = vperm.xlu0 %1507, %v438
        %v1509 = vpop.permute.xlu0 %1508
        %1512 = vset.pattern.permute.xlu0 0
        %1513 = vperm.xlu0 %1512, %v439
        %v1514 = vpop.permute.xlu0 %1513
        %1517 = vset.pattern.permute.xlu0 0
        %1518 = vperm.xlu0 %1517, %v440
        %v1519 = vpop.permute.xlu0 %1518
        %1522 = vset.pattern.permute.xlu0 0
        %1523 = vperm.xlu0 %1522, %v441
        %v1524 = vpop.permute.xlu0 %1523
        %v1526 = vadd.f32 %v1430, %v1449
        %v1527 = vadd.f32 %v1431, %v1454
        %v1528 = vadd.f32 %v1432, %v1459
        %v1529 = vadd.f32 %v1433, %v1464
        %v1530 = vadd.f32 %v1434, %v1469
        %v1531 = vadd.f32 %v1435, %v1474
        %v1532 = vadd.f32 %v1436, %v1479
        %v1533 = vadd.f32 %v1437, %v1484
        %v1534 = vadd.f32 %v1438, %v1489
        %v1535 = vadd.f32 %v1439, %v1494
        %v1536 = vadd.f32 %v1440, %v1499
        %v1537 = vadd.f32 %v1441, %v1504
        %v1538 = vadd.f32 %v1442, %v1509
        %v1539 = vadd.f32 %v1443, %v1514
        %v1540 = vadd.f32 %v1444, %v1519
        %v1541 = vadd.f32 %v1445, %v1524
        %v1542 = vmax.f32 %v1526, 0.0
        %v1543 = vmax.f32 %v1527, 0.0
        %v1544 = vmax.f32 %v1528, 0.0
        %v1545 = vmax.f32 %v1529, 0.0
        %v1546 = vmax.f32 %v1530, 0.0
        %v1547 = vmax.f32 %v1531, 0.0
        %v1548 = vmax.f32 %v1532, 0.0
        %v1549 = vmax.f32 %v1533, 0.0
        %v1550 = vmax.f32 %v1534, 0.0
        %v1551 = vmax.f32 %v1535, 0.0
        %v1552 = vmax.f32 %v1536, 0.0
        %v1553 = vmax.f32 %v1537, 0.0
        %v1554 = vmax.f32 %v1538, 0.0
        %v1555 = vmax.f32 %v1539, 0.0
        %v1556 = vmax.f32 %v1540, 0.0
        %v1557 = vmax.f32 %v1541, 0.0
        %1574 = vrot.lane.b32.xlu0 %v1031, 127
        %v1575 = vpop.permute.xlu0 %1574
        %1576 = vrot.lane.b32.xlu0 %v1036, 127
        %v1577 = vpop.permute.xlu0 %1576
        %1578 = vrot.lane.b32.xlu0 %v1041, 127
        %v1579 = vpop.permute.xlu0 %1578
        %1580 = vrot.lane.b32.xlu0 %v1046, 127
        %v1581 = vpop.permute.xlu0 %1580
        %1582 = vrot.lane.b32.xlu0 %v1051, 127
        %v1583 = vpop.permute.xlu0 %1582
        %1584 = vrot.lane.b32.xlu0 %v1056, 127
        %v1585 = vpop.permute.xlu0 %1584
        %1586 = vrot.lane.b32.xlu0 %v1061, 127
        %v1587 = vpop.permute.xlu0 %1586
        %1588 = vrot.lane.b32.xlu0 %v1066, 127
        %v1589 = vpop.permute.xlu0 %1588
        %1590 = vrot.lane.b32.xlu0 %v1071, 127
        %v1591 = vpop.permute.xlu0 %1590
        %1592 = vrot.lane.b32.xlu0 %v1076, 127
        %v1593 = vpop.permute.xlu0 %1592
        %1594 = vrot.lane.b32.xlu0 %v1081, 127
        %v1595 = vpop.permute.xlu0 %1594
        %1596 = vrot.lane.b32.xlu0 %v1086, 127
        %v1597 = vpop.permute.xlu0 %1596
        %1598 = vrot.lane.b32.xlu0 %v1091, 127
        %v1599 = vpop.permute.xlu0 %1598
        %1600 = vrot.lane.b32.xlu0 %v1096, 127
        %v1601 = vpop.permute.xlu0 %1600
        %1602 = vrot.lane.b32.xlu0 %v1101, 127
        %v1603 = vpop.permute.xlu0 %1602
        %1604 = vrot.lane.b32.xlu0 %v1106, 127
        %v1605 = vpop.permute.xlu0 %1604
        %vm1622 = vcmask 56320
        %v1623 = vsel %vm1622, %v1575, 0.0
        %v1624 = vsel %vm1622, %v1577, 0.0
        %v1625 = vsel %vm1622, %v1579, 0.0
        %v1626 = vsel %vm1622, %v1581, 0.0
        %v1627 = vsel %vm1622, %v1583, 0.0
        %v1628 = vsel %vm1622, %v1585, 0.0
        %v1629 = vsel %vm1622, %v1587, 0.0
        %v1630 = vsel %vm1622, %v1589, 0.0
        %v1631 = vsel %vm1622, %v1591, 0.0
        %v1632 = vsel %vm1622, %v1593, 0.0
        %v1633 = vsel %vm1622, %v1595, 0.0
        %v1634 = vsel %vm1622, %v1597, 0.0
        %v1635 = vsel %vm1622, %v1599, 0.0
        %v1636 = vsel %vm1622, %v1601, 0.0
        %v1637 = vsel %vm1622, %v1603, 0.0
        %v1638 = vsel %vm1622, %v1605, 0.0
        %v1639 = vadd.f32 %v1623, %v1191
        %v1640 = vadd.f32 %v1624, %v1196
        %v1641 = vadd.f32 %v1625, %v1201
        %v1642 = vadd.f32 %v1626, %v1206
        %v1643 = vadd.f32 %v1627, %v1211
        %v1644 = vadd.f32 %v1628, %v1216
        %v1645 = vadd.f32 %v1629, %v1221
        %v1646 = vadd.f32 %v1630, %v1226
        %v1647 = vadd.f32 %v1631, %v1231
        %v1648 = vadd.f32 %v1632, %v1236
        %v1649 = vadd.f32 %v1633, %v1241
        %v1650 = vadd.f32 %v1634, %v1246
        %v1651 = vadd.f32 %v1635, %v1251
        %v1652 = vadd.f32 %v1636, %v1256
        %v1653 = vadd.f32 %v1637, %v1261
        %v1654 = vadd.f32 %v1638, %v1266
        %v1655 = vadd.f32 %v1639, %v1449
        %v1656 = vadd.f32 %v1640, %v1454
        %v1657 = vadd.f32 %v1641, %v1459
        %v1658 = vadd.f32 %v1642, %v1464
        %v1659 = vadd.f32 %v1643, %v1469
        %v1660 = vadd.f32 %v1644, %v1474
        %v1661 = vadd.f32 %v1645, %v1479
        %v1662 = vadd.f32 %v1646, %v1484
        %v1663 = vadd.f32 %v1647, %v1489
        %v1664 = vadd.f32 %v1648, %v1494
        %v1665 = vadd.f32 %v1649, %v1499
        %v1666 = vadd.f32 %v1650, %v1504
        %v1667 = vadd.f32 %v1651, %v1509
        %v1668 = vadd.f32 %v1652, %v1514
        %v1669 = vadd.f32 %v1653, %v1519
        %v1670 = vadd.f32 %v1654, %v1524
        %v1671 = vmax.f32 %v1655, 0.0
        %v1672 = vmax.f32 %v1656, 0.0
        %v1673 = vmax.f32 %v1657, 0.0
        %v1674 = vmax.f32 %v1658, 0.0
        %v1675 = vmax.f32 %v1659, 0.0
        %v1676 = vmax.f32 %v1660, 0.0
        %v1677 = vmax.f32 %v1661, 0.0
        %v1678 = vmax.f32 %v1662, 0.0
        %v1679 = vmax.f32 %v1663, 0.0
        %v1680 = vmax.f32 %v1664, 0.0
        %v1681 = vmax.f32 %v1665, 0.0
        %v1682 = vmax.f32 %v1666, 0.0
        %v1683 = vmax.f32 %v1667, 0.0
        %v1684 = vmax.f32 %v1668, 0.0
        %v1685 = vmax.f32 %v1669, 0.0
        %v1686 = vmax.f32 %v1670, 0.0
        %v1687 = vld [vmem:[%s5] sm:$0xff]
        %v1688 = vld [vmem:[%s5 + $0x8] sm:$0xff]
        %v1689 = vld [vmem:[%s5 + $0x10] sm:$0xff]
        %v1690 = vld [vmem:[%s5 + $0x18] sm:$0xff]
        %v1691 = vld [vmem:[%s5 + $0x20] sm:$0xff]
        %v1692 = vld [vmem:[%s5 + $0x28] sm:$0xff]
        %v1693 = vld [vmem:[%s5 + $0x30] sm:$0xff]
        %v1694 = vld [vmem:[%s5 + $0x38] sm:$0xff]
        %v1695 = vld [vmem:[%s5 + $0x40] sm:$0xff]
        %v1696 = vld [vmem:[%s5 + $0x48] sm:$0xff]
        %v1697 = vld [vmem:[%s5 + $0x50] sm:$0xff]
        %v1698 = vld [vmem:[%s5 + $0x58] sm:$0xff]
        %v1699 = vld [vmem:[%s5 + $0x60] sm:$0xff]
        %v1700 = vld [vmem:[%s5 + $0x68] sm:$0xff]
        %v1701 = vld [vmem:[%s5 + $0x70] sm:$0xff]
        %v1702 = vld [vmem:[%s5 + $0x78] sm:$0xff]
        %v1703 = vld [vmem:[%s5 + $0x80] sm:$0xff]
        %v1704 = vld [vmem:[%s5 + $0x88] sm:$0xff]
        %v1705 = vld [vmem:[%s5 + $0x90] sm:$0xff]
        %v1706 = vld [vmem:[%s5 + $0x98] sm:$0xff]
        %v1707 = vld [vmem:[%s5 + $0xa0] sm:$0xff]
        %v1708 = vld [vmem:[%s5 + $0xa8] sm:$0xff]
        %v1709 = vld [vmem:[%s5 + $0xb0] sm:$0xff]
        %v1710 = vld [vmem:[%s5 + $0xb8] sm:$0xff]
        %v1711 = vld [vmem:[%s5 + $0xc0] sm:$0xff]
        %v1712 = vld [vmem:[%s5 + $0xc8] sm:$0xff]
        %v1713 = vld [vmem:[%s5 + $0xd0] sm:$0xff]
        %v1714 = vld [vmem:[%s5 + $0xd8] sm:$0xff]
        %v1715 = vld [vmem:[%s5 + $0xe0] sm:$0xff]
        %v1716 = vld [vmem:[%s5 + $0xe8] sm:$0xff]
        %v1717 = vld [vmem:[%s5 + $0xf0] sm:$0xff]
        %v1718 = vld [vmem:[%s5 + $0xf8] sm:$0xff]
        %1719 = vmatprep.subr.mxu0 0.0
        %1720 = vmatpush1.msra.mxu0 %v1557
        %1721 = vmatprep.subr.mxu0 0.0
        %1722 = vmatpush1.msra.mxu0 %v1556
        %1723 = vmatprep.subr.mxu0 0.0
        %1724 = vmatpush1.msra.mxu0 %v1555
        %1725 = vmatprep.subr.mxu0 0.0
        %1726 = vmatpush1.msra.mxu0 %v1554
        %1727 = vmatprep.subr.mxu0 0.0
        %1728 = vmatpush1.msra.mxu0 %v1553
        %1729 = vmatprep.subr.mxu0 0.0
        %1730 = vmatpush1.msra.mxu0 %v1552
        %1731 = vmatprep.subr.mxu0 0.0
        %1732 = vmatpush1.msra.mxu0 %v1551
        %1733 = vmatprep.subr.mxu0 0.0
        %1734 = vmatpush1.msra.mxu0 %v1550
        %1735 = vmatprep.subr.mxu0 0.0
        %1736 = vmatpush1.msra.mxu0 %v1549
        %1737 = vmatprep.subr.mxu0 0.0
        %1738 = vmatpush1.msra.mxu0 %v1548
        %1739 = vmatprep.subr.mxu0 0.0
        %1740 = vmatpush1.msra.mxu0 %v1547
        %1741 = vmatprep.subr.mxu0 0.0
        %1742 = vmatpush1.msra.mxu0 %v1546
        %1743 = vmatprep.subr.mxu0 0.0
        %1744 = vmatpush1.msra.mxu0 %v1545
        %1745 = vmatprep.subr.mxu0 0.0
        %1746 = vmatpush1.msra.mxu0 %v1544
        %1747 = vmatprep.subr.mxu0 0.0
        %1748 = vmatpush1.msra.mxu0 %v1543
        %1749 = vmatprep.subr.mxu0 0.0
        %1750 = vmatpush1.msra.mxu0 %v1542
        %1751 = vmatprep.subr.mxu0 0.0
        %1752 = vmatpush2.msra.mxu0 0.0
        %1753 = vmatprep.subr.mxu0 0.0
        %1754 = vmatpush2.msra.mxu0 0.0
        %1755 = vmatprep.subr.mxu0 0.0
        %1756 = vmatpush2.msra.mxu0 0.0
        %1757 = vmatprep.subr.mxu0 0.0
        %1758 = vmatpush2.msra.mxu0 0.0
        %1759 = vmatprep.subr.mxu0 0.0
        %1760 = vmatpush2.msra.mxu0 0.0
        %1761 = vmatprep.subr.mxu0 0.0
        %1762 = vmatpush2.msra.mxu0 0.0
        %1763 = vmatprep.subr.mxu0 0.0
        %1764 = vmatpush2.msra.mxu0 0.0
        %1765 = vmatprep.subr.mxu0 0.0
        %1766 = vmatpush2.msra.mxu0 0.0
        %1767 = vmatprep.subr.mxu0 0.0
        %1768 = vmatpush2.msra.mxu0 0.0
        %1769 = vmatprep.subr.mxu0 0.0
        %1770 = vmatpush2.msra.mxu0 0.0
        %1771 = vmatprep.subr.mxu0 0.0
        %1772 = vmatpush2.msra.mxu0 0.0
        %1773 = vmatprep.subr.mxu0 0.0
        %1774 = vmatpush2.msra.mxu0 0.0
        %1775 = vmatprep.subr.mxu0 0.0
        %1776 = vmatpush2.msra.mxu0 0.0
        %1777 = vmatprep.subr.mxu0 0.0
        %1778 = vmatpush2.msra.mxu0 0.0
        %1779 = vmatprep.subr.mxu0 0.0
        %1780 = vmatpush2.msra.mxu0 0.0
        %1781 = vmatprep.subr.mxu0 0.0
        %1782 = vmatpush2.msra.mxu0 0.0
        %1783 = vmatprep.mubr.f32.mxu0 0.0
        %1784 = vmatmul.mubr.f32.gmra.mxu0 %v1687
        %v1785 = vpop.f32.mrf.mxu0
        %v1786 = vadd.f32 0.0, %v1785
        %v1787 = vpop.f32.mrf.mxu0
        %1788 = vmatprep.mubr.f32.mxu0 0.0
        %1789 = vmatmul.mubr.f32.gmra.mxu0 %v1688
        %v1790 = vpop.f32.mrf.mxu0
        %v1791 = vadd.f32 0.0, %v1790
        %v1792 = vpop.f32.mrf.mxu0
        %1793 = vmatprep.mubr.f32.mxu0 0.0
        %1794 = vmatmul.mubr.f32.gmra.mxu0 %v1689
        %v1795 = vpop.f32.mrf.mxu0
        %v1796 = vadd.f32 0.0, %v1795
        %v1797 = vpop.f32.mrf.mxu0
        %1798 = vmatprep.mubr.f32.mxu0 0.0
        %1799 = vmatmul.mubr.f32.gmra.mxu0 %v1690
        %v1800 = vpop.f32.mrf.mxu0
        %v1801 = vadd.f32 0.0, %v1800
        %v1802 = vpop.f32.mrf.mxu0
        %1803 = vmatprep.mubr.f32.mxu0 0.0
        %1804 = vmatmul.mubr.f32.gmra.mxu0 %v1691
        %v1805 = vpop.f32.mrf.mxu0
        %v1806 = vadd.f32 0.0, %v1805
        %v1807 = vpop.f32.mrf.mxu0
        %1808 = vmatprep.mubr.f32.mxu0 0.0
        %1809 = vmatmul.mubr.f32.gmra.mxu0 %v1692
        %v1810 = vpop.f32.mrf.mxu0
        %v1811 = vadd.f32 0.0, %v1810
        %v1812 = vpop.f32.mrf.mxu0
        %1813 = vmatprep.mubr.f32.mxu0 0.0
        %1814 = vmatmul.mubr.f32.gmra.mxu0 %v1693
        %v1815 = vpop.f32.mrf.mxu0
        %v1816 = vadd.f32 0.0, %v1815
        %v1817 = vpop.f32.mrf.mxu0
        %1818 = vmatprep.mubr.f32.mxu0 0.0
        %1819 = vmatmul.mubr.f32.gmra.mxu0 %v1694
        %v1820 = vpop.f32.mrf.mxu0
        %v1821 = vadd.f32 0.0, %v1820
        %v1822 = vpop.f32.mrf.mxu0
        %1823 = vmatprep.mubr.f32.mxu0 0.0
        %1824 = vmatmul.mubr.f32.gmra.mxu0 %v1695
        %v1825 = vpop.f32.mrf.mxu0
        %v1826 = vadd.f32 0.0, %v1825
        %v1827 = vpop.f32.mrf.mxu0
        %1828 = vmatprep.mubr.f32.mxu0 0.0
        %1829 = vmatmul.mubr.f32.gmra.mxu0 %v1696
        %v1830 = vpop.f32.mrf.mxu0
        %v1831 = vadd.f32 0.0, %v1830
        %v1832 = vpop.f32.mrf.mxu0
        %1833 = vmatprep.mubr.f32.mxu0 0.0
        %1834 = vmatmul.mubr.f32.gmra.mxu0 %v1697
        %v1835 = vpop.f32.mrf.mxu0
        %v1836 = vadd.f32 0.0, %v1835
        %v1837 = vpop.f32.mrf.mxu0
        %1838 = vmatprep.mubr.f32.mxu0 0.0
        %1839 = vmatmul.mubr.f32.gmra.mxu0 %v1698
        %v1840 = vpop.f32.mrf.mxu0
        %v1841 = vadd.f32 0.0, %v1840
        %v1842 = vpop.f32.mrf.mxu0
        %1843 = vmatprep.mubr.f32.mxu0 0.0
        %1844 = vmatmul.mubr.f32.gmra.mxu0 %v1699
        %v1845 = vpop.f32.mrf.mxu0
        %v1846 = vadd.f32 0.0, %v1845
        %v1847 = vpop.f32.mrf.mxu0
        %1848 = vmatprep.mubr.f32.mxu0 0.0
        %1849 = vmatmul.mubr.f32.gmra.mxu0 %v1700
        %v1850 = vpop.f32.mrf.mxu0
        %v1851 = vadd.f32 0.0, %v1850
        %v1852 = vpop.f32.mrf.mxu0
        %1853 = vmatprep.mubr.f32.mxu0 0.0
        %1854 = vmatmul.mubr.f32.gmra.mxu0 %v1701
        %v1855 = vpop.f32.mrf.mxu0
        %v1856 = vadd.f32 0.0, %v1855
        %v1857 = vpop.f32.mrf.mxu0
        %1858 = vmatprep.mubr.f32.mxu0 0.0
        %1859 = vmatmul.mubr.f32.gmra.mxu0 %v1702
        %v1860 = vpop.f32.mrf.mxu0
        %v1861 = vadd.f32 0.0, %v1860
        %v1862 = vpop.f32.mrf.mxu0
        %1863 = vmatprep.mubr.f32.mxu0 0.0
        %1864 = vmatmul.mubr.f32.gmra.mxu0 %v1703
        %v1865 = vpop.f32.mrf.mxu0
        %v1866 = vadd.f32 0.0, %v1865
        %v1867 = vpop.f32.mrf.mxu0
        %1868 = vmatprep.mubr.f32.mxu0 0.0
        %1869 = vmatmul.mubr.f32.gmra.mxu0 %v1704
        %v1870 = vpop.f32.mrf.mxu0
        %v1871 = vadd.f32 0.0, %v1870
        %v1872 = vpop.f32.mrf.mxu0
        %1873 = vmatprep.mubr.f32.mxu0 0.0
        %1874 = vmatmul.mubr.f32.gmra.mxu0 %v1705
        %v1875 = vpop.f32.mrf.mxu0
        %v1876 = vadd.f32 0.0, %v1875
        %v1877 = vpop.f32.mrf.mxu0
        %1878 = vmatprep.mubr.f32.mxu0 0.0
        %1879 = vmatmul.mubr.f32.gmra.mxu0 %v1706
        %v1880 = vpop.f32.mrf.mxu0
        %v1881 = vadd.f32 0.0, %v1880
        %v1882 = vpop.f32.mrf.mxu0
        %1883 = vmatprep.mubr.f32.mxu0 0.0
        %1884 = vmatmul.mubr.f32.gmra.mxu0 %v1707
        %v1885 = vpop.f32.mrf.mxu0
        %v1886 = vadd.f32 0.0, %v1885
        %v1887 = vpop.f32.mrf.mxu0
        %1888 = vmatprep.mubr.f32.mxu0 0.0
        %1889 = vmatmul.mubr.f32.gmra.mxu0 %v1708
        %v1890 = vpop.f32.mrf.mxu0
        %v1891 = vadd.f32 0.0, %v1890
        %v1892 = vpop.f32.mrf.mxu0
        %1893 = vmatprep.mubr.f32.mxu0 0.0
        %1894 = vmatmul.mubr.f32.gmra.mxu0 %v1709
        %v1895 = vpop.f32.mrf.mxu0
        %v1896 = vadd.f32 0.0, %v1895
        %v1897 = vpop.f32.mrf.mxu0
        %1898 = vmatprep.mubr.f32.mxu0 0.0
        %1899 = vmatmul.mubr.f32.gmra.mxu0 %v1710
        %v1900 = vpop.f32.mrf.mxu0
        %v1901 = vadd.f32 0.0, %v1900
        %v1902 = vpop.f32.mrf.mxu0
        %1903 = vmatprep.mubr.f32.mxu0 0.0
        %1904 = vmatmul.mubr.f32.gmra.mxu0 %v1711
        %v1905 = vpop.f32.mrf.mxu0
        %v1906 = vadd.f32 0.0, %v1905
        %v1907 = vpop.f32.mrf.mxu0
        %1908 = vmatprep.mubr.f32.mxu0 0.0
        %1909 = vmatmul.mubr.f32.gmra.mxu0 %v1712
        %v1910 = vpop.f32.mrf.mxu0
        %v1911 = vadd.f32 0.0, %v1910
        %v1912 = vpop.f32.mrf.mxu0
        %1913 = vmatprep.mubr.f32.mxu0 0.0
        %1914 = vmatmul.mubr.f32.gmra.mxu0 %v1713
        %v1915 = vpop.f32.mrf.mxu0
        %v1916 = vadd.f32 0.0, %v1915
        %v1917 = vpop.f32.mrf.mxu0
        %1918 = vmatprep.mubr.f32.mxu0 0.0
        %1919 = vmatmul.mubr.f32.gmra.mxu0 %v1714
        %v1920 = vpop.f32.mrf.mxu0
        %v1921 = vadd.f32 0.0, %v1920
        %v1922 = vpop.f32.mrf.mxu0
        %1923 = vmatprep.mubr.f32.mxu0 0.0
        %1924 = vmatmul.mubr.f32.gmra.mxu0 %v1715
        %v1925 = vpop.f32.mrf.mxu0
        %v1926 = vadd.f32 0.0, %v1925
        %v1927 = vpop.f32.mrf.mxu0
        %1928 = vmatprep.mubr.f32.mxu0 0.0
        %1929 = vmatmul.mubr.f32.gmra.mxu0 %v1716
        %v1930 = vpop.f32.mrf.mxu0
        %v1931 = vadd.f32 0.0, %v1930
        %v1932 = vpop.f32.mrf.mxu0
        %1933 = vmatprep.mubr.f32.mxu0 0.0
        %1934 = vmatmul.mubr.f32.gmra.mxu0 %v1717
        %v1935 = vpop.f32.mrf.mxu0
        %v1936 = vadd.f32 0.0, %v1935
        %v1937 = vpop.f32.mrf.mxu0
        %1938 = vmatprep.mubr.f32.mxu0 0.0
        %1939 = vmatmul.mubr.f32.gmra.mxu0 %v1718
        %v1940 = vpop.f32.mrf.mxu0
        %v1941 = vadd.f32 0.0, %v1940
        %v1942 = vpop.f32.mrf.mxu0
        %1943 = vdwg.mxu0
        %1944 = vmatprep.subr.mxu0 0.0
        %1945 = vmatpush1.msra.mxu0 %v1686
        %1946 = vmatprep.subr.mxu0 0.0
        %1947 = vmatpush1.msra.mxu0 %v1685
        %1948 = vmatprep.subr.mxu0 0.0
        %1949 = vmatpush1.msra.mxu0 %v1684
        %1950 = vmatprep.subr.mxu0 0.0
        %1951 = vmatpush1.msra.mxu0 %v1683
        %1952 = vmatprep.subr.mxu0 0.0
        %1953 = vmatpush1.msra.mxu0 %v1682
        %1954 = vmatprep.subr.mxu0 0.0
        %1955 = vmatpush1.msra.mxu0 %v1681
        %1956 = vmatprep.subr.mxu0 0.0
        %1957 = vmatpush1.msra.mxu0 %v1680
        %1958 = vmatprep.subr.mxu0 0.0
        %1959 = vmatpush1.msra.mxu0 %v1679
        %1960 = vmatprep.subr.mxu0 0.0
        %1961 = vmatpush1.msra.mxu0 %v1678
        %1962 = vmatprep.subr.mxu0 0.0
        %1963 = vmatpush1.msra.mxu0 %v1677
        %1964 = vmatprep.subr.mxu0 0.0
        %1965 = vmatpush1.msra.mxu0 %v1676
        %1966 = vmatprep.subr.mxu0 0.0
        %1967 = vmatpush1.msra.mxu0 %v1675
        %1968 = vmatprep.subr.mxu0 0.0
        %1969 = vmatpush1.msra.mxu0 %v1674
        %1970 = vmatprep.subr.mxu0 0.0
        %1971 = vmatpush1.msra.mxu0 %v1673
        %1972 = vmatprep.subr.mxu0 0.0
        %1973 = vmatpush1.msra.mxu0 %v1672
        %1974 = vmatprep.subr.mxu0 0.0
        %1975 = vmatpush1.msra.mxu0 %v1671
        %1976 = vmatprep.subr.mxu0 0.0
        %1977 = vmatpush2.msra.mxu0 0.0
        %1978 = vmatprep.subr.mxu0 0.0
        %1979 = vmatpush2.msra.mxu0 0.0
        %1980 = vmatprep.subr.mxu0 0.0
        %1981 = vmatpush2.msra.mxu0 0.0
        %1982 = vmatprep.subr.mxu0 0.0
        %1983 = vmatpush2.msra.mxu0 0.0
        %1984 = vmatprep.subr.mxu0 0.0
        %1985 = vmatpush2.msra.mxu0 0.0
        %1986 = vmatprep.subr.mxu0 0.0
        %1987 = vmatpush2.msra.mxu0 0.0
        %1988 = vmatprep.subr.mxu0 0.0
        %1989 = vmatpush2.msra.mxu0 0.0
        %1990 = vmatprep.subr.mxu0 0.0
        %1991 = vmatpush2.msra.mxu0 0.0
        %1992 = vmatprep.subr.mxu0 0.0
        %1993 = vmatpush2.msra.mxu0 0.0
        %1994 = vmatprep.subr.mxu0 0.0
        %1995 = vmatpush2.msra.mxu0 0.0
        %1996 = vmatprep.subr.mxu0 0.0
        %1997 = vmatpush2.msra.mxu0 0.0
        %1998 = vmatprep.subr.mxu0 0.0
        %1999 = vmatpush2.msra.mxu0 0.0
        %2000 = vmatprep.subr.mxu0 0.0
        %2001 = vmatpush2.msra.mxu0 0.0
        %2002 = vmatprep.subr.mxu0 0.0
        %2003 = vmatpush2.msra.mxu0 0.0
        %2004 = vmatprep.subr.mxu0 0.0
        %2005 = vmatpush2.msra.mxu0 0.0
        %2006 = vmatprep.subr.mxu0 0.0
        %2007 = vmatpush2.msra.mxu0 0.0
        %2008 = vmatprep.mubr.f32.mxu0 0.0
        %2009 = vmatmul.mubr.f32.gmra.mxu0 %v1687
        %v2010 = vpop.f32.mrf.mxu0
        %v2011 = vadd.f32 0.0, %v2010
        %v2012 = vpop.f32.mrf.mxu0
        %2013 = vmatprep.mubr.f32.mxu0 0.0
        %2014 = vmatmul.mubr.f32.gmra.mxu0 %v1688
        %v2015 = vpop.f32.mrf.mxu0
        %v2016 = vadd.f32 0.0, %v2015
        %v2017 = vpop.f32.mrf.mxu0
        %2018 = vmatprep.mubr.f32.mxu0 0.0
        %2019 = vmatmul.mubr.f32.gmra.mxu0 %v1689
        %v2020 = vpop.f32.mrf.mxu0
        %v2021 = vadd.f32 0.0, %v2020
        %v2022 = vpop.f32.mrf.mxu0
        %2023 = vmatprep.mubr.f32.mxu0 0.0
        %2024 = vmatmul.mubr.f32.gmra.mxu0 %v1690
        %v2025 = vpop.f32.mrf.mxu0
        %v2026 = vadd.f32 0.0, %v2025
        %v2027 = vpop.f32.mrf.mxu0
        %2028 = vmatprep.mubr.f32.mxu0 0.0
        %2029 = vmatmul.mubr.f32.gmra.mxu0 %v1691
        %v2030 = vpop.f32.mrf.mxu0
        %v2031 = vadd.f32 0.0, %v2030
        %v2032 = vpop.f32.mrf.mxu0
        %2033 = vmatprep.mubr.f32.mxu0 0.0
        %2034 = vmatmul.mubr.f32.gmra.mxu0 %v1692
        %v2035 = vpop.f32.mrf.mxu0
        %v2036 = vadd.f32 0.0, %v2035
        %v2037 = vpop.f32.mrf.mxu0
        %2038 = vmatprep.mubr.f32.mxu0 0.0
        %2039 = vmatmul.mubr.f32.gmra.mxu0 %v1693
        %v2040 = vpop.f32.mrf.mxu0
        %v2041 = vadd.f32 0.0, %v2040
        %v2042 = vpop.f32.mrf.mxu0
        %2043 = vmatprep.mubr.f32.mxu0 0.0
        %2044 = vmatmul.mubr.f32.gmra.mxu0 %v1694
        %v2045 = vpop.f32.mrf.mxu0
        %v2046 = vadd.f32 0.0, %v2045
        %v2047 = vpop.f32.mrf.mxu0
        %2048 = vmatprep.mubr.f32.mxu0 0.0
        %2049 = vmatmul.mubr.f32.gmra.mxu0 %v1695
        %v2050 = vpop.f32.mrf.mxu0
        %v2051 = vadd.f32 0.0, %v2050
        %v2052 = vpop.f32.mrf.mxu0
        %2053 = vmatprep.mubr.f32.mxu0 0.0
        %2054 = vmatmul.mubr.f32.gmra.mxu0 %v1696
        %v2055 = vpop.f32.mrf.mxu0
        %v2056 = vadd.f32 0.0, %v2055
        %v2057 = vpop.f32.mrf.mxu0
        %2058 = vmatprep.mubr.f32.mxu0 0.0
        %2059 = vmatmul.mubr.f32.gmra.mxu0 %v1697
        %v2060 = vpop.f32.mrf.mxu0
        %v2061 = vadd.f32 0.0, %v2060
        %v2062 = vpop.f32.mrf.mxu0
        %2063 = vmatprep.mubr.f32.mxu0 0.0
        %2064 = vmatmul.mubr.f32.gmra.mxu0 %v1698
        %v2065 = vpop.f32.mrf.mxu0
        %v2066 = vadd.f32 0.0, %v2065
        %v2067 = vpop.f32.mrf.mxu0
        %2068 = vmatprep.mubr.f32.mxu0 0.0
        %2069 = vmatmul.mubr.f32.gmra.mxu0 %v1699
        %v2070 = vpop.f32.mrf.mxu0
        %v2071 = vadd.f32 0.0, %v2070
        %v2072 = vpop.f32.mrf.mxu0
        %2073 = vmatprep.mubr.f32.mxu0 0.0
        %2074 = vmatmul.mubr.f32.gmra.mxu0 %v1700
        %v2075 = vpop.f32.mrf.mxu0
        %v2076 = vadd.f32 0.0, %v2075
        %v2077 = vpop.f32.mrf.mxu0
        %2078 = vmatprep.mubr.f32.mxu0 0.0
        %2079 = vmatmul.mubr.f32.gmra.mxu0 %v1701
        %v2080 = vpop.f32.mrf.mxu0
        %v2081 = vadd.f32 0.0, %v2080
        %v2082 = vpop.f32.mrf.mxu0
        %2083 = vmatprep.mubr.f32.mxu0 0.0
        %2084 = vmatmul.mubr.f32.gmra.mxu0 %v1702
        %v2085 = vpop.f32.mrf.mxu0
        %v2086 = vadd.f32 0.0, %v2085
        %v2087 = vpop.f32.mrf.mxu0
        %2088 = vmatprep.mubr.f32.mxu0 0.0
        %2089 = vmatmul.mubr.f32.gmra.mxu0 %v1703
        %v2090 = vpop.f32.mrf.mxu0
        %v2091 = vadd.f32 0.0, %v2090
        %v2092 = vpop.f32.mrf.mxu0
        %2093 = vmatprep.mubr.f32.mxu0 0.0
        %2094 = vmatmul.mubr.f32.gmra.mxu0 %v1704
        %v2095 = vpop.f32.mrf.mxu0
        %v2096 = vadd.f32 0.0, %v2095
        %v2097 = vpop.f32.mrf.mxu0
        %2098 = vmatprep.mubr.f32.mxu0 0.0
        %2099 = vmatmul.mubr.f32.gmra.mxu0 %v1705
        %v2100 = vpop.f32.mrf.mxu0
        %v2101 = vadd.f32 0.0, %v2100
        %v2102 = vpop.f32.mrf.mxu0
        %2103 = vmatprep.mubr.f32.mxu0 0.0
        %2104 = vmatmul.mubr.f32.gmra.mxu0 %v1706
        %v2105 = vpop.f32.mrf.mxu0
        %v2106 = vadd.f32 0.0, %v2105
        %v2107 = vpop.f32.mrf.mxu0
        %2108 = vmatprep.mubr.f32.mxu0 0.0
        %2109 = vmatmul.mubr.f32.gmra.mxu0 %v1707
        %v2110 = vpop.f32.mrf.mxu0
        %v2111 = vadd.f32 0.0, %v2110
        %v2112 = vpop.f32.mrf.mxu0
        %2113 = vmatprep.mubr.f32.mxu0 0.0
        %2114 = vmatmul.mubr.f32.gmra.mxu0 %v1708
        %v2115 = vpop.f32.mrf.mxu0
        %v2116 = vadd.f32 0.0, %v2115
        %v2117 = vpop.f32.mrf.mxu0
        %2118 = vmatprep.mubr.f32.mxu0 0.0
        %2119 = vmatmul.mubr.f32.gmra.mxu0 %v1709
        %v2120 = vpop.f32.mrf.mxu0
        %v2121 = vadd.f32 0.0, %v2120
        %v2122 = vpop.f32.mrf.mxu0
        %2123 = vmatprep.mubr.f32.mxu0 0.0
        %2124 = vmatmul.mubr.f32.gmra.mxu0 %v1710
        %v2125 = vpop.f32.mrf.mxu0
        %v2126 = vadd.f32 0.0, %v2125
        %v2127 = vpop.f32.mrf.mxu0
        %2128 = vmatprep.mubr.f32.mxu0 0.0
        %2129 = vmatmul.mubr.f32.gmra.mxu0 %v1711
        %v2130 = vpop.f32.mrf.mxu0
        %v2131 = vadd.f32 0.0, %v2130
        %v2132 = vpop.f32.mrf.mxu0
        %2133 = vmatprep.mubr.f32.mxu0 0.0
        %2134 = vmatmul.mubr.f32.gmra.mxu0 %v1712
        %v2135 = vpop.f32.mrf.mxu0
        %v2136 = vadd.f32 0.0, %v2135
        %v2137 = vpop.f32.mrf.mxu0
        %2138 = vmatprep.mubr.f32.mxu0 0.0
        %2139 = vmatmul.mubr.f32.gmra.mxu0 %v1713
        %v2140 = vpop.f32.mrf.mxu0
        %v2141 = vadd.f32 0.0, %v2140
        %v2142 = vpop.f32.mrf.mxu0
        %2143 = vmatprep.mubr.f32.mxu0 0.0
        %2144 = vmatmul.mubr.f32.gmra.mxu0 %v1714
        %v2145 = vpop.f32.mrf.mxu0
        %v2146 = vadd.f32 0.0, %v2145
        %v2147 = vpop.f32.mrf.mxu0
        %2148 = vmatprep.mubr.f32.mxu0 0.0
        %2149 = vmatmul.mubr.f32.gmra.mxu0 %v1715
        %v2150 = vpop.f32.mrf.mxu0
        %v2151 = vadd.f32 0.0, %v2150
        %v2152 = vpop.f32.mrf.mxu0
        %2153 = vmatprep.mubr.f32.mxu0 0.0
        %2154 = vmatmul.mubr.f32.gmra.mxu0 %v1716
        %v2155 = vpop.f32.mrf.mxu0
        %v2156 = vadd.f32 0.0, %v2155
        %v2157 = vpop.f32.mrf.mxu0
        %2158 = vmatprep.mubr.f32.mxu0 0.0
        %2159 = vmatmul.mubr.f32.gmra.mxu0 %v1717
        %v2160 = vpop.f32.mrf.mxu0
        %v2161 = vadd.f32 0.0, %v2160
        %v2162 = vpop.f32.mrf.mxu0
        %2163 = vmatprep.mubr.f32.mxu0 0.0
        %2164 = vmatmul.mubr.f32.gmra.mxu0 %v1718
        %v2165 = vpop.f32.mrf.mxu0
        %v2166 = vadd.f32 0.0, %v2165
        %v2167 = vpop.f32.mrf.mxu0
        %2168 = vdwg.mxu0
        %2177 = vrot.lane.b32.xlu0 %v2131, 1
        %v2178 = vpop.permute.xlu0 %2177
        %2179 = vrot.lane.b32.xlu0 %v2136, 1
        %v2180 = vpop.permute.xlu0 %2179
        %2181 = vrot.lane.b32.xlu0 %v2141, 1
        %v2182 = vpop.permute.xlu0 %2181
        %2183 = vrot.lane.b32.xlu0 %v2146, 1
        %v2184 = vpop.permute.xlu0 %2183
        %2185 = vrot.lane.b32.xlu0 %v2151, 1
        %v2186 = vpop.permute.xlu0 %2185
        %2187 = vrot.lane.b32.xlu0 %v2156, 1
        %v2188 = vpop.permute.xlu0 %2187
        %2189 = vrot.lane.b32.xlu0 %v2161, 1
        %v2190 = vpop.permute.xlu0 %2189
        %2191 = vrot.lane.b32.xlu0 %v2166, 1
        %v2192 = vpop.permute.xlu0 %2191
        %v2201 = vsel %vm1413, 0.0, %v2178
        %v2202 = vsel %vm1413, 0.0, %v2180
        %v2203 = vsel %vm1413, 0.0, %v2182
        %v2204 = vsel %vm1413, 0.0, %v2184
        %v2205 = vsel %vm1413, 0.0, %v2186
        %v2206 = vsel %vm1413, 0.0, %v2188
        %v2207 = vsel %vm1413, 0.0, %v2190
        %v2208 = vsel %vm1413, 0.0, %v2192
        %v2209 = vadd.f32 %v1826, %v2201
        %v2210 = vadd.f32 %v1831, %v2202
        %v2211 = vadd.f32 %v1836, %v2203
        %v2212 = vadd.f32 %v1841, %v2204
        %v2213 = vadd.f32 %v1846, %v2205
        %v2214 = vadd.f32 %v1851, %v2206
        %v2215 = vadd.f32 %v1856, %v2207
        %v2216 = vadd.f32 %v1861, %v2208
        %2218 = vset.pattern.permute.xlu0 0
        %2219 = vperm.xlu0 %2218, %v442
        %v2220 = vpop.permute.xlu0 %2219
        %2223 = vset.pattern.permute.xlu0 0
        %2224 = vperm.xlu0 %2223, %v443
        %v2225 = vpop.permute.xlu0 %2224
        %2228 = vset.pattern.permute.xlu0 0
        %2229 = vperm.xlu0 %2228, %v444
        %v2230 = vpop.permute.xlu0 %2229
        %2233 = vset.pattern.permute.xlu0 0
        %2234 = vperm.xlu0 %2233, %v445
        %v2235 = vpop.permute.xlu0 %2234
        %2238 = vset.pattern.permute.xlu0 0
        %2239 = vperm.xlu0 %2238, %v446
        %v2240 = vpop.permute.xlu0 %2239
        %2243 = vset.pattern.permute.xlu0 0
        %2244 = vperm.xlu0 %2243, %v447
        %v2245 = vpop.permute.xlu0 %2244
        %2248 = vset.pattern.permute.xlu0 0
        %2249 = vperm.xlu0 %2248, %v448
        %v2250 = vpop.permute.xlu0 %2249
        %2253 = vset.pattern.permute.xlu0 0
        %2254 = vperm.xlu0 %2253, %v449
        %v2255 = vpop.permute.xlu0 %2254
        %v2257 = vadd.f32 %v2209, %v2220
        %v2258 = vadd.f32 %v2210, %v2225
        %v2259 = vadd.f32 %v2211, %v2230
        %v2260 = vadd.f32 %v2212, %v2235
        %v2261 = vadd.f32 %v2213, %v2240
        %v2262 = vadd.f32 %v2214, %v2245
        %v2263 = vadd.f32 %v2215, %v2250
        %v2264 = vadd.f32 %v2216, %v2255
        %v2265 = vmax.f32 %v2257, 0.0
        %v2266 = vmax.f32 %v2258, 0.0
        %v2267 = vmax.f32 %v2259, 0.0
        %v2268 = vmax.f32 %v2260, 0.0
        %v2269 = vmax.f32 %v2261, 0.0
        %v2270 = vmax.f32 %v2262, 0.0
        %v2271 = vmax.f32 %v2263, 0.0
        %v2272 = vmax.f32 %v2264, 0.0
        %v2273 = vadd.f32 %v2011, %v1866
        %v2274 = vadd.f32 %v2016, %v1871
        %v2275 = vadd.f32 %v2021, %v1876
        %v2276 = vadd.f32 %v2026, %v1881
        %v2277 = vadd.f32 %v2031, %v1886
        %v2278 = vadd.f32 %v2036, %v1891
        %v2279 = vadd.f32 %v2041, %v1896
        %v2280 = vadd.f32 %v2046, %v1901
        %v2281 = vadd.f32 %v2273, %v2220
        %v2282 = vadd.f32 %v2274, %v2225
        %v2283 = vadd.f32 %v2275, %v2230
        %v2284 = vadd.f32 %v2276, %v2235
        %v2285 = vadd.f32 %v2277, %v2240
        %v2286 = vadd.f32 %v2278, %v2245
        %v2287 = vadd.f32 %v2279, %v2250
        %v2288 = vadd.f32 %v2280, %v2255
        %v2289 = vmax.f32 %v2281, 0.0
        %v2290 = vmax.f32 %v2282, 0.0
        %v2291 = vmax.f32 %v2283, 0.0
        %v2292 = vmax.f32 %v2284, 0.0
        %v2293 = vmax.f32 %v2285, 0.0
        %v2294 = vmax.f32 %v2286, 0.0
        %v2295 = vmax.f32 %v2287, 0.0
        %v2296 = vmax.f32 %v2288, 0.0
        %v2297 = vadd.f32 %v2051, %v1906
        %v2298 = vadd.f32 %v2056, %v1911
        %v2299 = vadd.f32 %v2061, %v1916
        %v2300 = vadd.f32 %v2066, %v1921
        %v2301 = vadd.f32 %v2071, %v1926
        %v2302 = vadd.f32 %v2076, %v1931
        %v2303 = vadd.f32 %v2081, %v1936
        %v2304 = vadd.f32 %v2086, %v1941
        %v2305 = vadd.f32 %v2297, %v2220
        %v2306 = vadd.f32 %v2298, %v2225
        %v2307 = vadd.f32 %v2299, %v2230
        %v2308 = vadd.f32 %v2300, %v2235
        %v2309 = vadd.f32 %v2301, %v2240
        %v2310 = vadd.f32 %v2302, %v2245
        %v2311 = vadd.f32 %v2303, %v2250
        %v2312 = vadd.f32 %v2304, %v2255
        %v2313 = vmax.f32 %v2305, 0.0
        %v2314 = vmax.f32 %v2306, 0.0
        %v2315 = vmax.f32 %v2307, 0.0
        %v2316 = vmax.f32 %v2308, 0.0
        %v2317 = vmax.f32 %v2309, 0.0
        %v2318 = vmax.f32 %v2310, 0.0
        %v2319 = vmax.f32 %v2311, 0.0
        %v2320 = vmax.f32 %v2312, 0.0
        %2329 = vrot.lane.b32.xlu0 %v1786, 127
        %v2330 = vpop.permute.xlu0 %2329
        %2331 = vrot.lane.b32.xlu0 %v1791, 127
        %v2332 = vpop.permute.xlu0 %2331
        %2333 = vrot.lane.b32.xlu0 %v1796, 127
        %v2334 = vpop.permute.xlu0 %2333
        %2335 = vrot.lane.b32.xlu0 %v1801, 127
        %v2336 = vpop.permute.xlu0 %2335
        %2337 = vrot.lane.b32.xlu0 %v1806, 127
        %v2338 = vpop.permute.xlu0 %2337
        %2339 = vrot.lane.b32.xlu0 %v1811, 127
        %v2340 = vpop.permute.xlu0 %2339
        %2341 = vrot.lane.b32.xlu0 %v1816, 127
        %v2342 = vpop.permute.xlu0 %2341
        %2343 = vrot.lane.b32.xlu0 %v1821, 127
        %v2344 = vpop.permute.xlu0 %2343
        %v2353 = vsel %vm1622, %v2330, 0.0
        %v2354 = vsel %vm1622, %v2332, 0.0
        %v2355 = vsel %vm1622, %v2334, 0.0
        %v2356 = vsel %vm1622, %v2336, 0.0
        %v2357 = vsel %vm1622, %v2338, 0.0
        %v2358 = vsel %vm1622, %v2340, 0.0
        %v2359 = vsel %vm1622, %v2342, 0.0
        %v2360 = vsel %vm1622, %v2344, 0.0
        %v2361 = vadd.f32 %v2353, %v2091
        %v2362 = vadd.f32 %v2354, %v2096
        %v2363 = vadd.f32 %v2355, %v2101
        %v2364 = vadd.f32 %v2356, %v2106
        %v2365 = vadd.f32 %v2357, %v2111
        %v2366 = vadd.f32 %v2358, %v2116
        %v2367 = vadd.f32 %v2359, %v2121
        %v2368 = vadd.f32 %v2360, %v2126
        %v2369 = vadd.f32 %v2361, %v2220
        %v2370 = vadd.f32 %v2362, %v2225
        %v2371 = vadd.f32 %v2363, %v2230
        %v2372 = vadd.f32 %v2364, %v2235
        %v2373 = vadd.f32 %v2365, %v2240
        %v2374 = vadd.f32 %v2366, %v2245
        %v2375 = vadd.f32 %v2367, %v2250
        %v2376 = vadd.f32 %v2368, %v2255
        %v2377 = vmax.f32 %v2369, 0.0
        %v2378 = vmax.f32 %v2370, 0.0
        %v2379 = vmax.f32 %v2371, 0.0
        %v2380 = vmax.f32 %v2372, 0.0
        %v2381 = vmax.f32 %v2373, 0.0
        %v2382 = vmax.f32 %v2374, 0.0
        %v2383 = vmax.f32 %v2375, 0.0
        %v2384 = vmax.f32 %v2376, 0.0
        %v2385 = vld [vmem:[%s7] sm:$0xff]
        %v2386 = vld [vmem:[%s7 + $0x8] sm:$0xff]
        %v2387 = vld [vmem:[%s7 + $0x10] sm:$0xff]
        %v2388 = vld [vmem:[%s7 + $0x18] sm:$0xff]
        %v2389 = vld [vmem:[%s7 + $0x20] sm:$0xff]
        %v2390 = vld [vmem:[%s7 + $0x28] sm:$0xff]
        %v2391 = vld [vmem:[%s7 + $0x30] sm:$0xff]
        %v2392 = vld [vmem:[%s7 + $0x38] sm:$0xff]
        %2394 = vset.pattern.permute.xlu0 0
        %2395 = vperm.xlu0 %2394, %v2385
        %v2396 = vpop.permute.xlu0 %2395
        %2399 = vset.pattern.permute.xlu0 0
        %2400 = vperm.xlu0 %2399, %v2386
        %v2401 = vpop.permute.xlu0 %2400
        %2404 = vset.pattern.permute.xlu0 0
        %2405 = vperm.xlu0 %2404, %v2387
        %v2406 = vpop.permute.xlu0 %2405
        %2409 = vset.pattern.permute.xlu0 0
        %2410 = vperm.xlu0 %2409, %v2388
        %v2411 = vpop.permute.xlu0 %2410
        %2414 = vset.pattern.permute.xlu0 0
        %2415 = vperm.xlu0 %2414, %v2389
        %v2416 = vpop.permute.xlu0 %2415
        %2419 = vset.pattern.permute.xlu0 0
        %2420 = vperm.xlu0 %2419, %v2390
        %v2421 = vpop.permute.xlu0 %2420
        %2424 = vset.pattern.permute.xlu0 0
        %2425 = vperm.xlu0 %2424, %v2391
        %v2426 = vpop.permute.xlu0 %2425
        %2429 = vset.pattern.permute.xlu0 0
        %2430 = vperm.xlu0 %2429, %v2392
        %v2431 = vpop.permute.xlu0 %2430
        %v2433 = vmul.f32 %v2265, %v2396
        %v2434 = vmul.f32 %v2266, %v2401
        %v2435 = vmul.f32 %v2267, %v2406
        %v2436 = vmul.f32 %v2268, %v2411
        %v2437 = vmul.f32 %v2269, %v2416
        %v2438 = vmul.f32 %v2270, %v2421
        %v2439 = vmul.f32 %v2271, %v2426
        %v2440 = vmul.f32 %v2272, %v2431
        %vm2441 = vcmask 64512
        %v2442 = vsel %vm2441, %v2433, 0.0
        %v2443 = vsel %vm2441, %v2434, 0.0
        %v2444 = vadd.f32 %v2442, %v2443
        %v2445 = vsel %vm2441, %v2435, 0.0
        %v2446 = vadd.f32 %v2444, %v2445
        %v2447 = vsel %vm2441, %v2436, 0.0
        %v2448 = vadd.f32 %v2446, %v2447
        %v2449 = vsel %vm2441, %v2437, 0.0
        %v2450 = vadd.f32 %v2448, %v2449
        %v2451 = vsel %vm2441, %v2438, 0.0
        %v2452 = vadd.f32 %v2450, %v2451
        %v2453 = vsel %vm2441, %v2439, 0.0
        %v2454 = vadd.f32 %v2452, %v2453
        %v2455 = vsel %vm2441, %v2440, 0.0
        %v2456 = vadd.f32 %v2454, %v2455
        %v2457 = vrot.slane %v2456, 4
        %v2458 = vadd.f32 %v2456, %v2457
        %v2459 = vrot.slane %v2458, 2
        %v2460 = vadd.f32 %v2458, %v2459
        %v2461 = vrot.slane %v2460, 1
        %v2462 = vadd.f32 %v2460, %v2461
        %2463 = vset.pattern.permute.xlu0 1
        %2464 = vperm.xlu0 %2463, %v2385
        %v2465 = vpop.permute.xlu0 %2464
        %2467 = vset.pattern.permute.xlu0 1
        %2468 = vperm.xlu0 %2467, %v2386
        %v2469 = vpop.permute.xlu0 %2468
        %2471 = vset.pattern.permute.xlu0 1
        %2472 = vperm.xlu0 %2471, %v2387
        %v2473 = vpop.permute.xlu0 %2472
        %2475 = vset.pattern.permute.xlu0 1
        %2476 = vperm.xlu0 %2475, %v2388
        %v2477 = vpop.permute.xlu0 %2476
        %2479 = vset.pattern.permute.xlu0 1
        %2480 = vperm.xlu0 %2479, %v2389
        %v2481 = vpop.permute.xlu0 %2480
        %2483 = vset.pattern.permute.xlu0 1
        %2484 = vperm.xlu0 %2483, %v2390
        %v2485 = vpop.permute.xlu0 %2484
        %2487 = vset.pattern.permute.xlu0 1
        %2488 = vperm.xlu0 %2487, %v2391
        %v2489 = vpop.permute.xlu0 %2488
        %2491 = vset.pattern.permute.xlu0 1
        %2492 = vperm.xlu0 %2491, %v2392
        %v2493 = vpop.permute.xlu0 %2492
        %v2495 = vmul.f32 %v2265, %v2465
        %v2496 = vmul.f32 %v2266, %v2469
        %v2497 = vmul.f32 %v2267, %v2473
        %v2498 = vmul.f32 %v2268, %v2477
        %v2499 = vmul.f32 %v2269, %v2481
        %v2500 = vmul.f32 %v2270, %v2485
        %v2501 = vmul.f32 %v2271, %v2489
        %v2502 = vmul.f32 %v2272, %v2493
        %v2503 = vsel %vm2441, %v2495, 0.0
        %v2504 = vsel %vm2441, %v2496, 0.0
        %v2505 = vadd.f32 %v2503, %v2504
        %v2506 = vsel %vm2441, %v2497, 0.0
        %v2507 = vadd.f32 %v2505, %v2506
        %v2508 = vsel %vm2441, %v2498, 0.0
        %v2509 = vadd.f32 %v2507, %v2508
        %v2510 = vsel %vm2441, %v2499, 0.0
        %v2511 = vadd.f32 %v2509, %v2510
        %v2512 = vsel %vm2441, %v2500, 0.0
        %v2513 = vadd.f32 %v2511, %v2512
        %v2514 = vsel %vm2441, %v2501, 0.0
        %v2515 = vadd.f32 %v2513, %v2514
        %v2516 = vsel %vm2441, %v2502, 0.0
        %v2517 = vadd.f32 %v2515, %v2516
        %v2518 = vrot.slane %v2517, 4
        %v2519 = vadd.f32 %v2517, %v2518
        %v2520 = vrot.slane %v2519, 2
        %v2521 = vadd.f32 %v2519, %v2520
        %v2522 = vrot.slane %v2521, 1
        %v2523 = vadd.f32 %v2521, %v2522
        %2524 = vset.pattern.permute.xlu0 2
        %2525 = vperm.xlu0 %2524, %v2385
        %v2526 = vpop.permute.xlu0 %2525
        %2528 = vset.pattern.permute.xlu0 2
        %2529 = vperm.xlu0 %2528, %v2386
        %v2530 = vpop.permute.xlu0 %2529
        %2532 = vset.pattern.permute.xlu0 2
        %2533 = vperm.xlu0 %2532, %v2387
        %v2534 = vpop.permute.xlu0 %2533
        %2536 = vset.pattern.permute.xlu0 2
        %2537 = vperm.xlu0 %2536, %v2388
        %v2538 = vpop.permute.xlu0 %2537
        %2540 = vset.pattern.permute.xlu0 2
        %2541 = vperm.xlu0 %2540, %v2389
        %v2542 = vpop.permute.xlu0 %2541
        %2544 = vset.pattern.permute.xlu0 2
        %2545 = vperm.xlu0 %2544, %v2390
        %v2546 = vpop.permute.xlu0 %2545
        %2548 = vset.pattern.permute.xlu0 2
        %2549 = vperm.xlu0 %2548, %v2391
        %v2550 = vpop.permute.xlu0 %2549
        %2552 = vset.pattern.permute.xlu0 2
        %2553 = vperm.xlu0 %2552, %v2392
        %v2554 = vpop.permute.xlu0 %2553
        %v2556 = vmul.f32 %v2265, %v2526
        %v2557 = vmul.f32 %v2266, %v2530
        %v2558 = vmul.f32 %v2267, %v2534
        %v2559 = vmul.f32 %v2268, %v2538
        %v2560 = vmul.f32 %v2269, %v2542
        %v2561 = vmul.f32 %v2270, %v2546
        %v2562 = vmul.f32 %v2271, %v2550
        %v2563 = vmul.f32 %v2272, %v2554
        %v2564 = vsel %vm2441, %v2556, 0.0
        %v2565 = vsel %vm2441, %v2557, 0.0
        %v2566 = vadd.f32 %v2564, %v2565
        %v2567 = vsel %vm2441, %v2558, 0.0
        %v2568 = vadd.f32 %v2566, %v2567
        %v2569 = vsel %vm2441, %v2559, 0.0
        %v2570 = vadd.f32 %v2568, %v2569
        %v2571 = vsel %vm2441, %v2560, 0.0
        %v2572 = vadd.f32 %v2570, %v2571
        %v2573 = vsel %vm2441, %v2561, 0.0
        %v2574 = vadd.f32 %v2572, %v2573
        %v2575 = vsel %vm2441, %v2562, 0.0
        %v2576 = vadd.f32 %v2574, %v2575
        %v2577 = vsel %vm2441, %v2563, 0.0
        %v2578 = vadd.f32 %v2576, %v2577
        %v2579 = vrot.slane %v2578, 4
        %v2580 = vadd.f32 %v2578, %v2579
        %v2581 = vrot.slane %v2580, 2
        %v2582 = vadd.f32 %v2580, %v2581
        %v2583 = vrot.slane %v2582, 1
        %v2584 = vadd.f32 %v2582, %v2583
        %2585 = vset.pattern.permute.xlu0 3
        %2586 = vperm.xlu0 %2585, %v2385
        %v2587 = vpop.permute.xlu0 %2586
        %2589 = vset.pattern.permute.xlu0 3
        %2590 = vperm.xlu0 %2589, %v2386
        %v2591 = vpop.permute.xlu0 %2590
        %2593 = vset.pattern.permute.xlu0 3
        %2594 = vperm.xlu0 %2593, %v2387
        %v2595 = vpop.permute.xlu0 %2594
        %2597 = vset.pattern.permute.xlu0 3
        %2598 = vperm.xlu0 %2597, %v2388
        %v2599 = vpop.permute.xlu0 %2598
        %2601 = vset.pattern.permute.xlu0 3
        %2602 = vperm.xlu0 %2601, %v2389
        %v2603 = vpop.permute.xlu0 %2602
        %2605 = vset.pattern.permute.xlu0 3
        %2606 = vperm.xlu0 %2605, %v2390
        %v2607 = vpop.permute.xlu0 %2606
        %2609 = vset.pattern.permute.xlu0 3
        %2610 = vperm.xlu0 %2609, %v2391
        %v2611 = vpop.permute.xlu0 %2610
        %2613 = vset.pattern.permute.xlu0 3
        %2614 = vperm.xlu0 %2613, %v2392
        %v2615 = vpop.permute.xlu0 %2614
        %v2617 = vmul.f32 %v2265, %v2587
        %v2618 = vmul.f32 %v2266, %v2591
        %v2619 = vmul.f32 %v2267, %v2595
        %v2620 = vmul.f32 %v2268, %v2599
        %v2621 = vmul.f32 %v2269, %v2603
        %v2622 = vmul.f32 %v2270, %v2607
        %v2623 = vmul.f32 %v2271, %v2611
        %v2624 = vmul.f32 %v2272, %v2615
        %v2625 = vsel %vm2441, %v2617, 0.0
        %v2626 = vsel %vm2441, %v2618, 0.0
        %v2627 = vadd.f32 %v2625, %v2626
        %v2628 = vsel %vm2441, %v2619, 0.0
        %v2629 = vadd.f32 %v2627, %v2628
        %v2630 = vsel %vm2441, %v2620, 0.0
        %v2631 = vadd.f32 %v2629, %v2630
        %v2632 = vsel %vm2441, %v2621, 0.0
        %v2633 = vadd.f32 %v2631, %v2632
        %v2634 = vsel %vm2441, %v2622, 0.0
        %v2635 = vadd.f32 %v2633, %v2634
        %v2636 = vsel %vm2441, %v2623, 0.0
        %v2637 = vadd.f32 %v2635, %v2636
        %v2638 = vsel %vm2441, %v2624, 0.0
        %v2639 = vadd.f32 %v2637, %v2638
        %v2640 = vrot.slane %v2639, 4
        %v2641 = vadd.f32 %v2639, %v2640
        %v2642 = vrot.slane %v2641, 2
        %v2643 = vadd.f32 %v2641, %v2642
        %v2644 = vrot.slane %v2643, 1
        %v2645 = vadd.f32 %v2643, %v2644
        %v2646 = vmul.f32 %v2289, %v2396
        %v2647 = vmul.f32 %v2290, %v2401
        %v2648 = vmul.f32 %v2291, %v2406
        %v2649 = vmul.f32 %v2292, %v2411
        %v2650 = vmul.f32 %v2293, %v2416
        %v2651 = vmul.f32 %v2294, %v2421
        %v2652 = vmul.f32 %v2295, %v2426
        %v2653 = vmul.f32 %v2296, %v2431
        %v2654 = vsel %vm2441, %v2646, 0.0
        %v2655 = vsel %vm2441, %v2647, 0.0
        %v2656 = vadd.f32 %v2654, %v2655
        %v2657 = vsel %vm2441, %v2648, 0.0
        %v2658 = vadd.f32 %v2656, %v2657
        %v2659 = vsel %vm2441, %v2649, 0.0
        %v2660 = vadd.f32 %v2658, %v2659
        %v2661 = vsel %vm2441, %v2650, 0.0
        %v2662 = vadd.f32 %v2660, %v2661
        %v2663 = vsel %vm2441, %v2651, 0.0
        %v2664 = vadd.f32 %v2662, %v2663
        %v2665 = vsel %vm2441, %v2652, 0.0
        %v2666 = vadd.f32 %v2664, %v2665
        %v2667 = vsel %vm2441, %v2653, 0.0
        %v2668 = vadd.f32 %v2666, %v2667
        %v2669 = vrot.slane %v2668, 4
        %v2670 = vadd.f32 %v2668, %v2669
        %v2671 = vrot.slane %v2670, 2
        %v2672 = vadd.f32 %v2670, %v2671
        %v2673 = vrot.slane %v2672, 1
        %v2674 = vadd.f32 %v2672, %v2673
        %v2675 = vmul.f32 %v2289, %v2465
        %v2676 = vmul.f32 %v2290, %v2469
        %v2677 = vmul.f32 %v2291, %v2473
        %v2678 = vmul.f32 %v2292, %v2477
        %v2679 = vmul.f32 %v2293, %v2481
        %v2680 = vmul.f32 %v2294, %v2485
        %v2681 = vmul.f32 %v2295, %v2489
        %v2682 = vmul.f32 %v2296, %v2493
        %v2683 = vsel %vm2441, %v2675, 0.0
        %v2684 = vsel %vm2441, %v2676, 0.0
        %v2685 = vadd.f32 %v2683, %v2684
        %v2686 = vsel %vm2441, %v2677, 0.0
        %v2687 = vadd.f32 %v2685, %v2686
        %v2688 = vsel %vm2441, %v2678, 0.0
        %v2689 = vadd.f32 %v2687, %v2688
        %v2690 = vsel %vm2441, %v2679, 0.0
        %v2691 = vadd.f32 %v2689, %v2690
        %v2692 = vsel %vm2441, %v2680, 0.0
        %v2693 = vadd.f32 %v2691, %v2692
        %v2694 = vsel %vm2441, %v2681, 0.0
        %v2695 = vadd.f32 %v2693, %v2694
        %v2696 = vsel %vm2441, %v2682, 0.0
        %v2697 = vadd.f32 %v2695, %v2696
        %v2698 = vrot.slane %v2697, 4
        %v2699 = vadd.f32 %v2697, %v2698
        %v2700 = vrot.slane %v2699, 2
        %v2701 = vadd.f32 %v2699, %v2700
        %v2702 = vrot.slane %v2701, 1
        %v2703 = vadd.f32 %v2701, %v2702
        %v2704 = vmul.f32 %v2289, %v2526
        %v2705 = vmul.f32 %v2290, %v2530
        %v2706 = vmul.f32 %v2291, %v2534
        %v2707 = vmul.f32 %v2292, %v2538
        %v2708 = vmul.f32 %v2293, %v2542
        %v2709 = vmul.f32 %v2294, %v2546
        %v2710 = vmul.f32 %v2295, %v2550
        %v2711 = vmul.f32 %v2296, %v2554
        %v2712 = vsel %vm2441, %v2704, 0.0
        %v2713 = vsel %vm2441, %v2705, 0.0
        %v2714 = vadd.f32 %v2712, %v2713
        %v2715 = vsel %vm2441, %v2706, 0.0
        %v2716 = vadd.f32 %v2714, %v2715
        %v2717 = vsel %vm2441, %v2707, 0.0
        %v2718 = vadd.f32 %v2716, %v2717
        %v2719 = vsel %vm2441, %v2708, 0.0
        %v2720 = vadd.f32 %v2718, %v2719
        %v2721 = vsel %vm2441, %v2709, 0.0
        %v2722 = vadd.f32 %v2720, %v2721
        %v2723 = vsel %vm2441, %v2710, 0.0
        %v2724 = vadd.f32 %v2722, %v2723
        %v2725 = vsel %vm2441, %v2711, 0.0
        %v2726 = vadd.f32 %v2724, %v2725
        %v2727 = vrot.slane %v2726, 4
        %v2728 = vadd.f32 %v2726, %v2727
        %v2729 = vrot.slane %v2728, 2
        %v2730 = vadd.f32 %v2728, %v2729
        %v2731 = vrot.slane %v2730, 1
        %v2732 = vadd.f32 %v2730, %v2731
        %v2733 = vmul.f32 %v2289, %v2587
        %v2734 = vmul.f32 %v2290, %v2591
        %v2735 = vmul.f32 %v2291, %v2595
        %v2736 = vmul.f32 %v2292, %v2599
        %v2737 = vmul.f32 %v2293, %v2603
        %v2738 = vmul.f32 %v2294, %v2607
        %v2739 = vmul.f32 %v2295, %v2611
        %v2740 = vmul.f32 %v2296, %v2615
        %v2741 = vsel %vm2441, %v2733, 0.0
        %v2742 = vsel %vm2441, %v2734, 0.0
        %v2743 = vadd.f32 %v2741, %v2742
        %v2744 = vsel %vm2441, %v2735, 0.0
        %v2745 = vadd.f32 %v2743, %v2744
        %v2746 = vsel %vm2441, %v2736, 0.0
        %v2747 = vadd.f32 %v2745, %v2746
        %v2748 = vsel %vm2441, %v2737, 0.0
        %v2749 = vadd.f32 %v2747, %v2748
        %v2750 = vsel %vm2441, %v2738, 0.0
        %v2751 = vadd.f32 %v2749, %v2750
        %v2752 = vsel %vm2441, %v2739, 0.0
        %v2753 = vadd.f32 %v2751, %v2752
        %v2754 = vsel %vm2441, %v2740, 0.0
        %v2755 = vadd.f32 %v2753, %v2754
        %v2756 = vrot.slane %v2755, 4
        %v2757 = vadd.f32 %v2755, %v2756
        %v2758 = vrot.slane %v2757, 2
        %v2759 = vadd.f32 %v2757, %v2758
        %v2760 = vrot.slane %v2759, 1
        %v2761 = vadd.f32 %v2759, %v2760
        %v2762 = vmul.f32 %v2313, %v2396
        %v2763 = vmul.f32 %v2314, %v2401
        %v2764 = vmul.f32 %v2315, %v2406
        %v2765 = vmul.f32 %v2316, %v2411
        %v2766 = vmul.f32 %v2317, %v2416
        %v2767 = vmul.f32 %v2318, %v2421
        %v2768 = vmul.f32 %v2319, %v2426
        %v2769 = vmul.f32 %v2320, %v2431
        %v2770 = vsel %vm2441, %v2762, 0.0
        %v2771 = vsel %vm2441, %v2763, 0.0
        %v2772 = vadd.f32 %v2770, %v2771
        %v2773 = vsel %vm2441, %v2764, 0.0
        %v2774 = vadd.f32 %v2772, %v2773
        %v2775 = vsel %vm2441, %v2765, 0.0
        %v2776 = vadd.f32 %v2774, %v2775
        %v2777 = vsel %vm2441, %v2766, 0.0
        %v2778 = vadd.f32 %v2776, %v2777
        %v2779 = vsel %vm2441, %v2767, 0.0
        %v2780 = vadd.f32 %v2778, %v2779
        %v2781 = vsel %vm2441, %v2768, 0.0
        %v2782 = vadd.f32 %v2780, %v2781
        %v2783 = vsel %vm2441, %v2769, 0.0
        %v2784 = vadd.f32 %v2782, %v2783
        %v2785 = vrot.slane %v2784, 4
        %v2786 = vadd.f32 %v2784, %v2785
        %v2787 = vrot.slane %v2786, 2
        %v2788 = vadd.f32 %v2786, %v2787
        %v2789 = vrot.slane %v2788, 1
        %v2790 = vadd.f32 %v2788, %v2789
        %v2791 = vmul.f32 %v2313, %v2465
        %v2792 = vmul.f32 %v2314, %v2469
        %v2793 = vmul.f32 %v2315, %v2473
        %v2794 = vmul.f32 %v2316, %v2477
        %v2795 = vmul.f32 %v2317, %v2481
        %v2796 = vmul.f32 %v2318, %v2485
        %v2797 = vmul.f32 %v2319, %v2489
        %v2798 = vmul.f32 %v2320, %v2493
        %v2799 = vsel %vm2441, %v2791, 0.0
        %v2800 = vsel %vm2441, %v2792, 0.0
        %v2801 = vadd.f32 %v2799, %v2800
        %v2802 = vsel %vm2441, %v2793, 0.0
        %v2803 = vadd.f32 %v2801, %v2802
        %v2804 = vsel %vm2441, %v2794, 0.0
        %v2805 = vadd.f32 %v2803, %v2804
        %v2806 = vsel %vm2441, %v2795, 0.0
        %v2807 = vadd.f32 %v2805, %v2806
        %v2808 = vsel %vm2441, %v2796, 0.0
        %v2809 = vadd.f32 %v2807, %v2808
        %v2810 = vsel %vm2441, %v2797, 0.0
        %v2811 = vadd.f32 %v2809, %v2810
        %v2812 = vsel %vm2441, %v2798, 0.0
        %v2813 = vadd.f32 %v2811, %v2812
        %v2814 = vrot.slane %v2813, 4
        %v2815 = vadd.f32 %v2813, %v2814
        %v2816 = vrot.slane %v2815, 2
        %v2817 = vadd.f32 %v2815, %v2816
        %v2818 = vrot.slane %v2817, 1
        %v2819 = vadd.f32 %v2817, %v2818
        %v2820 = vmul.f32 %v2313, %v2526
        %v2821 = vmul.f32 %v2314, %v2530
        %v2822 = vmul.f32 %v2315, %v2534
        %v2823 = vmul.f32 %v2316, %v2538
        %v2824 = vmul.f32 %v2317, %v2542
        %v2825 = vmul.f32 %v2318, %v2546
        %v2826 = vmul.f32 %v2319, %v2550
        %v2827 = vmul.f32 %v2320, %v2554
        %v2828 = vsel %vm2441, %v2820, 0.0
        %v2829 = vsel %vm2441, %v2821, 0.0
        %v2830 = vadd.f32 %v2828, %v2829
        %v2831 = vsel %vm2441, %v2822, 0.0
        %v2832 = vadd.f32 %v2830, %v2831
        %v2833 = vsel %vm2441, %v2823, 0.0
        %v2834 = vadd.f32 %v2832, %v2833
        %v2835 = vsel %vm2441, %v2824, 0.0
        %v2836 = vadd.f32 %v2834, %v2835
        %v2837 = vsel %vm2441, %v2825, 0.0
        %v2838 = vadd.f32 %v2836, %v2837
        %v2839 = vsel %vm2441, %v2826, 0.0
        %v2840 = vadd.f32 %v2838, %v2839
        %v2841 = vsel %vm2441, %v2827, 0.0
        %v2842 = vadd.f32 %v2840, %v2841
        %v2843 = vrot.slane %v2842, 4
        %v2844 = vadd.f32 %v2842, %v2843
        %v2845 = vrot.slane %v2844, 2
        %v2846 = vadd.f32 %v2844, %v2845
        %v2847 = vrot.slane %v2846, 1
        %v2848 = vadd.f32 %v2846, %v2847
        %v2849 = vmul.f32 %v2313, %v2587
        %v2850 = vmul.f32 %v2314, %v2591
        %v2851 = vmul.f32 %v2315, %v2595
        %v2852 = vmul.f32 %v2316, %v2599
        %v2853 = vmul.f32 %v2317, %v2603
        %v2854 = vmul.f32 %v2318, %v2607
        %v2855 = vmul.f32 %v2319, %v2611
        %v2856 = vmul.f32 %v2320, %v2615
        %v2857 = vsel %vm2441, %v2849, 0.0
        %v2858 = vsel %vm2441, %v2850, 0.0
        %v2859 = vadd.f32 %v2857, %v2858
        %v2860 = vsel %vm2441, %v2851, 0.0
        %v2861 = vadd.f32 %v2859, %v2860
        %v2862 = vsel %vm2441, %v2852, 0.0
        %v2863 = vadd.f32 %v2861, %v2862
        %v2864 = vsel %vm2441, %v2853, 0.0
        %v2865 = vadd.f32 %v2863, %v2864
        %v2866 = vsel %vm2441, %v2854, 0.0
        %v2867 = vadd.f32 %v2865, %v2866
        %v2868 = vsel %vm2441, %v2855, 0.0
        %v2869 = vadd.f32 %v2867, %v2868
        %v2870 = vsel %vm2441, %v2856, 0.0
        %v2871 = vadd.f32 %v2869, %v2870
        %v2872 = vrot.slane %v2871, 4
        %v2873 = vadd.f32 %v2871, %v2872
        %v2874 = vrot.slane %v2873, 2
        %v2875 = vadd.f32 %v2873, %v2874
        %v2876 = vrot.slane %v2875, 1
        %v2877 = vadd.f32 %v2875, %v2876
        %v2878 = vmul.f32 %v2377, %v2396
        %v2879 = vmul.f32 %v2378, %v2401
        %v2880 = vmul.f32 %v2379, %v2406
        %v2881 = vmul.f32 %v2380, %v2411
        %v2882 = vmul.f32 %v2381, %v2416
        %v2883 = vmul.f32 %v2382, %v2421
        %v2884 = vmul.f32 %v2383, %v2426
        %v2885 = vmul.f32 %v2384, %v2431
        %v2886 = vsel %vm2441, %v2878, 0.0
        %v2887 = vsel %vm2441, %v2879, 0.0
        %v2888 = vadd.f32 %v2886, %v2887
        %v2889 = vsel %vm2441, %v2880, 0.0
        %v2890 = vadd.f32 %v2888, %v2889
        %v2891 = vsel %vm2441, %v2881, 0.0
        %v2892 = vadd.f32 %v2890, %v2891
        %v2893 = vsel %vm2441, %v2882, 0.0
        %v2894 = vadd.f32 %v2892, %v2893
        %v2895 = vsel %vm2441, %v2883, 0.0
        %v2896 = vadd.f32 %v2894, %v2895
        %v2897 = vsel %vm2441, %v2884, 0.0
        %v2898 = vadd.f32 %v2896, %v2897
        %v2899 = vsel %vm2441, %v2885, 0.0
        %v2900 = vadd.f32 %v2898, %v2899
        %v2901 = vrot.slane %v2900, 4
        %v2902 = vadd.f32 %v2900, %v2901
        %v2903 = vrot.slane %v2902, 2
        %v2904 = vadd.f32 %v2902, %v2903
        %v2905 = vrot.slane %v2904, 1
        %v2906 = vadd.f32 %v2904, %v2905
        %v2907 = vmul.f32 %v2377, %v2465
        %v2908 = vmul.f32 %v2378, %v2469
        %v2909 = vmul.f32 %v2379, %v2473
        %v2910 = vmul.f32 %v2380, %v2477
        %v2911 = vmul.f32 %v2381, %v2481
        %v2912 = vmul.f32 %v2382, %v2485
        %v2913 = vmul.f32 %v2383, %v2489
        %v2914 = vmul.f32 %v2384, %v2493
        %v2915 = vsel %vm2441, %v2907, 0.0
        %v2916 = vsel %vm2441, %v2908, 0.0
        %v2917 = vadd.f32 %v2915, %v2916
        %v2918 = vsel %vm2441, %v2909, 0.0
        %v2919 = vadd.f32 %v2917, %v2918
        %v2920 = vsel %vm2441, %v2910, 0.0
        %v2921 = vadd.f32 %v2919, %v2920
        %v2922 = vsel %vm2441, %v2911, 0.0
        %v2923 = vadd.f32 %v2921, %v2922
        %v2924 = vsel %vm2441, %v2912, 0.0
        %v2925 = vadd.f32 %v2923, %v2924
        %v2926 = vsel %vm2441, %v2913, 0.0
        %v2927 = vadd.f32 %v2925, %v2926
        %v2928 = vsel %vm2441, %v2914, 0.0
        %v2929 = vadd.f32 %v2927, %v2928
        %v2930 = vrot.slane %v2929, 4
        %v2931 = vadd.f32 %v2929, %v2930
        %v2932 = vrot.slane %v2931, 2
        %v2933 = vadd.f32 %v2931, %v2932
        %v2934 = vrot.slane %v2933, 1
        %v2935 = vadd.f32 %v2933, %v2934
        %v2936 = vmul.f32 %v2377, %v2526
        %v2937 = vmul.f32 %v2378, %v2530
        %v2938 = vmul.f32 %v2379, %v2534
        %v2939 = vmul.f32 %v2380, %v2538
        %v2940 = vmul.f32 %v2381, %v2542
        %v2941 = vmul.f32 %v2382, %v2546
        %v2942 = vmul.f32 %v2383, %v2550
        %v2943 = vmul.f32 %v2384, %v2554
        %v2944 = vsel %vm2441, %v2936, 0.0
        %v2945 = vsel %vm2441, %v2937, 0.0
        %v2946 = vadd.f32 %v2944, %v2945
        %v2947 = vsel %vm2441, %v2938, 0.0
        %v2948 = vadd.f32 %v2946, %v2947
        %v2949 = vsel %vm2441, %v2939, 0.0
        %v2950 = vadd.f32 %v2948, %v2949
        %v2951 = vsel %vm2441, %v2940, 0.0
        %v2952 = vadd.f32 %v2950, %v2951
        %v2953 = vsel %vm2441, %v2941, 0.0
        %v2954 = vadd.f32 %v2952, %v2953
        %v2955 = vsel %vm2441, %v2942, 0.0
        %v2956 = vadd.f32 %v2954, %v2955
        %v2957 = vsel %vm2441, %v2943, 0.0
        %v2958 = vadd.f32 %v2956, %v2957
        %v2959 = vrot.slane %v2958, 4
        %v2960 = vadd.f32 %v2958, %v2959
        %v2961 = vrot.slane %v2960, 2
        %v2962 = vadd.f32 %v2960, %v2961
        %v2963 = vrot.slane %v2962, 1
        %v2964 = vadd.f32 %v2962, %v2963
        %v2965 = vmul.f32 %v2377, %v2587
        %v2966 = vmul.f32 %v2378, %v2591
        %v2967 = vmul.f32 %v2379, %v2595
        %v2968 = vmul.f32 %v2380, %v2599
        %v2969 = vmul.f32 %v2381, %v2603
        %v2970 = vmul.f32 %v2382, %v2607
        %v2971 = vmul.f32 %v2383, %v2611
        %v2972 = vmul.f32 %v2384, %v2615
        %v2973 = vsel %vm2441, %v2965, 0.0
        %v2974 = vsel %vm2441, %v2966, 0.0
        %v2975 = vadd.f32 %v2973, %v2974
        %v2976 = vsel %vm2441, %v2967, 0.0
        %v2977 = vadd.f32 %v2975, %v2976
        %v2978 = vsel %vm2441, %v2968, 0.0
        %v2979 = vadd.f32 %v2977, %v2978
        %v2980 = vsel %vm2441, %v2969, 0.0
        %v2981 = vadd.f32 %v2979, %v2980
        %v2982 = vsel %vm2441, %v2970, 0.0
        %v2983 = vadd.f32 %v2981, %v2982
        %v2984 = vsel %vm2441, %v2971, 0.0
        %v2985 = vadd.f32 %v2983, %v2984
        %v2986 = vsel %vm2441, %v2972, 0.0
        %v2987 = vadd.f32 %v2985, %v2986
        %v2988 = vrot.slane %v2987, 4
        %v2989 = vadd.f32 %v2987, %v2988
        %v2990 = vrot.slane %v2989, 2
        %v2991 = vadd.f32 %v2989, %v2990
        %v2992 = vrot.slane %v2991, 1
        %v2993 = vadd.f32 %v2991, %v2992
        %2995 = vrot.lane.b32.xlu0 %v2993, 1
        %v2996 = vpop.permute.xlu0 %2995
        %v2998 = vsel %vm1413, 0.0, %v2996
        %v2999 = vadd.f32 %v2523, %v2998
        %3001 = vset.pattern.permute.xlu0 0
        %3002 = vperm.xlu0 %3001, %v450
        %v3003 = vpop.permute.xlu0 %3002
        %v3005 = vlaneseq
        %v3006 = vshrl.u32 %v3005, 7
        %v3007 = vsub.s32 0, %v3006
        %v3008 = vrot.slane %v3003, %v3007
        %v3009 = vadd.f32 %v2999, %v3008
        %v3010 = vxor.u32 %v3009, 2147483648
        %v3011 = vmul.f32 %v3010, 1.442695
        %v3012 = vpow.pop %v3011
        %v3013 = vadd.f32 %v3012, 1.0
        %v3014 = vrcp.pop %v3013
        %v3015 = vmul.f32 1.0, %v3014
        %v3016 = vadd.f32 %v2674, %v2584
        %v3017 = vadd.f32 %v3016, %v3008
        %v3018 = vxor.u32 %v3017, 2147483648
        %v3019 = vmul.f32 %v3018, 1.442695
        %v3020 = vpow.pop %v3019
        %v3021 = vadd.f32 %v3020, 1.0
        %v3022 = vrcp.pop %v3021
        %v3023 = vmul.f32 1.0, %v3022
        %v3024 = vadd.f32 %v2703, %v2645
        %v3025 = vadd.f32 %v3024, %v3008
        %v3026 = vxor.u32 %v3025, 2147483648
        %v3027 = vmul.f32 %v3026, 1.442695
        %v3028 = vpow.pop %v3027
        %v3029 = vadd.f32 %v3028, 1.0
        %v3030 = vrcp.pop %v3029
        %v3031 = vmul.f32 1.0, %v3030
        %v3032 = vadd.f32 %v2790, %v2732
        %v3033 = vadd.f32 %v3032, %v3008
        %v3034 = vxor.u32 %v3033, 2147483648
        %v3035 = vmul.f32 %v3034, 1.442695
        %v3036 = vpow.pop %v3035
        %v3037 = vadd.f32 %v3036, 1.0
        %v3038 = vrcp.pop %v3037
        %v3039 = vmul.f32 1.0, %v3038
        %v3040 = vadd.f32 %v2819, %v2761
        %v3041 = vadd.f32 %v3040, %v3008
        %v3042 = vxor.u32 %v3041, 2147483648
        %v3043 = vmul.f32 %v3042, 1.442695
        %v3044 = vpow.pop %v3043
        %v3045 = vadd.f32 %v3044, 1.0
        %v3046 = vrcp.pop %v3045
        %v3047 = vmul.f32 1.0, %v3046
        %v3048 = vadd.f32 %v2906, %v2848
        %v3049 = vadd.f32 %v3048, %v3008
        %v3050 = vxor.u32 %v3049, 2147483648
        %v3051 = vmul.f32 %v3050, 1.442695
        %v3052 = vpow.pop %v3051
        %v3053 = vadd.f32 %v3052, 1.0
        %v3054 = vrcp.pop %v3053
        %v3055 = vmul.f32 1.0, %v3054
        %v3056 = vadd.f32 %v2935, %v2877
        %v3057 = vadd.f32 %v3056, %v3008
        %v3058 = vxor.u32 %v3057, 2147483648
        %v3059 = vmul.f32 %v3058, 1.442695
        %v3060 = vpow.pop %v3059
        %v3061 = vadd.f32 %v3060, 1.0
        %v3062 = vrcp.pop %v3061
        %v3063 = vmul.f32 1.0, %v3062
        %3065 = vrot.lane.b32.xlu0 %v2462, 127
        %v3066 = vpop.permute.xlu0 %3065
        %v3068 = vsel %vm1622, %v3066, 0.0
        %v3069 = vadd.f32 %v3068, %v2964
        %v3070 = vadd.f32 %v3069, %v3008
        %v3071 = vxor.u32 %v3070, 2147483648
        %v3072 = vmul.f32 %v3071, 1.442695
        %v3073 = vpow.pop %v3072
        %v3074 = vadd.f32 %v3073, 1.0
        %v3075 = vrcp.pop %v3074
        %v3076 = vmul.f32 1.0, %v3075
        %v3077 = vld [vmem:[%s9] sm:$0xff]
        %v3078 = vmul.f32 %v3015, %v3077
        %v3079 = vmul.f32 %v3023, %v3077
        %v3081 = vrot.slane %v3079, 1
        %v3083 = vadd.f32 %v3078, %v3081
        %v3084 = vmul.f32 %v3031, %v3077
        %v3086 = vrot.slane %v3084, 2
        %v3088 = vadd.f32 %v3083, %v3086
        %v3089 = vmul.f32 %v3039, %v3077
        %v3091 = vrot.slane %v3089, 3
        %v3093 = vadd.f32 %v3088, %v3091
        %v3094 = vmul.f32 %v3047, %v3077
        %v3096 = vrot.slane %v3094, 4
        %v3098 = vadd.f32 %v3093, %v3096
        %v3099 = vmul.f32 %v3055, %v3077
        %v3101 = vrot.slane %v3099, 5
        %v3103 = vadd.f32 %v3098, %v3101
        %v3104 = vmul.f32 %v3063, %v3077
        %v3106 = vrot.slane %v3104, 6
        %v3108 = vadd.f32 %v3103, %v3106
        %v3110 = vrot.slane %v3077, 7
        %v3112 = vmul.f32 %v3076, %v3110
        %v3113 = vadd.f32 %v3108, %v3112
        %vm3114 = vcmask 57344
        %3115 = vst.msk [vmem:[%s383] sm:$0x1] %vm3114, %v3113
        %s3116 = sand.u32 %s255, 1
        %s3117 = scalar_lea.sflag [#allocation5], %s3116
        %s3118 = sand.u32 %s255, 1
        %s3119 = scalar_lea.vmem [#allocation6], %s3118
        // Predicated region
        $region65: #{tpu_custom_call.1} parent=59 // pred_check
          %p3120 = pneg %p265
        $region66: #{tpu_custom_call.1} parent=59 // pred_check_branch
          %3122 = sbr.rel (%p3120) target = $region68
        $region67: #{tpu_custom_call.1} parent=59 // pred_region
          %s3124 = ssub.s32 16, 16
          %3125 = vsyncadd %s3117, %s3124
          %s3126 = smul.addr %s27, 16
          %s3127 = scalar_lea.hbm %s10, %s3126
          %s3129 = sshll.u32 %s3119, 4
          %s3130 = int_to_ptr.vmem [resolvable:$true] %s3129
          %3132 = dma.vmem_to_hbm [thread:$0]  %s3130, 16, %s3127, %s3117
        $region68: #{tpu_custom_call.1} parent=59 // pred_fallthru
          _
      $region60: #{tpu_custom_call.1} parent=5 // pred_fallthru
        _
      %p3133 = scmp.le.s32.totalorder 2, %s22
      // Predicated region
      $region69: #{tpu_custom_call.1} parent=5 // pred_check
        %p3134 = pneg %p3133
      $region70: #{tpu_custom_call.1} parent=5 // pred_check_branch
        %3136 = sbr.rel (%p3134) target = $region72
      $region71: #{tpu_custom_call.1} parent=5 // pred_region
        %s3137 = ssub.s32 %s22, 2
        // Predicated region
        $region73: #{tpu_custom_call.1} parent=71 // pred_check
          %p3138 = pneg %p271
        $region74: #{tpu_custom_call.1} parent=71 // pred_check_branch
          %3140 = sbr.rel (%p3138) target = $region76
        $region75: #{tpu_custom_call.1} parent=71 // pred_region
          %s3141 = sand.u32 %s256, 1
          %s3142 = scalar_lea.sflag [#allocation5], %s3141
          %s3143 = sand.u32 %s256, 1
          %s3144 = scalar_lea.vmem [#allocation6], %s3143
          %3145 = dma.done %s3142, 16
        $region76: #{tpu_custom_call.1} parent=71 // pred_fallthru
          _
      $region72: #{tpu_custom_call.1} parent=5 // pred_fallthru
        _
    $region6: #{tpu_custom_call.1} parent=1 // loop_footer
      %s26 = sadd.s32 1, %s22
    $region7: #{tpu_custom_call.1} parent=1 // loop_footer_branch
      %21 = sbr.rel target = $region3
    $region8: #{tpu_custom_call.1} parent=1 // loop_exit
      _
    %3146 = vsyncpa [#allocation4], 1
    %s3147 = scalar_lea.sflag [#allocation4], 1
    %3148 = vsyncpa %s3147, 1
    %3149 = vsyncpa [#allocation5], 1
    %s3150 = scalar_lea.sflag [#allocation5], 1
    %3151 = vsyncpa %s3150, 1

</llo_original>
